<compile_context>
chip_gen: v7x
topology: tpu7x:2x2x1
jax: 0.10.0
libtpu: 0.0.40
codegen_flags: <defaults>
</compile_context>

<pallas_src>
import numpy as np
import jax
import jax.numpy as jnp
from jax import lax
from jax.experimental import pallas as pl
from jax.experimental.pallas import tpu as pltpu  # noqa: F401  (TPU backend)

# ---------------- config (small shapes consistent with MFN args) -------------
D_L, D_A, D_V = 8, 4, 4            # args.feature_dims
DH_L, DH_A, DH_V = 16, 8, 8        # args.hidden_dims
MEM_DIM = 16                       # args.memsize
WINDOW = 2                         # args.windowsize
TOTAL_H = DH_L + DH_A + DH_V       # 32
ATT_IN = TOTAL_H * WINDOW          # 64
GAMMA_IN = ATT_IN + MEM_DIM        # 80
FINAL_OUT = TOTAL_H + MEM_DIM      # 48
H_ATT1 = H_ATT2 = H_G1 = H_G2 = H_OUT = 32
OUT_DIM = 1                        # regression head
B, T = 2, 8

D_IN = D_L + D_A + D_V             # 16  (fused modality input)
GATES = 4 * TOTAL_H                # 128 (fused LSTM gate lanes)
MID_H = H_ATT2 + H_G1 + H_G2       # 96  (fused att2/gamma1/gamma2 hidden)
MID_OUT = 3 * MEM_DIM              # 48  (c_hat | g1 | g2)


def _sigmoid(x):
    # tanh-based sigmoid: single EUP op, no divide on the serial path.
    return 0.5 * (jnp.tanh(0.5 * x) + 1.0)


# ------------------------------- kernel --------------------------------------
def mfn_kernel(x_ref,
               wx_ref, wh_ref, bl_ref,
               wa11_ref, ba11_ref, wa12_ref, ba12_ref,
               wm1_ref, bm1_ref, wm2_ref, bm2_ref,
               wo1_ref, bo1_ref, wo2_ref, bo2_ref,
               out_ref, lhs_ref):
    Tn, Bn, _ = x_ref.shape

    # Hoist weight loads and bias broadcasts out of the time loop
    # (JAX does not CSE broadcast_in_dim across unrolled iterations).
    wx = wx_ref[...]
    wh = wh_ref[...]
    bl = jnp.broadcast_to(bl_ref[...], (Bn, GATES))
    wa11 = wa11_ref[...]
    ba11 = jnp.broadcast_to(ba11_ref[...], (Bn, H_ATT1))
    wa12 = wa12_ref[...]
    ba12 = jnp.broadcast_to(ba12_ref[...], (Bn, ATT_IN))
    wm1 = wm1_ref[...]
    bm1 = jnp.broadcast_to(bm1_ref[...], (Bn, MID_H))
    wm2 = wm2_ref[...]
    bm2 = jnp.broadcast_to(bm2_ref[...], (Bn, MID_OUT))

    def step(t, carry):
        h, c, mem = carry
        x_t = x_ref[t]                                           # (B, 16)

        # Fused 3-way LSTMCell; gate lanes: [i | f | o | g], each [l, a, v].
        gates = (jnp.dot(x_t, wx, preferred_element_type=jnp.float32)
                 + jnp.dot(h, wh, preferred_element_type=jnp.float32)
                 + bl)
        sig = _sigmoid(gates[:, 0:3 * TOTAL_H])
        i_g = sig[:, 0:TOTAL_H]
        f_g = sig[:, TOTAL_H:2 * TOTAL_H]
        o_g = sig[:, 2 * TOTAL_H:3 * TOTAL_H]
        g_g = jnp.tanh(gates[:, 3 * TOTAL_H:4 * TOTAL_H])
        c_new = f_g * c + i_g * g_g
        h_new = o_g * jnp.tanh(c_new)

        # Attention over cStar = [prev_c | new_c]  (both already [l, a, v]).
        c_star = jnp.concatenate([c, c_new], axis=1)             # (B, 64)
        att_h = jnp.maximum(
            jnp.dot(c_star, wa11, preferred_element_type=jnp.float32) + ba11, 0.0)
        logits = jnp.dot(att_h, wa12, preferred_element_type=jnp.float32) + ba12
        m = jnp.max(logits, axis=1, keepdims=True)
        e = jnp.exp(logits - m)
        s = jnp.sum(e, axis=1, keepdims=True)
        r = pl.reciprocal(s, approx=True)
        r = r * (2.0 - s * r)          # one Newton step -> full f32 accuracy
        attention = e * r
        attended = attention * c_star

        # Fused att2 / gamma1 / gamma2: one (80,96) matmul, one block-diag
        # (96,48) matmul, outputs [c_hat | g1 | g2].
        both = jnp.concatenate([attended, mem], axis=1)          # (B, 80)
        mid = jnp.maximum(
            jnp.dot(both, wm1, preferred_element_type=jnp.float32) + bm1, 0.0)
        mo = jnp.dot(mid, wm2, preferred_element_type=jnp.float32) + bm2
        c_hat = jnp.tanh(mo[:, 0:MEM_DIM])
        g1 = _sigmoid(mo[:, MEM_DIM:2 * MEM_DIM])
        g2 = _sigmoid(mo[:, 2 * MEM_DIM:3 * MEM_DIM])
        mem_new = g1 * mem + g2 * c_hat
        return h_new, c_new, mem_new

    h0 = jnp.zeros((Bn, TOTAL_H), jnp.float32)
    c0 = jnp.zeros((Bn, TOTAL_H), jnp.float32)
    m0 = jnp.zeros((Bn, MEM_DIM), jnp.float32)
    h, c, mem = lax.fori_loop(0, Tn, step, (h0, c0, m0), unroll=True)

    last_hs = jnp.concatenate([h, mem], axis=1)                  # (B, 48)
    out_h = jnp.maximum(
        jnp.dot(last_hs, wo1_ref[...], preferred_element_type=jnp.float32)
        + bo1_ref[...], 0.0)
    out_ref[...] = (jnp.dot(out_h, wo2_ref[...], preferred_element_type=jnp.float32)
                    + bo2_ref[...])
    lhs_ref[...] = last_hs


# ------------------------------- wrapper --------------------------------------
def mfn_forward(text_x, audio_x, video_x, kernel_params):
    """Inputs: (B, T, feat) as in the PyTorch module; eval-mode forward."""
    text = jnp.transpose(text_x, (1, 0, 2)).astype(jnp.float32)
    audio = jnp.transpose(audio_x, (1, 0, 2)).astype(jnp.float32)
    video = jnp.transpose(video_x, (1, 0, 2)).astype(jnp.float32)
    x = jnp.concatenate([text, audio, video], axis=2)            # (T, B, 16)
    Bn = x.shape[1]

    out_shapes = (jax.ShapeDtypeStruct((Bn, OUT_DIM), jnp.float32),
                  jax.ShapeDtypeStruct((Bn, FINAL_OUT), jnp.float32))
    out, last_hs = pl.pallas_call(
        mfn_kernel,
        out_shape=out_shapes,
        # No grid / BlockSpecs: every array is a single full block resident in
        # VMEM (a few KiB total), loaded once for the whole recurrence.
    )(x, *kernel_params)
    return {'M': out, 'L': last_hs}


# ----------------------------- parameters -------------------------------------
def init_raw_params(key):
    """PyTorch-layout parameters (LSTMCell + Linear)."""
    def unif(k, shape, fan):
        bound = 1.0 / float(fan) ** 0.5
        return jax.random.uniform(k, shape, jnp.float32, -bound, bound)

    keys = iter(jax.random.split(key, 64))
    p = {}
    for name, d, h in [('l', D_L, DH_L), ('a', D_A, DH_A), ('v', D_V, DH_V)]:
        p[f'lstm_{name}_wih'] = unif(next(keys), (4 * h, d), h)
        p[f'lstm_{name}_whh'] = unif(next(keys), (4 * h, h), h)
        p[f'lstm_{name}_bih'] = unif(next(keys), (4 * h,), h)
        p[f'lstm_{name}_bhh'] = unif(next(keys), (4 * h,), h)
    for name, fin, fout in [('att1_fc1', ATT_IN, H_ATT1), ('att1_fc2', H_ATT1, ATT_IN),
                            ('att2_fc1', ATT_IN, H_ATT2), ('att2_fc2', H_ATT2, MEM_DIM),
                            ('gamma1_fc1', GAMMA_IN, H_G1), ('gamma1_fc2', H_G1, MEM_DIM),
                            ('gamma2_fc1', GAMMA_IN, H_G2), ('gamma2_fc2', H_G2, MEM_DIM),
                            ('out_fc1', FINAL_OUT, H_OUT), ('out_fc2', H_OUT, OUT_DIM)]:
        p[f'{name}_w'] = unif(next(keys), (fout, fin), fin)
        p[f'{name}_b'] = unif(next(keys), (fout,), fin)
    return p


def prepare_kernel_params(p):
    """Build fused, MXU-friendly weights from the PyTorch-layout params."""
    # --- fused LSTM: gate-major lanes [i | f | o | g], modality-major [l,a,v]
    wx = np.zeros((D_IN, GATES), np.float32)
    wh = np.zeros((TOTAL_H, GATES), np.float32)
    bl = np.zeros((GATES,), np.float32)
    gate_src = {'i': 0, 'f': 1, 'g': 2, 'o': 3}   # PyTorch chunk order
    gate_dst = ['i', 'f', 'o', 'g']               # fused lane order
    d_off, h_off = 0, 0
    for name, d, h in [('l', D_L, DH_L), ('a', D_A, DH_A), ('v', D_V, DH_V)]:
        wih = np.asarray(p[f'lstm_{name}_wih'])
        whh = np.asarray(p[f'lstm_{name}_whh'])
        bias = np.asarray(p[f'lstm_{name}_bih']) + np.asarray(p[f'lstm_{name}_bhh'])
        for gi, g in enumerate(gate_dst):
            s = gate_src[g]
            col = gi * TOTAL_H + h_off
            wx[d_off:d_off + d, col:col + h] = wih[s * h:(s + 1) * h, :].T
            wh[h_off:h_off + h, col:col + h] = whh[s * h:(s + 1) * h, :].T
            bl[col:col + h] = bias[s * h:(s + 1) * h]
        d_off += d
        h_off += h

    wa11 = np.asarray(p['att1_fc1_w']).T
    ba11 = np.asarray(p['att1_fc1_b'])[None, :]
    wa12 = np.asarray(p['att1_fc2_w']).T
    ba12 = np.asarray(p['att1_fc2_b'])[None, :]

    # --- fused att2/gamma1/gamma2 layer 1: shared input both=[attended | mem]
    wm1 = np.zeros((GAMMA_IN, MID_H), np.float32)
    wm1[0:ATT_IN, 0:H_ATT2] = np.asarray(p['att2_fc1_w']).T       # att2 ignores mem rows
    wm1[:, H_ATT2:H_ATT2 + H_G1] = np.asarray(p['gamma1_fc1_w']).T
    wm1[:, H_ATT2 + H_G1:MID_H] = np.asarray(p['gamma2_fc1_w']).T
    bm1 = np.concatenate([np.asarray(p['att2_fc1_b']),
                          np.asarray(p['gamma1_fc1_b']),
                          np.asarray(p['gamma2_fc1_b'])])[None, :]
    # --- layer 2: block-diagonal -> [c_hat | g1 | g2]
    wm2 = np.zeros((MID_H, MID_OUT), np.float32)
    wm2[0:H_ATT2, 0:MEM_DIM] = np.asarray(p['att2_fc2_w']).T
    wm2[H_ATT2:H_ATT2 + H_G1, MEM_DIM:2 * MEM_DIM] = np.asarray(p['gamma1_fc2_w']).T
    wm2[H_ATT2 + H_G1:MID_H, 2 * MEM_DIM:MID_OUT] = np.asarray(p['gamma2_fc2_w']).T
    bm2 = np.concatenate([np.asarray(p['att2_fc2_b']),
                          np.asarray(p['gamma1_fc2_b']),
                          np.asarray(p['gamma2_fc2_b'])])[None, :]

    wo1 = np.asarray(p['out_fc1_w']).T
    bo1 = np.asarray(p['out_fc1_b'])[None, :]
    wo2 = np.asarray(p['out_fc2_w']).T
    bo2 = np.asarray(p['out_fc2_b'])[None, :]

    arrs = [wx, wh, bl[None, :], wa11, ba11, wa12, ba12,
            wm1, bm1, wm2, bm2, wo1, bo1, wo2, bo2]
    return [jnp.asarray(a, jnp.float32) for a in arrs]


# ------------------------- pure-JAX reference ---------------------------------
def mfn_reference(text_x, audio_x, video_x, p):
    """Literal (unfused) translation of the PyTorch forward, eval mode."""
    text = jnp.transpose(text_x, (1, 0, 2))
    audio = jnp.transpose(audio_x, (1, 0, 2))
    video = jnp.transpose(video_x, (1, 0, 2))

    def lstm_cell(x, h, c, wih, whh, bih, bhh, dh):
        g = x @ wih.T + bih + h @ whh.T + bhh
        i = jax.nn.sigmoid(g[:, 0:dh])
        f = jax.nn.sigmoid(g[:, dh:2 * dh])
        gg = jnp.tanh(g[:, 2 * dh:3 * dh])
        o = jax.nn.sigmoid(g[:, 3 * dh:4 * dh])
        c_new = f * c + i * gg
        return o * jnp.tanh(c_new), c_new

    def lin(x, name):
        return x @ p[f'{name}_w'].T + p[f'{name}_b']

    n = text.shape[1]
    h_l = jnp.zeros((n, DH_L)); c_l = jnp.zeros((n, DH_L))
    h_a = jnp.zeros((n, DH_A)); c_a = jnp.zeros((n, DH_A))
    h_v = jnp.zeros((n, DH_V)); c_v = jnp.zeros((n, DH_V))
    mem = jnp.zeros((n, MEM_DIM))
    for i in range(text.shape[0]):
        pcl, pca, pcv = c_l, c_a, c_v
        h_l, c_l = lstm_cell(text[i], h_l, pcl, p['lstm_l_wih'], p['lstm_l_whh'],
                             p['lstm_l_bih'], p['lstm_l_bhh'], DH_L)
        h_a, c_a = lstm_cell(audio[i], h_a, pca, p['lstm_a_wih'], p['lstm_a_whh'],
                             p['lstm_a_bih'], p['lstm_a_bhh'], DH_A)
        h_v, c_v = lstm_cell(video[i], h_v, pcv, p['lstm_v_wih'], p['lstm_v_whh'],
                             p['lstm_v_bih'], p['lstm_v_bhh'], DH_V)
        c_star = jnp.concatenate([pcl, pca, pcv, c_l, c_a, c_v], axis=1)
        att = jax.nn.softmax(lin(jnp.maximum(lin(c_star, 'att1_fc1'), 0.0),
                                 'att1_fc2'), axis=1)
        attended = att * c_star
        c_hat = jnp.tanh(lin(jnp.maximum(lin(attended, 'att2_fc1'), 0.0), 'att2_fc2'))
        both = jnp.concatenate([attended, mem], axis=1)
        g1 = jax.nn.sigmoid(lin(jnp.maximum(lin(both, 'gamma1_fc1'), 0.0), 'gamma1_fc2'))
        g2 = jax.nn.sigmoid(lin(jnp.maximum(lin(both, 'gamma2_fc1'), 0.0), 'gamma2_fc2'))
        mem = g1 * mem + g2 * c_hat
    last_hs = jnp.concatenate([h_l, h_a, h_v, mem], axis=1)
    out = jnp.maximum(lin(last_hs, 'out_fc1'), 0.0) @ p['out_fc2_w'].T + p['out_fc2_b']
    return {'M': out, 'L': last_hs}


# --------------------------------- main ----------------------------------------
if __name__ == "__main__":
    key = jax.random.PRNGKey(0)
    k1, k2, k3, kp = jax.random.split(key, 4)
    text_x = jax.random.normal(k1, (B, T, D_L), jnp.float32)
    audio_x = jax.random.normal(k2, (B, T, D_A), jnp.float32)
    video_x = jax.random.normal(k3, (B, T, D_V), jnp.float32)

    raw_params = init_raw_params(kp)
    kernel_params = prepare_kernel_params(raw_params)

    res = mfn_forward(text_x, audio_x, video_x, kernel_params)
    jax.block_until_ready(res)

    ref = mfn_reference(text_x, audio_x, video_x, raw_params)
    assert res['M'].shape == (B, OUT_DIM) and res['L'].shape == (B, FINAL_OUT)
    assert bool(jnp.all(jnp.isfinite(res['M']))) and bool(jnp.all(jnp.isfinite(res['L'])))
    assert jnp.allclose(res['M'], ref['M'], atol=2e-3, rtol=2e-3)
    assert jnp.allclose(res['L'], ref['L'], atol=2e-3, rtol=2e-3)
    print("KERNEL_OK")
</pallas_src>

<mosaic_0001>
module attributes {stable_mosaic.version = 11 : i64} {
  func.func @mfn_kernel(%arg0: memref<8x2x16xf32, #tpu.memory_space<vmem>>, %arg1: memref<16x128xf32, #tpu.memory_space<vmem>>, %arg2: memref<32x128xf32, #tpu.memory_space<vmem>>, %arg3: memref<1x128xf32, #tpu.memory_space<vmem>>, %arg4: memref<64x32xf32, #tpu.memory_space<vmem>>, %arg5: memref<1x32xf32, #tpu.memory_space<vmem>>, %arg6: memref<32x64xf32, #tpu.memory_space<vmem>>, %arg7: memref<1x64xf32, #tpu.memory_space<vmem>>, %arg8: memref<80x96xf32, #tpu.memory_space<vmem>>, %arg9: memref<1x96xf32, #tpu.memory_space<vmem>>, %arg10: memref<96x48xf32, #tpu.memory_space<vmem>>, %arg11: memref<1x48xf32, #tpu.memory_space<vmem>>, %arg12: memref<48x32xf32, #tpu.memory_space<vmem>>, %arg13: memref<1x32xf32, #tpu.memory_space<vmem>>, %arg14: memref<32x1xf32, #tpu.memory_space<vmem>>, %arg15: memref<1x1xf32, #tpu.memory_space<vmem>>, %arg16: memref<2x1xf32, #tpu.memory_space<vmem>>, %arg17: memref<2x48xf32, #tpu.memory_space<vmem>>) attributes {dimension_semantics = [], scalar_prefetch = 0 : i64, scratch_operands = 0 : i64, tpu.core_type = #tpu.core_type<tc>} {
    %c0 = arith.constant 0 : index
    %c0_0 = arith.constant 0 : index
    %0 = vector.load %arg1[%c0, %c0_0] : memref<16x128xf32, #tpu.memory_space<vmem>>, vector<16x128xf32>
    %c0_1 = arith.constant 0 : index
    %c0_2 = arith.constant 0 : index
    %1 = vector.load %arg2[%c0_1, %c0_2] : memref<32x128xf32, #tpu.memory_space<vmem>>, vector<32x128xf32>
    %c0_3 = arith.constant 0 : index
    %c0_4 = arith.constant 0 : index
    %2 = vector.load %arg3[%c0_3, %c0_4] : memref<1x128xf32, #tpu.memory_space<vmem>>, vector<1x128xf32>
    %3 = vector.shape_cast %2 : vector<1x128xf32> to vector<1x128xf32>
    %4 = vector.broadcast %3 : vector<1x128xf32> to vector<2x128xf32>
    %c0_5 = arith.constant 0 : index
    %c0_6 = arith.constant 0 : index
    %5 = vector.load %arg4[%c0_5, %c0_6] : memref<64x32xf32, #tpu.memory_space<vmem>>, vector<64x32xf32>
    %c0_7 = arith.constant 0 : index
    %c0_8 = arith.constant 0 : index
    %6 = vector.load %arg5[%c0_7, %c0_8] : memref<1x32xf32, #tpu.memory_space<vmem>>, vector<1x32xf32>
    %7 = vector.shape_cast %6 : vector<1x32xf32> to vector<1x32xf32>
    %8 = vector.broadcast %7 : vector<1x32xf32> to vector<2x32xf32>
    %c0_9 = arith.constant 0 : index
    %c0_10 = arith.constant 0 : index
    %9 = vector.load %arg6[%c0_9, %c0_10] : memref<32x64xf32, #tpu.memory_space<vmem>>, vector<32x64xf32>
    %c0_11 = arith.constant 0 : index
    %c0_12 = arith.constant 0 : index
    %10 = vector.load %arg7[%c0_11, %c0_12] : memref<1x64xf32, #tpu.memory_space<vmem>>, vector<1x64xf32>
    %11 = vector.shape_cast %10 : vector<1x64xf32> to vector<1x64xf32>
    %12 = vector.broadcast %11 : vector<1x64xf32> to vector<2x64xf32>
    %c0_13 = arith.constant 0 : index
    %c0_14 = arith.constant 0 : index
    %13 = vector.load %arg8[%c0_13, %c0_14] : memref<80x96xf32, #tpu.memory_space<vmem>>, vector<80x96xf32>
    %c0_15 = arith.constant 0 : index
    %c0_16 = arith.constant 0 : index
    %14 = vector.load %arg9[%c0_15, %c0_16] : memref<1x96xf32, #tpu.memory_space<vmem>>, vector<1x96xf32>
    %15 = vector.shape_cast %14 : vector<1x96xf32> to vector<1x96xf32>
    %16 = vector.broadcast %15 : vector<1x96xf32> to vector<2x96xf32>
    %c0_17 = arith.constant 0 : index
    %c0_18 = arith.constant 0 : index
    %17 = vector.load %arg10[%c0_17, %c0_18] : memref<96x48xf32, #tpu.memory_space<vmem>>, vector<96x48xf32>
    %c0_19 = arith.constant 0 : index
    %c0_20 = arith.constant 0 : index
    %18 = vector.load %arg11[%c0_19, %c0_20] : memref<1x48xf32, #tpu.memory_space<vmem>>, vector<1x48xf32>
    %19 = vector.shape_cast %18 : vector<1x48xf32> to vector<1x48xf32>
    %20 = vector.broadcast %19 : vector<1x48xf32> to vector<2x48xf32>
    %cst = arith.constant 0.000000e+00 : f32
    %21 = vector.broadcast %cst : f32 to vector<2x32xf32>
    %cst_21 = arith.constant 0.000000e+00 : f32
    %22 = vector.broadcast %cst_21 : f32 to vector<2x32xf32>
    %cst_22 = arith.constant 0.000000e+00 : f32
    %23 = vector.broadcast %cst_22 : f32 to vector<2x16xf32>
    %c0_i32 = arith.constant 0 : i32
    %24 = arith.index_cast %c0_i32 : i32 to index
    %c0_23 = arith.constant 0 : index
    %c0_24 = arith.constant 0 : index
    %25 = vector.load %arg0[%24, %c0_23, %c0_24] : memref<8x2x16xf32, #tpu.memory_space<vmem>>, vector<1x2x16xf32>
    %26 = vector.shape_cast %25 : vector<1x2x16xf32> to vector<2x16xf32>
    %cst_25 = arith.constant dense<0.000000e+00> : vector<2x128xf32>
    %27 = tpu.matmul %26, %0, %cst_25 {dimension_numbers = #tpu.dot_dimension_numbers<[1], [0], [0], [1], [0, 0, 1, 1], [], []>} : vector<2x16xf32>, vector<16x128xf32>, vector<2x128xf32> -> vector<2x128xf32>
    %cst_26 = arith.constant dense<0.000000e+00> : vector<2x128xf32>
    %28 = tpu.matmul %21, %1, %cst_26 {dimension_numbers = #tpu.dot_dimension_numbers<[1], [0], [0], [1], [0, 0, 1, 1], [], []>} : vector<2x32xf32>, vector<32x128xf32>, vector<2x128xf32> -> vector<2x128xf32>
    %29 = arith.addf %27, %28 : vector<2x128xf32>
    %30 = arith.addf %29, %4 : vector<2x128xf32>
    %31 = vector.extract_strided_slice %30 {offsets = [0, 0], sizes = [2, 96], strides = [1, 1]} : vector<2x128xf32> to vector<2x96xf32>
    %cst_27 = arith.constant 5.000000e-01 : f32
    %32 = vector.broadcast %cst_27 : f32 to vector<2x96xf32>
    %33 = arith.mulf %32, %31 : vector<2x96xf32>
    %34 = math.tanh %33 : vector<2x96xf32>
    %cst_28 = arith.constant 1.000000e+00 : f32
    %35 = vector.broadcast %cst_28 : f32 to vector<2x96xf32>
    %36 = arith.addf %34, %35 : vector<2x96xf32>
    %cst_29 = arith.constant 5.000000e-01 : f32
    %37 = vector.broadcast %cst_29 : f32 to vector<2x96xf32>
    %38 = arith.mulf %37, %36 : vector<2x96xf32>
    %39 = vector.extract_strided_slice %38 {offsets = [0, 0], sizes = [2, 32], strides = [1, 1]} : vector<2x96xf32> to vector<2x32xf32>
    %40 = vector.extract_strided_slice %38 {offsets = [0, 32], sizes = [2, 32], strides = [1, 1]} : vector<2x96xf32> to vector<2x32xf32>
    %41 = vector.extract_strided_slice %38 {offsets = [0, 64], sizes = [2, 32], strides = [1, 1]} : vector<2x96xf32> to vector<2x32xf32>
    %42 = vector.extract_strided_slice %30 {offsets = [0, 96], sizes = [2, 32], strides = [1, 1]} : vector<2x128xf32> to vector<2x32xf32>
    %43 = math.tanh %42 : vector<2x32xf32>
    %44 = arith.mulf %40, %22 : vector<2x32xf32>
    %45 = arith.mulf %39, %43 : vector<2x32xf32>
    %46 = arith.addf %44, %45 : vector<2x32xf32>
    %47 = math.tanh %46 : vector<2x32xf32>
    %48 = arith.mulf %41, %47 : vector<2x32xf32>
    %49 = tpu.concatenate %22, %46 in 1 : vector<2x32xf32>, vector<2x32xf32> -> vector<2x64xf32>
    %cst_30 = arith.constant dense<0.000000e+00> : vector<2x32xf32>
    %50 = tpu.matmul %49, %5, %cst_30 {dimension_numbers = #tpu.dot_dimension_numbers<[1], [0], [0], [1], [0, 0, 1, 1], [], []>} : vector<2x64xf32>, vector<64x32xf32>, vector<2x32xf32> -> vector<2x32xf32>
    %51 = arith.addf %50, %8 : vector<2x32xf32>
    %cst_31 = arith.constant 0.000000e+00 : f32
    %52 = vector.broadcast %cst_31 : f32 to vector<2x32xf32>
    %53 = arith.maximumf %51, %52 : vector<2x32xf32>
    %cst_32 = arith.constant dense<0.000000e+00> : vector<2x64xf32>
    %54 = tpu.matmul %53, %9, %cst_32 {dimension_numbers = #tpu.dot_dimension_numbers<[1], [0], [0], [1], [0, 0, 1, 1], [], []>} : vector<2x32xf32>, vector<32x64xf32>, vector<2x64xf32> -> vector<2x64xf32>
    %55 = arith.addf %54, %12 : vector<2x64xf32>
    %cst_33 = arith.constant dense<0xFF800000> : vector<2xf32>
    %56 = vector.multi_reduction <maximumf>, %55, %cst_33 [1] : vector<2x64xf32> to vector<2xf32>
    %57 = vector.shape_cast %56 : vector<2xf32> to vector<2x1xf32>
    %58 = vector.broadcast %57 : vector<2x1xf32> to vector<2x64xf32>
    %59 = arith.subf %55, %58 : vector<2x64xf32>
    %60 = math.exp %59 : vector<2x64xf32>
    %cst_34 = arith.constant dense<0.000000e+00> : vector<2xf32>
    %61 = vector.multi_reduction <add>, %60, %cst_34 [1] : vector<2x64xf32> to vector<2xf32>
    %62 = vector.shape_cast %61 : vector<2xf32> to vector<2x1xf32>
    %63 = tpu.reciprocal %62 {approx = true} : vector<2x1xf32> -> vector<2x1xf32>
    %64 = arith.mulf %62, %63 : vector<2x1xf32>
    %cst_35 = arith.constant 2.000000e+00 : f32
    %65 = vector.broadcast %cst_35 : f32 to vector<2x1xf32>
    %66 = arith.subf %65, %64 : vector<2x1xf32>
    %67 = arith.mulf %63, %66 : vector<2x1xf32>
    %68 = vector.broadcast %67 : vector<2x1xf32> to vector<2x64xf32>
    %69 = arith.mulf %60, %68 : vector<2x64xf32>
    %70 = arith.mulf %69, %49 : vector<2x64xf32>
    %71 = tpu.concatenate %70, %23 in 1 : vector<2x64xf32>, vector<2x16xf32> -> vector<2x80xf32>
    %cst_36 = arith.constant dense<0.000000e+00> : vector<2x96xf32>
    %72 = tpu.matmul %71, %13, %cst_36 {dimension_numbers = #tpu.dot_dimension_numbers<[1], [0], [0], [1], [0, 0, 1, 1], [], []>} : vector<2x80xf32>, vector<80x96xf32>, vector<2x96xf32> -> vector<2x96xf32>
    %73 = arith.addf %72, %16 : vector<2x96xf32>
    %cst_37 = arith.constant 0.000000e+00 : f32
    %74 = vector.broadcast %cst_37 : f32 to vector<2x96xf32>
    %75 = arith.maximumf %73, %74 : vector<2x96xf32>
    %cst_38 = arith.constant dense<0.000000e+00> : vector<2x48xf32>
    %76 = tpu.matmul %75, %17, %cst_38 {dimension_numbers = #tpu.dot_dimension_numbers<[1], [0], [0], [1], [0, 0, 1, 1], [], []>} : vector<2x96xf32>, vector<96x48xf32>, vector<2x48xf32> -> vector<2x48xf32>
    %77 = arith.addf %76, %20 : vector<2x48xf32>
    %78 = vector.extract_strided_slice %77 {offsets = [0, 0], sizes = [2, 16], strides = [1, 1]} : vector<2x48xf32> to vector<2x16xf32>
    %79 = math.tanh %78 : vector<2x16xf32>
    %80 = vector.extract_strided_slice %77 {offsets = [0, 16], sizes = [2, 16], strides = [1, 1]} : vector<2x48xf32> to vector<2x16xf32>
    %cst_39 = arith.constant 5.000000e-01 : f32
    %81 = vector.broadcast %cst_39 : f32 to vector<2x16xf32>
    %82 = arith.mulf %81, %80 : vector<2x16xf32>
    %83 = math.tanh %82 : vector<2x16xf32>
    %cst_40 = arith.constant 1.000000e+00 : f32
    %84 = vector.broadcast %cst_40 : f32 to vector<2x16xf32>
    %85 = arith.addf %83, %84 : vector<2x16xf32>
    %cst_41 = arith.constant 5.000000e-01 : f32
    %86 = vector.broadcast %cst_41 : f32 to vector<2x16xf32>
    %87 = arith.mulf %86, %85 : vector<2x16xf32>
    %88 = vector.extract_strided_slice %77 {offsets = [0, 32], sizes = [2, 16], strides = [1, 1]} : vector<2x48xf32> to vector<2x16xf32>
    %cst_42 = arith.constant 5.000000e-01 : f32
    %89 = vector.broadcast %cst_42 : f32 to vector<2x16xf32>
    %90 = arith.mulf %89, %88 : vector<2x16xf32>
    %91 = math.tanh %90 : vector<2x16xf32>
    %cst_43 = arith.constant 1.000000e+00 : f32
    %92 = vector.broadcast %cst_43 : f32 to vector<2x16xf32>
    %93 = arith.addf %91, %92 : vector<2x16xf32>
    %cst_44 = arith.constant 5.000000e-01 : f32
    %94 = vector.broadcast %cst_44 : f32 to vector<2x16xf32>
    %95 = arith.mulf %94, %93 : vector<2x16xf32>
    %96 = arith.mulf %87, %23 : vector<2x16xf32>
    %97 = arith.mulf %95, %79 : vector<2x16xf32>
    %98 = arith.addf %96, %97 : vector<2x16xf32>
    %c1_i32 = arith.constant 1 : i32
    %99 = arith.index_cast %c1_i32 : i32 to index
    %c0_45 = arith.constant 0 : index
    %c0_46 = arith.constant 0 : index
    %100 = vector.load %arg0[%99, %c0_45, %c0_46] : memref<8x2x16xf32, #tpu.memory_space<vmem>>, vector<1x2x16xf32>
    %101 = vector.shape_cast %100 : vector<1x2x16xf32> to vector<2x16xf32>
    %cst_47 = arith.constant dense<0.000000e+00> : vector<2x128xf32>
    %102 = tpu.matmul %101, %0, %cst_47 {dimension_numbers = #tpu.dot_dimension_numbers<[1], [0], [0], [1], [0, 0, 1, 1], [], []>} : vector<2x16xf32>, vector<16x128xf32>, vector<2x128xf32> -> vector<2x128xf32>
    %cst_48 = arith.constant dense<0.000000e+00> : vector<2x128xf32>
    %103 = tpu.matmul %48, %1, %cst_48 {dimension_numbers = #tpu.dot_dimension_numbers<[1], [0], [0], [1], [0, 0, 1, 1], [], []>} : vector<2x32xf32>, vector<32x128xf32>, vector<2x128xf32> -> vector<2x128xf32>
    %104 = arith.addf %102, %103 : vector<2x128xf32>
    %105 = arith.addf %104, %4 : vector<2x128xf32>
    %106 = vector.extract_strided_slice %105 {offsets = [0, 0], sizes = [2, 96], strides = [1, 1]} : vector<2x128xf32> to vector<2x96xf32>
    %cst_49 = arith.constant 5.000000e-01 : f32
    %107 = vector.broadcast %cst_49 : f32 to vector<2x96xf32>
    %108 = arith.mulf %107, %106 : vector<2x96xf32>
    %109 = math.tanh %108 : vector<2x96xf32>
    %cst_50 = arith.constant 1.000000e+00 : f32
    %110 = vector.broadcast %cst_50 : f32 to vector<2x96xf32>
    %111 = arith.addf %109, %110 : vector<2x96xf32>
    %cst_51 = arith.constant 5.000000e-01 : f32
    %112 = vector.broadcast %cst_51 : f32 to vector<2x96xf32>
    %113 = arith.mulf %112, %111 : vector<2x96xf32>
    %114 = vector.extract_strided_slice %113 {offsets = [0, 0], sizes = [2, 32], strides = [1, 1]} : vector<2x96xf32> to vector<2x32xf32>
    %115 = vector.extract_strided_slice %113 {offsets = [0, 32], sizes = [2, 32], strides = [1, 1]} : vector<2x96xf32> to vector<2x32xf32>
    %116 = vector.extract_strided_slice %113 {offsets = [0, 64], sizes = [2, 32], strides = [1, 1]} : vector<2x96xf32> to vector<2x32xf32>
    %117 = vector.extract_strided_slice %105 {offsets = [0, 96], sizes = [2, 32], strides = [1, 1]} : vector<2x128xf32> to vector<2x32xf32>
    %118 = math.tanh %117 : vector<2x32xf32>
    %119 = arith.mulf %115, %46 : vector<2x32xf32>
    %120 = arith.mulf %114, %118 : vector<2x32xf32>
    %121 = arith.addf %119, %120 : vector<2x32xf32>
    %122 = math.tanh %121 : vector<2x32xf32>
    %123 = arith.mulf %116, %122 : vector<2x32xf32>
    %124 = tpu.concatenate %46, %121 in 1 : vector<2x32xf32>, vector<2x32xf32> -> vector<2x64xf32>
    %cst_52 = arith.constant dense<0.000000e+00> : vector<2x32xf32>
    %125 = tpu.matmul %124, %5, %cst_52 {dimension_numbers = #tpu.dot_dimension_numbers<[1], [0], [0], [1], [0, 0, 1, 1], [], []>} : vector<2x64xf32>, vector<64x32xf32>, vector<2x32xf32> -> vector<2x32xf32>
    %126 = arith.addf %125, %8 : vector<2x32xf32>
    %cst_53 = arith.constant 0.000000e+00 : f32
    %127 = vector.broadcast %cst_53 : f32 to vector<2x32xf32>
    %128 = arith.maximumf %126, %127 : vector<2x32xf32>
    %cst_54 = arith.constant dense<0.000000e+00> : vector<2x64xf32>
    %129 = tpu.matmul %128, %9, %cst_54 {dimension_numbers = #tpu.dot_dimension_numbers<[1], [0], [0], [1], [0, 0, 1, 1], [], []>} : vector<2x32xf32>, vector<32x64xf32>, vector<2x64xf32> -> vector<2x64xf32>
    %130 = arith.addf %129, %12 : vector<2x64xf32>
    %cst_55 = arith.constant dense<0xFF800000> : vector<2xf32>
    %131 = vector.multi_reduction <maximumf>, %130, %cst_55 [1] : vector<2x64xf32> to vector<2xf32>
    %132 = vector.shape_cast %131 : vector<2xf32> to vector<2x1xf32>
    %133 = vector.broadcast %132 : vector<2x1xf32> to vector<2x64xf32>
    %134 = arith.subf %130, %133 : vector<2x64xf32>
    %135 = math.exp %134 : vector<2x64xf32>
    %cst_56 = arith.constant dense<0.000000e+00> : vector<2xf32>
    %136 = vector.multi_reduction <add>, %135, %cst_56 [1] : vector<2x64xf32> to vector<2xf32>
    %137 = vector.shape_cast %136 : vector<2xf32> to vector<2x1xf32>
    %138 = tpu.reciprocal %137 {approx = true} : vector<2x1xf32> -> vector<2x1xf32>
    %139 = arith.mulf %137, %138 : vector<2x1xf32>
    %cst_57 = arith.constant 2.000000e+00 : f32
    %140 = vector.broadcast %cst_57 : f32 to vector<2x1xf32>
    %141 = arith.subf %140, %139 : vector<2x1xf32>
    %142 = arith.mulf %138, %141 : vector<2x1xf32>
    %143 = vector.broadcast %142 : vector<2x1xf32> to vector<2x64xf32>
    %144 = arith.mulf %135, %143 : vector<2x64xf32>
    %145 = arith.mulf %144, %124 : vector<2x64xf32>
    %146 = tpu.concatenate %145, %98 in 1 : vector<2x64xf32>, vector<2x16xf32> -> vector<2x80xf32>
    %cst_58 = arith.constant dense<0.000000e+00> : vector<2x96xf32>
    %147 = tpu.matmul %146, %13, %cst_58 {dimension_numbers = #tpu.dot_dimension_numbers<[1], [0], [0], [1], [0, 0, 1, 1], [], []>} : vector<2x80xf32>, vector<80x96xf32>, vector<2x96xf32> -> vector<2x96xf32>
    %148 = arith.addf %147, %16 : vector<2x96xf32>
    %cst_59 = arith.constant 0.000000e+00 : f32
    %149 = vector.broadcast %cst_59 : f32 to vector<2x96xf32>
    %150 = arith.maximumf %148, %149 : vector<2x96xf32>
    %cst_60 = arith.constant dense<0.000000e+00> : vector<2x48xf32>
    %151 = tpu.matmul %150, %17, %cst_60 {dimension_numbers = #tpu.dot_dimension_numbers<[1], [0], [0], [1], [0, 0, 1, 1], [], []>} : vector<2x96xf32>, vector<96x48xf32>, vector<2x48xf32> -> vector<2x48xf32>
    %152 = arith.addf %151, %20 : vector<2x48xf32>
    %153 = vector.extract_strided_slice %152 {offsets = [0, 0], sizes = [2, 16], strides = [1, 1]} : vector<2x48xf32> to vector<2x16xf32>
    %154 = math.tanh %153 : vector<2x16xf32>
    %155 = vector.extract_strided_slice %152 {offsets = [0, 16], sizes = [2, 16], strides = [1, 1]} : vector<2x48xf32> to vector<2x16xf32>
    %cst_61 = arith.constant 5.000000e-01 : f32
    %156 = vector.broadcast %cst_61 : f32 to vector<2x16xf32>
    %157 = arith.mulf %156, %155 : vector<2x16xf32>
    %158 = math.tanh %157 : vector<2x16xf32>
    %cst_62 = arith.constant 1.000000e+00 : f32
    %159 = vector.broadcast %cst_62 : f32 to vector<2x16xf32>
    %160 = arith.addf %158, %159 : vector<2x16xf32>
    %cst_63 = arith.constant 5.000000e-01 : f32
    %161 = vector.broadcast %cst_63 : f32 to vector<2x16xf32>
    %162 = arith.mulf %161, %160 : vector<2x16xf32>
    %163 = vector.extract_strided_slice %152 {offsets = [0, 32], sizes = [2, 16], strides = [1, 1]} : vector<2x48xf32> to vector<2x16xf32>
    %cst_64 = arith.constant 5.000000e-01 : f32
    %164 = vector.broadcast %cst_64 : f32 to vector<2x16xf32>
    %165 = arith.mulf %164, %163 : vector<2x16xf32>
    %166 = math.tanh %165 : vector<2x16xf32>
    %cst_65 = arith.constant 1.000000e+00 : f32
    %167 = vector.broadcast %cst_65 : f32 to vector<2x16xf32>
    %168 = arith.addf %166, %167 : vector<2x16xf32>
    %cst_66 = arith.constant 5.000000e-01 : f32
    %169 = vector.broadcast %cst_66 : f32 to vector<2x16xf32>
    %170 = arith.mulf %169, %168 : vector<2x16xf32>
    %171 = arith.mulf %162, %98 : vector<2x16xf32>
    %172 = arith.mulf %170, %154 : vector<2x16xf32>
    %173 = arith.addf %171, %172 : vector<2x16xf32>
    %c2_i32 = arith.constant 2 : i32
    %174 = arith.index_cast %c2_i32 : i32 to index
    %c0_67 = arith.constant 0 : index
    %c0_68 = arith.constant 0 : index
    %175 = vector.load %arg0[%174, %c0_67, %c0_68] : memref<8x2x16xf32, #tpu.memory_space<vmem>>, vector<1x2x16xf32>
    %176 = vector.shape_cast %175 : vector<1x2x16xf32> to vector<2x16xf32>
    %cst_69 = arith.constant dense<0.000000e+00> : vector<2x128xf32>
    %177 = tpu.matmul %176, %0, %cst_69 {dimension_numbers = #tpu.dot_dimension_numbers<[1], [0], [0], [1], [0, 0, 1, 1], [], []>} : vector<2x16xf32>, vector<16x128xf32>, vector<2x128xf32> -> vector<2x128xf32>
    %cst_70 = arith.constant dense<0.000000e+00> : vector<2x128xf32>
    %178 = tpu.matmul %123, %1, %cst_70 {dimension_numbers = #tpu.dot_dimension_numbers<[1], [0], [0], [1], [0, 0, 1, 1], [], []>} : vector<2x32xf32>, vector<32x128xf32>, vector<2x128xf32> -> vector<2x128xf32>
    %179 = arith.addf %177, %178 : vector<2x128xf32>
    %180 = arith.addf %179, %4 : vector<2x128xf32>
    %181 = vector.extract_strided_slice %180 {offsets = [0, 0], sizes = [2, 96], strides = [1, 1]} : vector<2x128xf32> to vector<2x96xf32>
    %cst_71 = arith.constant 5.000000e-01 : f32
    %182 = vector.broadcast %cst_71 : f32 to vector<2x96xf32>
    %183 = arith.mulf %182, %181 : vector<2x96xf32>
    %184 = math.tanh %183 : vector<2x96xf32>
    %cst_72 = arith.constant 1.000000e+00 : f32
    %185 = vector.broadcast %cst_72 : f32 to vector<2x96xf32>
    %186 = arith.addf %184, %185 : vector<2x96xf32>
    %cst_73 = arith.constant 5.000000e-01 : f32
    %187 = vector.broadcast %cst_73 : f32 to vector<2x96xf32>
    %188 = arith.mulf %187, %186 : vector<2x96xf32>
    %189 = vector.extract_strided_slice %188 {offsets = [0, 0], sizes = [2, 32], strides = [1, 1]} : vector<2x96xf32> to vector<2x32xf32>
    %190 = vector.extract_strided_slice %188 {offsets = [0, 32], sizes = [2, 32], strides = [1, 1]} : vector<2x96xf32> to vector<2x32xf32>
    %191 = vector.extract_strided_slice %188 {offsets = [0, 64], sizes = [2, 32], strides = [1, 1]} : vector<2x96xf32> to vector<2x32xf32>
    %192 = vector.extract_strided_slice %180 {offsets = [0, 96], sizes = [2, 32], strides = [1, 1]} : vector<2x128xf32> to vector<2x32xf32>
    %193 = math.tanh %192 : vector<2x32xf32>
    %194 = arith.mulf %190, %121 : vector<2x32xf32>
    %195 = arith.mulf %189, %193 : vector<2x32xf32>
    %196 = arith.addf %194, %195 : vector<2x32xf32>
    %197 = math.tanh %196 : vector<2x32xf32>
    %198 = arith.mulf %191, %197 : vector<2x32xf32>
    %199 = tpu.concatenate %121, %196 in 1 : vector<2x32xf32>, vector<2x32xf32> -> vector<2x64xf32>
    %cst_74 = arith.constant dense<0.000000e+00> : vector<2x32xf32>
    %200 = tpu.matmul %199, %5, %cst_74 {dimension_numbers = #tpu.dot_dimension_numbers<[1], [0], [0], [1], [0, 0, 1, 1], [], []>} : vector<2x64xf32>, vector<64x32xf32>, vector<2x32xf32> -> vector<2x32xf32>
    %201 = arith.addf %200, %8 : vector<2x32xf32>
    %cst_75 = arith.constant 0.000000e+00 : f32
    %202 = vector.broadcast %cst_75 : f32 to vector<2x32xf32>
    %203 = arith.maximumf %201, %202 : vector<2x32xf32>
    %cst_76 = arith.constant dense<0.000000e+00> : vector<2x64xf32>
    %204 = tpu.matmul %203, %9, %cst_76 {dimension_numbers = #tpu.dot_dimension_numbers<[1], [0], [0], [1], [0, 0, 1, 1], [], []>} : vector<2x32xf32>, vector<32x64xf32>, vector<2x64xf32> -> vector<2x64xf32>
    %205 = arith.addf %204, %12 : vector<2x64xf32>
    %cst_77 = arith.constant dense<0xFF800000> : vector<2xf32>
    %206 = vector.multi_reduction <maximumf>, %205, %cst_77 [1] : vector<2x64xf32> to vector<2xf32>
    %207 = vector.shape_cast %206 : vector<2xf32> to vector<2x1xf32>
    %208 = vector.broadcast %207 : vector<2x1xf32> to vector<2x64xf32>
    %209 = arith.subf %205, %208 : vector<2x64xf32>
    %210 = math.exp %209 : vector<2x64xf32>
    %cst_78 = arith.constant dense<0.000000e+00> : vector<2xf32>
    %211 = vector.multi_reduction <add>, %210, %cst_78 [1] : vector<2x64xf32> to vector<2xf32>
    %212 = vector.shape_cast %211 : vector<2xf32> to vector<2x1xf32>
    %213 = tpu.reciprocal %212 {approx = true} : vector<2x1xf32> -> vector<2x1xf32>
    %214 = arith.mulf %212, %213 : vector<2x1xf32>
    %cst_79 = arith.constant 2.000000e+00 : f32
    %215 = vector.broadcast %cst_79 : f32 to vector<2x1xf32>
    %216 = arith.subf %215, %214 : vector<2x1xf32>
    %217 = arith.mulf %213, %216 : vector<2x1xf32>
    %218 = vector.broadcast %217 : vector<2x1xf32> to vector<2x64xf32>
    %219 = arith.mulf %210, %218 : vector<2x64xf32>
    %220 = arith.mulf %219, %199 : vector<2x64xf32>
    %221 = tpu.concatenate %220, %173 in 1 : vector<2x64xf32>, vector<2x16xf32> -> vector<2x80xf32>
    %cst_80 = arith.constant dense<0.000000e+00> : vector<2x96xf32>
    %222 = tpu.matmul %221, %13, %cst_80 {dimension_numbers = #tpu.dot_dimension_numbers<[1], [0], [0], [1], [0, 0, 1, 1], [], []>} : vector<2x80xf32>, vector<80x96xf32>, vector<2x96xf32> -> vector<2x96xf32>
    %223 = arith.addf %222, %16 : vector<2x96xf32>
    %cst_81 = arith.constant 0.000000e+00 : f32
    %224 = vector.broadcast %cst_81 : f32 to vector<2x96xf32>
    %225 = arith.maximumf %223, %224 : vector<2x96xf32>
    %cst_82 = arith.constant dense<0.000000e+00> : vector<2x48xf32>
    %226 = tpu.matmul %225, %17, %cst_82 {dimension_numbers = #tpu.dot_dimension_numbers<[1], [0], [0], [1], [0, 0, 1, 1], [], []>} : vector<2x96xf32>, vector<96x48xf32>, vector<2x48xf32> -> vector<2x48xf32>
    %227 = arith.addf %226, %20 : vector<2x48xf32>
    %228 = vector.extract_strided_slice %227 {offsets = [0, 0], sizes = [2, 16], strides = [1, 1]} : vector<2x48xf32> to vector<2x16xf32>
    %229 = math.tanh %228 : vector<2x16xf32>
    %230 = vector.extract_strided_slice %227 {offsets = [0, 16], sizes = [2, 16], strides = [1, 1]} : vector<2x48xf32> to vector<2x16xf32>
    %cst_83 = arith.constant 5.000000e-01 : f32
    %231 = vector.broadcast %cst_83 : f32 to vector<2x16xf32>
    %232 = arith.mulf %231, %230 : vector<2x16xf32>
    %233 = math.tanh %232 : vector<2x16xf32>
    %cst_84 = arith.constant 1.000000e+00 : f32
    %234 = vector.broadcast %cst_84 : f32 to vector<2x16xf32>
    %235 = arith.addf %233, %234 : vector<2x16xf32>
    %cst_85 = arith.constant 5.000000e-01 : f32
    %236 = vector.broadcast %cst_85 : f32 to vector<2x16xf32>
    %237 = arith.mulf %236, %235 : vector<2x16xf32>
    %238 = vector.extract_strided_slice %227 {offsets = [0, 32], sizes = [2, 16], strides = [1, 1]} : vector<2x48xf32> to vector<2x16xf32>
    %cst_86 = arith.constant 5.000000e-01 : f32
    %239 = vector.broadcast %cst_86 : f32 to vector<2x16xf32>
    %240 = arith.mulf %239, %238 : vector<2x16xf32>
    %241 = math.tanh %240 : vector<2x16xf32>
    %cst_87 = arith.constant 1.000000e+00 : f32
    %242 = vector.broadcast %cst_87 : f32 to vector<2x16xf32>
    %243 = arith.addf %241, %242 : vector<2x16xf32>
    %cst_88 = arith.constant 5.000000e-01 : f32
    %244 = vector.broadcast %cst_88 : f32 to vector<2x16xf32>
    %245 = arith.mulf %244, %243 : vector<2x16xf32>
    %246 = arith.mulf %237, %173 : vector<2x16xf32>
    %247 = arith.mulf %245, %229 : vector<2x16xf32>
    %248 = arith.addf %246, %247 : vector<2x16xf32>
    %c3_i32 = arith.constant 3 : i32
    %249 = arith.index_cast %c3_i32 : i32 to index
    %c0_89 = arith.constant 0 : index
    %c0_90 = arith.constant 0 : index
    %250 = vector.load %arg0[%249, %c0_89, %c0_90] : memref<8x2x16xf32, #tpu.memory_space<vmem>>, vector<1x2x16xf32>
    %251 = vector.shape_cast %250 : vector<1x2x16xf32> to vector<2x16xf32>
    %cst_91 = arith.constant dense<0.000000e+00> : vector<2x128xf32>
    %252 = tpu.matmul %251, %0, %cst_91 {dimension_numbers = #tpu.dot_dimension_numbers<[1], [0], [0], [1], [0, 0, 1, 1], [], []>} : vector<2x16xf32>, vector<16x128xf32>, vector<2x128xf32> -> vector<2x128xf32>
    %cst_92 = arith.constant dense<0.000000e+00> : vector<2x128xf32>
    %253 = tpu.matmul %198, %1, %cst_92 {dimension_numbers = #tpu.dot_dimension_numbers<[1], [0], [0], [1], [0, 0, 1, 1], [], []>} : vector<2x32xf32>, vector<32x128xf32>, vector<2x128xf32> -> vector<2x128xf32>
    %254 = arith.addf %252, %253 : vector<2x128xf32>
    %255 = arith.addf %254, %4 : vector<2x128xf32>
    %256 = vector.extract_strided_slice %255 {offsets = [0, 0], sizes = [2, 96], strides = [1, 1]} : vector<2x128xf32> to vector<2x96xf32>
    %cst_93 = arith.constant 5.000000e-01 : f32
    %257 = vector.broadcast %cst_93 : f32 to vector<2x96xf32>
    %258 = arith.mulf %257, %256 : vector<2x96xf32>
    %259 = math.tanh %258 : vector<2x96xf32>
    %cst_94 = arith.constant 1.000000e+00 : f32
    %260 = vector.broadcast %cst_94 : f32 to vector<2x96xf32>
    %261 = arith.addf %259, %260 : vector<2x96xf32>
    %cst_95 = arith.constant 5.000000e-01 : f32
    %262 = vector.broadcast %cst_95 : f32 to vector<2x96xf32>
    %263 = arith.mulf %262, %261 : vector<2x96xf32>
    %264 = vector.extract_strided_slice %263 {offsets = [0, 0], sizes = [2, 32], strides = [1, 1]} : vector<2x96xf32> to vector<2x32xf32>
    %265 = vector.extract_strided_slice %263 {offsets = [0, 32], sizes = [2, 32], strides = [1, 1]} : vector<2x96xf32> to vector<2x32xf32>
    %266 = vector.extract_strided_slice %263 {offsets = [0, 64], sizes = [2, 32], strides = [1, 1]} : vector<2x96xf32> to vector<2x32xf32>
    %267 = vector.extract_strided_slice %255 {offsets = [0, 96], sizes = [2, 32], strides = [1, 1]} : vector<2x128xf32> to vector<2x32xf32>
    %268 = math.tanh %267 : vector<2x32xf32>
    %269 = arith.mulf %265, %196 : vector<2x32xf32>
    %270 = arith.mulf %264, %268 : vector<2x32xf32>
    %271 = arith.addf %269, %270 : vector<2x32xf32>
    %272 = math.tanh %271 : vector<2x32xf32>
    %273 = arith.mulf %266, %272 : vector<2x32xf32>
    %274 = tpu.concatenate %196, %271 in 1 : vector<2x32xf32>, vector<2x32xf32> -> vector<2x64xf32>
    %cst_96 = arith.constant dense<0.000000e+00> : vector<2x32xf32>
    %275 = tpu.matmul %274, %5, %cst_96 {dimension_numbers = #tpu.dot_dimension_numbers<[1], [0], [0], [1], [0, 0, 1, 1], [], []>} : vector<2x64xf32>, vector<64x32xf32>, vector<2x32xf32> -> vector<2x32xf32>
    %276 = arith.addf %275, %8 : vector<2x32xf32>
    %cst_97 = arith.constant 0.000000e+00 : f32
    %277 = vector.broadcast %cst_97 : f32 to vector<2x32xf32>
    %278 = arith.maximumf %276, %277 : vector<2x32xf32>
    %cst_98 = arith.constant dense<0.000000e+00> : vector<2x64xf32>
    %279 = tpu.matmul %278, %9, %cst_98 {dimension_numbers = #tpu.dot_dimension_numbers<[1], [0], [0], [1], [0, 0, 1, 1], [], []>} : vector<2x32xf32>, vector<32x64xf32>, vector<2x64xf32> -> vector<2x64xf32>
    %280 = arith.addf %279, %12 : vector<2x64xf32>
    %cst_99 = arith.constant dense<0xFF800000> : vector<2xf32>
    %281 = vector.multi_reduction <maximumf>, %280, %cst_99 [1] : vector<2x64xf32> to vector<2xf32>
    %282 = vector.shape_cast %281 : vector<2xf32> to vector<2x1xf32>
    %283 = vector.broadcast %282 : vector<2x1xf32> to vector<2x64xf32>
    %284 = arith.subf %280, %283 : vector<2x64xf32>
    %285 = math.exp %284 : vector<2x64xf32>
    %cst_100 = arith.constant dense<0.000000e+00> : vector<2xf32>
    %286 = vector.multi_reduction <add>, %285, %cst_100 [1] : vector<2x64xf32> to vector<2xf32>
    %287 = vector.shape_cast %286 : vector<2xf32> to vector<2x1xf32>
    %288 = tpu.reciprocal %287 {approx = true} : vector<2x1xf32> -> vector<2x1xf32>
    %289 = arith.mulf %287, %288 : vector<2x1xf32>
    %cst_101 = arith.constant 2.000000e+00 : f32
    %290 = vector.broadcast %cst_101 : f32 to vector<2x1xf32>
    %291 = arith.subf %290, %289 : vector<2x1xf32>
    %292 = arith.mulf %288, %291 : vector<2x1xf32>
    %293 = vector.broadcast %292 : vector<2x1xf32> to vector<2x64xf32>
    %294 = arith.mulf %285, %293 : vector<2x64xf32>
    %295 = arith.mulf %294, %274 : vector<2x64xf32>
    %296 = tpu.concatenate %295, %248 in 1 : vector<2x64xf32>, vector<2x16xf32> -> vector<2x80xf32>
    %cst_102 = arith.constant dense<0.000000e+00> : vector<2x96xf32>
    %297 = tpu.matmul %296, %13, %cst_102 {dimension_numbers = #tpu.dot_dimension_numbers<[1], [0], [0], [1], [0, 0, 1, 1], [], []>} : vector<2x80xf32>, vector<80x96xf32>, vector<2x96xf32> -> vector<2x96xf32>
    %298 = arith.addf %297, %16 : vector<2x96xf32>
    %cst_103 = arith.constant 0.000000e+00 : f32
    %299 = vector.broadcast %cst_103 : f32 to vector<2x96xf32>
    %300 = arith.maximumf %298, %299 : vector<2x96xf32>
    %cst_104 = arith.constant dense<0.000000e+00> : vector<2x48xf32>
    %301 = tpu.matmul %300, %17, %cst_104 {dimension_numbers = #tpu.dot_dimension_numbers<[1], [0], [0], [1], [0, 0, 1, 1], [], []>} : vector<2x96xf32>, vector<96x48xf32>, vector<2x48xf32> -> vector<2x48xf32>
    %302 = arith.addf %301, %20 : vector<2x48xf32>
    %303 = vector.extract_strided_slice %302 {offsets = [0, 0], sizes = [2, 16], strides = [1, 1]} : vector<2x48xf32> to vector<2x16xf32>
    %304 = math.tanh %303 : vector<2x16xf32>
    %305 = vector.extract_strided_slice %302 {offsets = [0, 16], sizes = [2, 16], strides = [1, 1]} : vector<2x48xf32> to vector<2x16xf32>
    %cst_105 = arith.constant 5.000000e-01 : f32
    %306 = vector.broadcast %cst_105 : f32 to vector<2x16xf32>
    %307 = arith.mulf %306, %305 : vector<2x16xf32>
    %308 = math.tanh %307 : vector<2x16xf32>
    %cst_106 = arith.constant 1.000000e+00 : f32
    %309 = vector.broadcast %cst_106 : f32 to vector<2x16xf32>
    %310 = arith.addf %308, %309 : vector<2x16xf32>
    %cst_107 = arith.constant 5.000000e-01 : f32
    %311 = vector.broadcast %cst_107 : f32 to vector<2x16xf32>
    %312 = arith.mulf %311, %310 : vector<2x16xf32>
    %313 = vector.extract_strided_slice %302 {offsets = [0, 32], sizes = [2, 16], strides = [1, 1]} : vector<2x48xf32> to vector<2x16xf32>
    %cst_108 = arith.constant 5.000000e-01 : f32
    %314 = vector.broadcast %cst_108 : f32 to vector<2x16xf32>
    %315 = arith.mulf %314, %313 : vector<2x16xf32>
    %316 = math.tanh %315 : vector<2x16xf32>
    %cst_109 = arith.constant 1.000000e+00 : f32
    %317 = vector.broadcast %cst_109 : f32 to vector<2x16xf32>
    %318 = arith.addf %316, %317 : vector<2x16xf32>
    %cst_110 = arith.constant 5.000000e-01 : f32
    %319 = vector.broadcast %cst_110 : f32 to vector<2x16xf32>
    %320 = arith.mulf %319, %318 : vector<2x16xf32>
    %321 = arith.mulf %312, %248 : vector<2x16xf32>
    %322 = arith.mulf %320, %304 : vector<2x16xf32>
    %323 = arith.addf %321, %322 : vector<2x16xf32>
    %c4_i32 = arith.constant 4 : i32
    %324 = arith.index_cast %c4_i32 : i32 to index
    %c0_111 = arith.constant 0 : index
    %c0_112 = arith.constant 0 : index
    %325 = vector.load %arg0[%324, %c0_111, %c0_112] : memref<8x2x16xf32, #tpu.memory_space<vmem>>, vector<1x2x16xf32>
    %326 = vector.shape_cast %325 : vector<1x2x16xf32> to vector<2x16xf32>
    %cst_113 = arith.constant dense<0.000000e+00> : vector<2x128xf32>
    %327 = tpu.matmul %326, %0, %cst_113 {dimension_numbers = #tpu.dot_dimension_numbers<[1], [0], [0], [1], [0, 0, 1, 1], [], []>} : vector<2x16xf32>, vector<16x128xf32>, vector<2x128xf32> -> vector<2x128xf32>
    %cst_114 = arith.constant dense<0.000000e+00> : vector<2x128xf32>
    %328 = tpu.matmul %273, %1, %cst_114 {dimension_numbers = #tpu.dot_dimension_numbers<[1], [0], [0], [1], [0, 0, 1, 1], [], []>} : vector<2x32xf32>, vector<32x128xf32>, vector<2x128xf32> -> vector<2x128xf32>
    %329 = arith.addf %327, %328 : vector<2x128xf32>
    %330 = arith.addf %329, %4 : vector<2x128xf32>
    %331 = vector.extract_strided_slice %330 {offsets = [0, 0], sizes = [2, 96], strides = [1, 1]} : vector<2x128xf32> to vector<2x96xf32>
    %cst_115 = arith.constant 5.000000e-01 : f32
    %332 = vector.broadcast %cst_115 : f32 to vector<2x96xf32>
    %333 = arith.mulf %332, %331 : vector<2x96xf32>
    %334 = math.tanh %333 : vector<2x96xf32>
    %cst_116 = arith.constant 1.000000e+00 : f32
    %335 = vector.broadcast %cst_116 : f32 to vector<2x96xf32>
    %336 = arith.addf %334, %335 : vector<2x96xf32>
    %cst_117 = arith.constant 5.000000e-01 : f32
    %337 = vector.broadcast %cst_117 : f32 to vector<2x96xf32>
    %338 = arith.mulf %337, %336 : vector<2x96xf32>
    %339 = vector.extract_strided_slice %338 {offsets = [0, 0], sizes = [2, 32], strides = [1, 1]} : vector<2x96xf32> to vector<2x32xf32>
    %340 = vector.extract_strided_slice %338 {offsets = [0, 32], sizes = [2, 32], strides = [1, 1]} : vector<2x96xf32> to vector<2x32xf32>
    %341 = vector.extract_strided_slice %338 {offsets = [0, 64], sizes = [2, 32], strides = [1, 1]} : vector<2x96xf32> to vector<2x32xf32>
    %342 = vector.extract_strided_slice %330 {offsets = [0, 96], sizes = [2, 32], strides = [1, 1]} : vector<2x128xf32> to vector<2x32xf32>
    %343 = math.tanh %342 : vector<2x32xf32>
    %344 = arith.mulf %340, %271 : vector<2x32xf32>
    %345 = arith.mulf %339, %343 : vector<2x32xf32>
    %346 = arith.addf %344, %345 : vector<2x32xf32>
    %347 = math.tanh %346 : vector<2x32xf32>
    %348 = arith.mulf %341, %347 : vector<2x32xf32>
    %349 = tpu.concatenate %271, %346 in 1 : vector<2x32xf32>, vector<2x32xf32> -> vector<2x64xf32>
    %cst_118 = arith.constant dense<0.000000e+00> : vector<2x32xf32>
    %350 = tpu.matmul %349, %5, %cst_118 {dimension_numbers = #tpu.dot_dimension_numbers<[1], [0], [0], [1], [0, 0, 1, 1], [], []>} : vector<2x64xf32>, vector<64x32xf32>, vector<2x32xf32> -> vector<2x32xf32>
    %351 = arith.addf %350, %8 : vector<2x32xf32>
    %cst_119 = arith.constant 0.000000e+00 : f32
    %352 = vector.broadcast %cst_119 : f32 to vector<2x32xf32>
    %353 = arith.maximumf %351, %352 : vector<2x32xf32>
    %cst_120 = arith.constant dense<0.000000e+00> : vector<2x64xf32>
    %354 = tpu.matmul %353, %9, %cst_120 {dimension_numbers = #tpu.dot_dimension_numbers<[1], [0], [0], [1], [0, 0, 1, 1], [], []>} : vector<2x32xf32>, vector<32x64xf32>, vector<2x64xf32> -> vector<2x64xf32>
    %355 = arith.addf %354, %12 : vector<2x64xf32>
    %cst_121 = arith.constant dense<0xFF800000> : vector<2xf32>
    %356 = vector.multi_reduction <maximumf>, %355, %cst_121 [1] : vector<2x64xf32> to vector<2xf32>
    %357 = vector.shape_cast %356 : vector<2xf32> to vector<2x1xf32>
    %358 = vector.broadcast %357 : vector<2x1xf32> to vector<2x64xf32>
    %359 = arith.subf %355, %358 : vector<2x64xf32>
    %360 = math.exp %359 : vector<2x64xf32>
    %cst_122 = arith.constant dense<0.000000e+00> : vector<2xf32>
    %361 = vector.multi_reduction <add>, %360, %cst_122 [1] : vector<2x64xf32> to vector<2xf32>
    %362 = vector.shape_cast %361 : vector<2xf32> to vector<2x1xf32>
    %363 = tpu.reciprocal %362 {approx = true} : vector<2x1xf32> -> vector<2x1xf32>
    %364 = arith.mulf %362, %363 : vector<2x1xf32>
    %cst_123 = arith.constant 2.000000e+00 : f32
    %365 = vector.broadcast %cst_123 : f32 to vector<2x1xf32>
    %366 = arith.subf %365, %364 : vector<2x1xf32>
    %367 = arith.mulf %363, %366 : vector<2x1xf32>
    %368 = vector.broadcast %367 : vector<2x1xf32> to vector<2x64xf32>
    %369 = arith.mulf %360, %368 : vector<2x64xf32>
    %370 = arith.mulf %369, %349 : vector<2x64xf32>
    %371 = tpu.concatenate %370, %323 in 1 : vector<2x64xf32>, vector<2x16xf32> -> vector<2x80xf32>
    %cst_124 = arith.constant dense<0.000000e+00> : vector<2x96xf32>
    %372 = tpu.matmul %371, %13, %cst_124 {dimension_numbers = #tpu.dot_dimension_numbers<[1], [0], [0], [1], [0, 0, 1, 1], [], []>} : vector<2x80xf32>, vector<80x96xf32>, vector<2x96xf32> -> vector<2x96xf32>
    %373 = arith.addf %372, %16 : vector<2x96xf32>
    %cst_125 = arith.constant 0.000000e+00 : f32
    %374 = vector.broadcast %cst_125 : f32 to vector<2x96xf32>
    %375 = arith.maximumf %373, %374 : vector<2x96xf32>
    %cst_126 = arith.constant dense<0.000000e+00> : vector<2x48xf32>
    %376 = tpu.matmul %375, %17, %cst_126 {dimension_numbers = #tpu.dot_dimension_numbers<[1], [0], [0], [1], [0, 0, 1, 1], [], []>} : vector<2x96xf32>, vector<96x48xf32>, vector<2x48xf32> -> vector<2x48xf32>
    %377 = arith.addf %376, %20 : vector<2x48xf32>
    %378 = vector.extract_strided_slice %377 {offsets = [0, 0], sizes = [2, 16], strides = [1, 1]} : vector<2x48xf32> to vector<2x16xf32>
    %379 = math.tanh %378 : vector<2x16xf32>
    %380 = vector.extract_strided_slice %377 {offsets = [0, 16], sizes = [2, 16], strides = [1, 1]} : vector<2x48xf32> to vector<2x16xf32>
    %cst_127 = arith.constant 5.000000e-01 : f32
    %381 = vector.broadcast %cst_127 : f32 to vector<2x16xf32>
    %382 = arith.mulf %381, %380 : vector<2x16xf32>
    %383 = math.tanh %382 : vector<2x16xf32>
    %cst_128 = arith.constant 1.000000e+00 : f32
    %384 = vector.broadcast %cst_128 : f32 to vector<2x16xf32>
    %385 = arith.addf %383, %384 : vector<2x16xf32>
    %cst_129 = arith.constant 5.000000e-01 : f32
    %386 = vector.broadcast %cst_129 : f32 to vector<2x16xf32>
    %387 = arith.mulf %386, %385 : vector<2x16xf32>
    %388 = vector.extract_strided_slice %377 {offsets = [0, 32], sizes = [2, 16], strides = [1, 1]} : vector<2x48xf32> to vector<2x16xf32>
    %cst_130 = arith.constant 5.000000e-01 : f32
    %389 = vector.broadcast %cst_130 : f32 to vector<2x16xf32>
    %390 = arith.mulf %389, %388 : vector<2x16xf32>
    %391 = math.tanh %390 : vector<2x16xf32>
    %cst_131 = arith.constant 1.000000e+00 : f32
    %392 = vector.broadcast %cst_131 : f32 to vector<2x16xf32>
    %393 = arith.addf %391, %392 : vector<2x16xf32>
    %cst_132 = arith.constant 5.000000e-01 : f32
    %394 = vector.broadcast %cst_132 : f32 to vector<2x16xf32>
    %395 = arith.mulf %394, %393 : vector<2x16xf32>
    %396 = arith.mulf %387, %323 : vector<2x16xf32>
    %397 = arith.mulf %395, %379 : vector<2x16xf32>
    %398 = arith.addf %396, %397 : vector<2x16xf32>
    %c5_i32 = arith.constant 5 : i32
    %399 = arith.index_cast %c5_i32 : i32 to index
    %c0_133 = arith.constant 0 : index
    %c0_134 = arith.constant 0 : index
    %400 = vector.load %arg0[%399, %c0_133, %c0_134] : memref<8x2x16xf32, #tpu.memory_space<vmem>>, vector<1x2x16xf32>
    %401 = vector.shape_cast %400 : vector<1x2x16xf32> to vector<2x16xf32>
    %cst_135 = arith.constant dense<0.000000e+00> : vector<2x128xf32>
    %402 = tpu.matmul %401, %0, %cst_135 {dimension_numbers = #tpu.dot_dimension_numbers<[1], [0], [0], [1], [0, 0, 1, 1], [], []>} : vector<2x16xf32>, vector<16x128xf32>, vector<2x128xf32> -> vector<2x128xf32>
    %cst_136 = arith.constant dense<0.000000e+00> : vector<2x128xf32>
    %403 = tpu.matmul %348, %1, %cst_136 {dimension_numbers = #tpu.dot_dimension_numbers<[1], [0], [0], [1], [0, 0, 1, 1], [], []>} : vector<2x32xf32>, vector<32x128xf32>, vector<2x128xf32> -> vector<2x128xf32>
    %404 = arith.addf %402, %403 : vector<2x128xf32>
    %405 = arith.addf %404, %4 : vector<2x128xf32>
    %406 = vector.extract_strided_slice %405 {offsets = [0, 0], sizes = [2, 96], strides = [1, 1]} : vector<2x128xf32> to vector<2x96xf32>
    %cst_137 = arith.constant 5.000000e-01 : f32
    %407 = vector.broadcast %cst_137 : f32 to vector<2x96xf32>
    %408 = arith.mulf %407, %406 : vector<2x96xf32>
    %409 = math.tanh %408 : vector<2x96xf32>
    %cst_138 = arith.constant 1.000000e+00 : f32
    %410 = vector.broadcast %cst_138 : f32 to vector<2x96xf32>
    %411 = arith.addf %409, %410 : vector<2x96xf32>
    %cst_139 = arith.constant 5.000000e-01 : f32
    %412 = vector.broadcast %cst_139 : f32 to vector<2x96xf32>
    %413 = arith.mulf %412, %411 : vector<2x96xf32>
    %414 = vector.extract_strided_slice %413 {offsets = [0, 0], sizes = [2, 32], strides = [1, 1]} : vector<2x96xf32> to vector<2x32xf32>
    %415 = vector.extract_strided_slice %413 {offsets = [0, 32], sizes = [2, 32], strides = [1, 1]} : vector<2x96xf32> to vector<2x32xf32>
    %416 = vector.extract_strided_slice %413 {offsets = [0, 64], sizes = [2, 32], strides = [1, 1]} : vector<2x96xf32> to vector<2x32xf32>
    %417 = vector.extract_strided_slice %405 {offsets = [0, 96], sizes = [2, 32], strides = [1, 1]} : vector<2x128xf32> to vector<2x32xf32>
    %418 = math.tanh %417 : vector<2x32xf32>
    %419 = arith.mulf %415, %346 : vector<2x32xf32>
    %420 = arith.mulf %414, %418 : vector<2x32xf32>
    %421 = arith.addf %419, %420 : vector<2x32xf32>
    %422 = math.tanh %421 : vector<2x32xf32>
    %423 = arith.mulf %416, %422 : vector<2x32xf32>
    %424 = tpu.concatenate %346, %421 in 1 : vector<2x32xf32>, vector<2x32xf32> -> vector<2x64xf32>
    %cst_140 = arith.constant dense<0.000000e+00> : vector<2x32xf32>
    %425 = tpu.matmul %424, %5, %cst_140 {dimension_numbers = #tpu.dot_dimension_numbers<[1], [0], [0], [1], [0, 0, 1, 1], [], []>} : vector<2x64xf32>, vector<64x32xf32>, vector<2x32xf32> -> vector<2x32xf32>
    %426 = arith.addf %425, %8 : vector<2x32xf32>
    %cst_141 = arith.constant 0.000000e+00 : f32
    %427 = vector.broadcast %cst_141 : f32 to vector<2x32xf32>
    %428 = arith.maximumf %426, %427 : vector<2x32xf32>
    %cst_142 = arith.constant dense<0.000000e+00> : vector<2x64xf32>
    %429 = tpu.matmul %428, %9, %cst_142 {dimension_numbers = #tpu.dot_dimension_numbers<[1], [0], [0], [1], [0, 0, 1, 1], [], []>} : vector<2x32xf32>, vector<32x64xf32>, vector<2x64xf32> -> vector<2x64xf32>
    %430 = arith.addf %429, %12 : vector<2x64xf32>
    %cst_143 = arith.constant dense<0xFF800000> : vector<2xf32>
    %431 = vector.multi_reduction <maximumf>, %430, %cst_143 [1] : vector<2x64xf32> to vector<2xf32>
    %432 = vector.shape_cast %431 : vector<2xf32> to vector<2x1xf32>
    %433 = vector.broadcast %432 : vector<2x1xf32> to vector<2x64xf32>
    %434 = arith.subf %430, %433 : vector<2x64xf32>
    %435 = math.exp %434 : vector<2x64xf32>
    %cst_144 = arith.constant dense<0.000000e+00> : vector<2xf32>
    %436 = vector.multi_reduction <add>, %435, %cst_144 [1] : vector<2x64xf32> to vector<2xf32>
    %437 = vector.shape_cast %436 : vector<2xf32> to vector<2x1xf32>
    %438 = tpu.reciprocal %437 {approx = true} : vector<2x1xf32> -> vector<2x1xf32>
    %439 = arith.mulf %437, %438 : vector<2x1xf32>
    %cst_145 = arith.constant 2.000000e+00 : f32
    %440 = vector.broadcast %cst_145 : f32 to vector<2x1xf32>
    %441 = arith.subf %440, %439 : vector<2x1xf32>
    %442 = arith.mulf %438, %441 : vector<2x1xf32>
    %443 = vector.broadcast %442 : vector<2x1xf32> to vector<2x64xf32>
    %444 = arith.mulf %435, %443 : vector<2x64xf32>
    %445 = arith.mulf %444, %424 : vector<2x64xf32>
    %446 = tpu.concatenate %445, %398 in 1 : vector<2x64xf32>, vector<2x16xf32> -> vector<2x80xf32>
    %cst_146 = arith.constant dense<0.000000e+00> : vector<2x96xf32>
    %447 = tpu.matmul %446, %13, %cst_146 {dimension_numbers = #tpu.dot_dimension_numbers<[1], [0], [0], [1], [0, 0, 1, 1], [], []>} : vector<2x80xf32>, vector<80x96xf32>, vector<2x96xf32> -> vector<2x96xf32>
    %448 = arith.addf %447, %16 : vector<2x96xf32>
    %cst_147 = arith.constant 0.000000e+00 : f32
    %449 = vector.broadcast %cst_147 : f32 to vector<2x96xf32>
    %450 = arith.maximumf %448, %449 : vector<2x96xf32>
    %cst_148 = arith.constant dense<0.000000e+00> : vector<2x48xf32>
    %451 = tpu.matmul %450, %17, %cst_148 {dimension_numbers = #tpu.dot_dimension_numbers<[1], [0], [0], [1], [0, 0, 1, 1], [], []>} : vector<2x96xf32>, vector<96x48xf32>, vector<2x48xf32> -> vector<2x48xf32>
    %452 = arith.addf %451, %20 : vector<2x48xf32>
    %453 = vector.extract_strided_slice %452 {offsets = [0, 0], sizes = [2, 16], strides = [1, 1]} : vector<2x48xf32> to vector<2x16xf32>
    %454 = math.tanh %453 : vector<2x16xf32>
    %455 = vector.extract_strided_slice %452 {offsets = [0, 16], sizes = [2, 16], strides = [1, 1]} : vector<2x48xf32> to vector<2x16xf32>
    %cst_149 = arith.constant 5.000000e-01 : f32
    %456 = vector.broadcast %cst_149 : f32 to vector<2x16xf32>
    %457 = arith.mulf %456, %455 : vector<2x16xf32>
    %458 = math.tanh %457 : vector<2x16xf32>
    %cst_150 = arith.constant 1.000000e+00 : f32
    %459 = vector.broadcast %cst_150 : f32 to vector<2x16xf32>
    %460 = arith.addf %458, %459 : vector<2x16xf32>
    %cst_151 = arith.constant 5.000000e-01 : f32
    %461 = vector.broadcast %cst_151 : f32 to vector<2x16xf32>
    %462 = arith.mulf %461, %460 : vector<2x16xf32>
    %463 = vector.extract_strided_slice %452 {offsets = [0, 32], sizes = [2, 16], strides = [1, 1]} : vector<2x48xf32> to vector<2x16xf32>
    %cst_152 = arith.constant 5.000000e-01 : f32
    %464 = vector.broadcast %cst_152 : f32 to vector<2x16xf32>
    %465 = arith.mulf %464, %463 : vector<2x16xf32>
    %466 = math.tanh %465 : vector<2x16xf32>
    %cst_153 = arith.constant 1.000000e+00 : f32
    %467 = vector.broadcast %cst_153 : f32 to vector<2x16xf32>
    %468 = arith.addf %466, %467 : vector<2x16xf32>
    %cst_154 = arith.constant 5.000000e-01 : f32
    %469 = vector.broadcast %cst_154 : f32 to vector<2x16xf32>
    %470 = arith.mulf %469, %468 : vector<2x16xf32>
    %471 = arith.mulf %462, %398 : vector<2x16xf32>
    %472 = arith.mulf %470, %454 : vector<2x16xf32>
    %473 = arith.addf %471, %472 : vector<2x16xf32>
    %c6_i32 = arith.constant 6 : i32
    %474 = arith.index_cast %c6_i32 : i32 to index
    %c0_155 = arith.constant 0 : index
    %c0_156 = arith.constant 0 : index
    %475 = vector.load %arg0[%474, %c0_155, %c0_156] : memref<8x2x16xf32, #tpu.memory_space<vmem>>, vector<1x2x16xf32>
    %476 = vector.shape_cast %475 : vector<1x2x16xf32> to vector<2x16xf32>
    %cst_157 = arith.constant dense<0.000000e+00> : vector<2x128xf32>
    %477 = tpu.matmul %476, %0, %cst_157 {dimension_numbers = #tpu.dot_dimension_numbers<[1], [0], [0], [1], [0, 0, 1, 1], [], []>} : vector<2x16xf32>, vector<16x128xf32>, vector<2x128xf32> -> vector<2x128xf32>
    %cst_158 = arith.constant dense<0.000000e+00> : vector<2x128xf32>
    %478 = tpu.matmul %423, %1, %cst_158 {dimension_numbers = #tpu.dot_dimension_numbers<[1], [0], [0], [1], [0, 0, 1, 1], [], []>} : vector<2x32xf32>, vector<32x128xf32>, vector<2x128xf32> -> vector<2x128xf32>
    %479 = arith.addf %477, %478 : vector<2x128xf32>
    %480 = arith.addf %479, %4 : vector<2x128xf32>
    %481 = vector.extract_strided_slice %480 {offsets = [0, 0], sizes = [2, 96], strides = [1, 1]} : vector<2x128xf32> to vector<2x96xf32>
    %cst_159 = arith.constant 5.000000e-01 : f32
    %482 = vector.broadcast %cst_159 : f32 to vector<2x96xf32>
    %483 = arith.mulf %482, %481 : vector<2x96xf32>
    %484 = math.tanh %483 : vector<2x96xf32>
    %cst_160 = arith.constant 1.000000e+00 : f32
    %485 = vector.broadcast %cst_160 : f32 to vector<2x96xf32>
    %486 = arith.addf %484, %485 : vector<2x96xf32>
    %cst_161 = arith.constant 5.000000e-01 : f32
    %487 = vector.broadcast %cst_161 : f32 to vector<2x96xf32>
    %488 = arith.mulf %487, %486 : vector<2x96xf32>
    %489 = vector.extract_strided_slice %488 {offsets = [0, 0], sizes = [2, 32], strides = [1, 1]} : vector<2x96xf32> to vector<2x32xf32>
    %490 = vector.extract_strided_slice %488 {offsets = [0, 32], sizes = [2, 32], strides = [1, 1]} : vector<2x96xf32> to vector<2x32xf32>
    %491 = vector.extract_strided_slice %488 {offsets = [0, 64], sizes = [2, 32], strides = [1, 1]} : vector<2x96xf32> to vector<2x32xf32>
    %492 = vector.extract_strided_slice %480 {offsets = [0, 96], sizes = [2, 32], strides = [1, 1]} : vector<2x128xf32> to vector<2x32xf32>
    %493 = math.tanh %492 : vector<2x32xf32>
    %494 = arith.mulf %490, %421 : vector<2x32xf32>
    %495 = arith.mulf %489, %493 : vector<2x32xf32>
    %496 = arith.addf %494, %495 : vector<2x32xf32>
    %497 = math.tanh %496 : vector<2x32xf32>
    %498 = arith.mulf %491, %497 : vector<2x32xf32>
    %499 = tpu.concatenate %421, %496 in 1 : vector<2x32xf32>, vector<2x32xf32> -> vector<2x64xf32>
    %cst_162 = arith.constant dense<0.000000e+00> : vector<2x32xf32>
    %500 = tpu.matmul %499, %5, %cst_162 {dimension_numbers = #tpu.dot_dimension_numbers<[1], [0], [0], [1], [0, 0, 1, 1], [], []>} : vector<2x64xf32>, vector<64x32xf32>, vector<2x32xf32> -> vector<2x32xf32>
    %501 = arith.addf %500, %8 : vector<2x32xf32>
    %cst_163 = arith.constant 0.000000e+00 : f32
    %502 = vector.broadcast %cst_163 : f32 to vector<2x32xf32>
    %503 = arith.maximumf %501, %502 : vector<2x32xf32>
    %cst_164 = arith.constant dense<0.000000e+00> : vector<2x64xf32>
    %504 = tpu.matmul %503, %9, %cst_164 {dimension_numbers = #tpu.dot_dimension_numbers<[1], [0], [0], [1], [0, 0, 1, 1], [], []>} : vector<2x32xf32>, vector<32x64xf32>, vector<2x64xf32> -> vector<2x64xf32>
    %505 = arith.addf %504, %12 : vector<2x64xf32>
    %cst_165 = arith.constant dense<0xFF800000> : vector<2xf32>
    %506 = vector.multi_reduction <maximumf>, %505, %cst_165 [1] : vector<2x64xf32> to vector<2xf32>
    %507 = vector.shape_cast %506 : vector<2xf32> to vector<2x1xf32>
    %508 = vector.broadcast %507 : vector<2x1xf32> to vector<2x64xf32>
    %509 = arith.subf %505, %508 : vector<2x64xf32>
    %510 = math.exp %509 : vector<2x64xf32>
    %cst_166 = arith.constant dense<0.000000e+00> : vector<2xf32>
    %511 = vector.multi_reduction <add>, %510, %cst_166 [1] : vector<2x64xf32> to vector<2xf32>
    %512 = vector.shape_cast %511 : vector<2xf32> to vector<2x1xf32>
    %513 = tpu.reciprocal %512 {approx = true} : vector<2x1xf32> -> vector<2x1xf32>
    %514 = arith.mulf %512, %513 : vector<2x1xf32>
    %cst_167 = arith.constant 2.000000e+00 : f32
    %515 = vector.broadcast %cst_167 : f32 to vector<2x1xf32>
    %516 = arith.subf %515, %514 : vector<2x1xf32>
    %517 = arith.mulf %513, %516 : vector<2x1xf32>
    %518 = vector.broadcast %517 : vector<2x1xf32> to vector<2x64xf32>
    %519 = arith.mulf %510, %518 : vector<2x64xf32>
    %520 = arith.mulf %519, %499 : vector<2x64xf32>
    %521 = tpu.concatenate %520, %473 in 1 : vector<2x64xf32>, vector<2x16xf32> -> vector<2x80xf32>
    %cst_168 = arith.constant dense<0.000000e+00> : vector<2x96xf32>
    %522 = tpu.matmul %521, %13, %cst_168 {dimension_numbers = #tpu.dot_dimension_numbers<[1], [0], [0], [1], [0, 0, 1, 1], [], []>} : vector<2x80xf32>, vector<80x96xf32>, vector<2x96xf32> -> vector<2x96xf32>
    %523 = arith.addf %522, %16 : vector<2x96xf32>
    %cst_169 = arith.constant 0.000000e+00 : f32
    %524 = vector.broadcast %cst_169 : f32 to vector<2x96xf32>
    %525 = arith.maximumf %523, %524 : vector<2x96xf32>
    %cst_170 = arith.constant dense<0.000000e+00> : vector<2x48xf32>
    %526 = tpu.matmul %525, %17, %cst_170 {dimension_numbers = #tpu.dot_dimension_numbers<[1], [0], [0], [1], [0, 0, 1, 1], [], []>} : vector<2x96xf32>, vector<96x48xf32>, vector<2x48xf32> -> vector<2x48xf32>
    %527 = arith.addf %526, %20 : vector<2x48xf32>
    %528 = vector.extract_strided_slice %527 {offsets = [0, 0], sizes = [2, 16], strides = [1, 1]} : vector<2x48xf32> to vector<2x16xf32>
    %529 = math.tanh %528 : vector<2x16xf32>
    %530 = vector.extract_strided_slice %527 {offsets = [0, 16], sizes = [2, 16], strides = [1, 1]} : vector<2x48xf32> to vector<2x16xf32>
    %cst_171 = arith.constant 5.000000e-01 : f32
    %531 = vector.broadcast %cst_171 : f32 to vector<2x16xf32>
    %532 = arith.mulf %531, %530 : vector<2x16xf32>
    %533 = math.tanh %532 : vector<2x16xf32>
    %cst_172 = arith.constant 1.000000e+00 : f32
    %534 = vector.broadcast %cst_172 : f32 to vector<2x16xf32>
    %535 = arith.addf %533, %534 : vector<2x16xf32>
    %cst_173 = arith.constant 5.000000e-01 : f32
    %536 = vector.broadcast %cst_173 : f32 to vector<2x16xf32>
    %537 = arith.mulf %536, %535 : vector<2x16xf32>
    %538 = vector.extract_strided_slice %527 {offsets = [0, 32], sizes = [2, 16], strides = [1, 1]} : vector<2x48xf32> to vector<2x16xf32>
    %cst_174 = arith.constant 5.000000e-01 : f32
    %539 = vector.broadcast %cst_174 : f32 to vector<2x16xf32>
    %540 = arith.mulf %539, %538 : vector<2x16xf32>
    %541 = math.tanh %540 : vector<2x16xf32>
    %cst_175 = arith.constant 1.000000e+00 : f32
    %542 = vector.broadcast %cst_175 : f32 to vector<2x16xf32>
    %543 = arith.addf %541, %542 : vector<2x16xf32>
    %cst_176 = arith.constant 5.000000e-01 : f32
    %544 = vector.broadcast %cst_176 : f32 to vector<2x16xf32>
    %545 = arith.mulf %544, %543 : vector<2x16xf32>
    %546 = arith.mulf %537, %473 : vector<2x16xf32>
    %547 = arith.mulf %545, %529 : vector<2x16xf32>
    %548 = arith.addf %546, %547 : vector<2x16xf32>
    %c7_i32 = arith.constant 7 : i32
    %549 = arith.index_cast %c7_i32 : i32 to index
    %c0_177 = arith.constant 0 : index
    %c0_178 = arith.constant 0 : index
    %550 = vector.load %arg0[%549, %c0_177, %c0_178] : memref<8x2x16xf32, #tpu.memory_space<vmem>>, vector<1x2x16xf32>
    %551 = vector.shape_cast %550 : vector<1x2x16xf32> to vector<2x16xf32>
    %cst_179 = arith.constant dense<0.000000e+00> : vector<2x128xf32>
    %552 = tpu.matmul %551, %0, %cst_179 {dimension_numbers = #tpu.dot_dimension_numbers<[1], [0], [0], [1], [0, 0, 1, 1], [], []>} : vector<2x16xf32>, vector<16x128xf32>, vector<2x128xf32> -> vector<2x128xf32>
    %cst_180 = arith.constant dense<0.000000e+00> : vector<2x128xf32>
    %553 = tpu.matmul %498, %1, %cst_180 {dimension_numbers = #tpu.dot_dimension_numbers<[1], [0], [0], [1], [0, 0, 1, 1], [], []>} : vector<2x32xf32>, vector<32x128xf32>, vector<2x128xf32> -> vector<2x128xf32>
    %554 = arith.addf %552, %553 : vector<2x128xf32>
    %555 = arith.addf %554, %4 : vector<2x128xf32>
    %556 = vector.extract_strided_slice %555 {offsets = [0, 0], sizes = [2, 96], strides = [1, 1]} : vector<2x128xf32> to vector<2x96xf32>
    %cst_181 = arith.constant 5.000000e-01 : f32
    %557 = vector.broadcast %cst_181 : f32 to vector<2x96xf32>
    %558 = arith.mulf %557, %556 : vector<2x96xf32>
    %559 = math.tanh %558 : vector<2x96xf32>
    %cst_182 = arith.constant 1.000000e+00 : f32
    %560 = vector.broadcast %cst_182 : f32 to vector<2x96xf32>
    %561 = arith.addf %559, %560 : vector<2x96xf32>
    %cst_183 = arith.constant 5.000000e-01 : f32
    %562 = vector.broadcast %cst_183 : f32 to vector<2x96xf32>
    %563 = arith.mulf %562, %561 : vector<2x96xf32>
    %564 = vector.extract_strided_slice %563 {offsets = [0, 0], sizes = [2, 32], strides = [1, 1]} : vector<2x96xf32> to vector<2x32xf32>
    %565 = vector.extract_strided_slice %563 {offsets = [0, 32], sizes = [2, 32], strides = [1, 1]} : vector<2x96xf32> to vector<2x32xf32>
    %566 = vector.extract_strided_slice %563 {offsets = [0, 64], sizes = [2, 32], strides = [1, 1]} : vector<2x96xf32> to vector<2x32xf32>
    %567 = vector.extract_strided_slice %555 {offsets = [0, 96], sizes = [2, 32], strides = [1, 1]} : vector<2x128xf32> to vector<2x32xf32>
    %568 = math.tanh %567 : vector<2x32xf32>
    %569 = arith.mulf %565, %496 : vector<2x32xf32>
    %570 = arith.mulf %564, %568 : vector<2x32xf32>
    %571 = arith.addf %569, %570 : vector<2x32xf32>
    %572 = math.tanh %571 : vector<2x32xf32>
    %573 = arith.mulf %566, %572 : vector<2x32xf32>
    %574 = tpu.concatenate %496, %571 in 1 : vector<2x32xf32>, vector<2x32xf32> -> vector<2x64xf32>
    %cst_184 = arith.constant dense<0.000000e+00> : vector<2x32xf32>
    %575 = tpu.matmul %574, %5, %cst_184 {dimension_numbers = #tpu.dot_dimension_numbers<[1], [0], [0], [1], [0, 0, 1, 1], [], []>} : vector<2x64xf32>, vector<64x32xf32>, vector<2x32xf32> -> vector<2x32xf32>
    %576 = arith.addf %575, %8 : vector<2x32xf32>
    %cst_185 = arith.constant 0.000000e+00 : f32
    %577 = vector.broadcast %cst_185 : f32 to vector<2x32xf32>
    %578 = arith.maximumf %576, %577 : vector<2x32xf32>
    %cst_186 = arith.constant dense<0.000000e+00> : vector<2x64xf32>
    %579 = tpu.matmul %578, %9, %cst_186 {dimension_numbers = #tpu.dot_dimension_numbers<[1], [0], [0], [1], [0, 0, 1, 1], [], []>} : vector<2x32xf32>, vector<32x64xf32>, vector<2x64xf32> -> vector<2x64xf32>
    %580 = arith.addf %579, %12 : vector<2x64xf32>
    %cst_187 = arith.constant dense<0xFF800000> : vector<2xf32>
    %581 = vector.multi_reduction <maximumf>, %580, %cst_187 [1] : vector<2x64xf32> to vector<2xf32>
    %582 = vector.shape_cast %581 : vector<2xf32> to vector<2x1xf32>
    %583 = vector.broadcast %582 : vector<2x1xf32> to vector<2x64xf32>
    %584 = arith.subf %580, %583 : vector<2x64xf32>
    %585 = math.exp %584 : vector<2x64xf32>
    %cst_188 = arith.constant dense<0.000000e+00> : vector<2xf32>
    %586 = vector.multi_reduction <add>, %585, %cst_188 [1] : vector<2x64xf32> to vector<2xf32>
    %587 = vector.shape_cast %586 : vector<2xf32> to vector<2x1xf32>
    %588 = tpu.reciprocal %587 {approx = true} : vector<2x1xf32> -> vector<2x1xf32>
    %589 = arith.mulf %587, %588 : vector<2x1xf32>
    %cst_189 = arith.constant 2.000000e+00 : f32
    %590 = vector.broadcast %cst_189 : f32 to vector<2x1xf32>
    %591 = arith.subf %590, %589 : vector<2x1xf32>
    %592 = arith.mulf %588, %591 : vector<2x1xf32>
    %593 = vector.broadcast %592 : vector<2x1xf32> to vector<2x64xf32>
    %594 = arith.mulf %585, %593 : vector<2x64xf32>
    %595 = arith.mulf %594, %574 : vector<2x64xf32>
    %596 = tpu.concatenate %595, %548 in 1 : vector<2x64xf32>, vector<2x16xf32> -> vector<2x80xf32>
    %cst_190 = arith.constant dense<0.000000e+00> : vector<2x96xf32>
    %597 = tpu.matmul %596, %13, %cst_190 {dimension_numbers = #tpu.dot_dimension_numbers<[1], [0], [0], [1], [0, 0, 1, 1], [], []>} : vector<2x80xf32>, vector<80x96xf32>, vector<2x96xf32> -> vector<2x96xf32>
    %598 = arith.addf %597, %16 : vector<2x96xf32>
    %cst_191 = arith.constant 0.000000e+00 : f32
    %599 = vector.broadcast %cst_191 : f32 to vector<2x96xf32>
    %600 = arith.maximumf %598, %599 : vector<2x96xf32>
    %cst_192 = arith.constant dense<0.000000e+00> : vector<2x48xf32>
    %601 = tpu.matmul %600, %17, %cst_192 {dimension_numbers = #tpu.dot_dimension_numbers<[1], [0], [0], [1], [0, 0, 1, 1], [], []>} : vector<2x96xf32>, vector<96x48xf32>, vector<2x48xf32> -> vector<2x48xf32>
    %602 = arith.addf %601, %20 : vector<2x48xf32>
    %603 = vector.extract_strided_slice %602 {offsets = [0, 0], sizes = [2, 16], strides = [1, 1]} : vector<2x48xf32> to vector<2x16xf32>
    %604 = math.tanh %603 : vector<2x16xf32>
    %605 = vector.extract_strided_slice %602 {offsets = [0, 16], sizes = [2, 16], strides = [1, 1]} : vector<2x48xf32> to vector<2x16xf32>
    %cst_193 = arith.constant 5.000000e-01 : f32
    %606 = vector.broadcast %cst_193 : f32 to vector<2x16xf32>
    %607 = arith.mulf %606, %605 : vector<2x16xf32>
    %608 = math.tanh %607 : vector<2x16xf32>
    %cst_194 = arith.constant 1.000000e+00 : f32
    %609 = vector.broadcast %cst_194 : f32 to vector<2x16xf32>
    %610 = arith.addf %608, %609 : vector<2x16xf32>
    %cst_195 = arith.constant 5.000000e-01 : f32
    %611 = vector.broadcast %cst_195 : f32 to vector<2x16xf32>
    %612 = arith.mulf %611, %610 : vector<2x16xf32>
    %613 = vector.extract_strided_slice %602 {offsets = [0, 32], sizes = [2, 16], strides = [1, 1]} : vector<2x48xf32> to vector<2x16xf32>
    %cst_196 = arith.constant 5.000000e-01 : f32
    %614 = vector.broadcast %cst_196 : f32 to vector<2x16xf32>
    %615 = arith.mulf %614, %613 : vector<2x16xf32>
    %616 = math.tanh %615 : vector<2x16xf32>
    %cst_197 = arith.constant 1.000000e+00 : f32
    %617 = vector.broadcast %cst_197 : f32 to vector<2x16xf32>
    %618 = arith.addf %616, %617 : vector<2x16xf32>
    %cst_198 = arith.constant 5.000000e-01 : f32
    %619 = vector.broadcast %cst_198 : f32 to vector<2x16xf32>
    %620 = arith.mulf %619, %618 : vector<2x16xf32>
    %621 = arith.mulf %612, %548 : vector<2x16xf32>
    %622 = arith.mulf %620, %604 : vector<2x16xf32>
    %623 = arith.addf %621, %622 : vector<2x16xf32>
    %c8_i32 = arith.constant 8 : i32
    %624 = tpu.concatenate %573, %623 in 1 : vector<2x32xf32>, vector<2x16xf32> -> vector<2x48xf32>
    %c0_199 = arith.constant 0 : index
    %c0_200 = arith.constant 0 : index
    %625 = vector.load %arg12[%c0_199, %c0_200] : memref<48x32xf32, #tpu.memory_space<vmem>>, vector<48x32xf32>
    %cst_201 = arith.constant dense<0.000000e+00> : vector<2x32xf32>
    %626 = tpu.matmul %624, %625, %cst_201 {dimension_numbers = #tpu.dot_dimension_numbers<[1], [0], [0], [1], [0, 0, 1, 1], [], []>} : vector<2x48xf32>, vector<48x32xf32>, vector<2x32xf32> -> vector<2x32xf32>
    %c0_202 = arith.constant 0 : index
    %c0_203 = arith.constant 0 : index
    %627 = vector.load %arg13[%c0_202, %c0_203] : memref<1x32xf32, #tpu.memory_space<vmem>>, vector<1x32xf32>
    %628 = vector.broadcast %627 : vector<1x32xf32> to vector<2x32xf32>
    %629 = arith.addf %626, %628 : vector<2x32xf32>
    %cst_204 = arith.constant 0.000000e+00 : f32
    %630 = vector.broadcast %cst_204 : f32 to vector<2x32xf32>
    %631 = arith.maximumf %629, %630 : vector<2x32xf32>
    %c0_205 = arith.constant 0 : index
    %c0_206 = arith.constant 0 : index
    %632 = vector.load %arg14[%c0_205, %c0_206] : memref<32x1xf32, #tpu.memory_space<vmem>>, vector<32x1xf32>
    %cst_207 = arith.constant dense<0.000000e+00> : vector<2x1xf32>
    %633 = tpu.matmul %631, %632, %cst_207 {dimension_numbers = #tpu.dot_dimension_numbers<[1], [0], [0], [1], [0, 0, 1, 1], [], []>} : vector<2x32xf32>, vector<32x1xf32>, vector<2x1xf32> -> vector<2x1xf32>
    %c0_208 = arith.constant 0 : index
    %c0_209 = arith.constant 0 : index
    %634 = vector.load %arg15[%c0_208, %c0_209] : memref<1x1xf32, #tpu.memory_space<vmem>>, vector<1x1xf32>
    %635 = vector.broadcast %634 : vector<1x1xf32> to vector<2x1xf32>
    %636 = arith.addf %633, %635 : vector<2x1xf32>
    %c0_210 = arith.constant 0 : index
    %c0_211 = arith.constant 0 : index
    %637 = vector.load %arg16[%c0_210, %c0_211] : memref<2x1xf32, #tpu.memory_space<vmem>>, vector<2x1xf32>
    tpu.vector_store %arg16[%c0_210, %c0_211], %636 {strides = array<i32>} : memref<2x1xf32, #tpu.memory_space<vmem>>, vector<2x1xf32>,
    %c0_212 = arith.constant 0 : index
    %c0_213 = arith.constant 0 : index
    %638 = vector.load %arg17[%c0_212, %c0_213] : memref<2x48xf32, #tpu.memory_space<vmem>>, vector<2x48xf32>
    tpu.vector_store %arg17[%c0_212, %c0_213], %624 {strides = array<i32>} : memref<2x48xf32, #tpu.memory_space<vmem>>, vector<2x48xf32>,
    return
  }
}

</mosaic_0001>

<llo_original>
// kernel: tpu_custom_call.1
$region0: #{tpu_custom_call.1}
  #allocation0 [shape = 'u32[]', space=smem, size = 0x4, offset = 0x4, fixed_abs, tag = 'smem constant byte address 0x4 - core index']
  #allocation1 [shape = 'u32[144,128]{1,0:T(1,128)}', space=vmem, size = 0x12000, scoped, tag = 'internal scratch']
  #allocation2 [shape = 'f32[1,1]{1,0:T(1,128)S(1)}', space=vmem, size = 0x200, scoped, tag = 'scoped memory for tpu_custom_call.1']
  %s0 = inlined_call_operand.vmem [shape: f32[8,2,16], index: 0, kind: input, shape index: {}]
  %s1 = inlined_call_operand.vmem [shape: f32[16,128], index: 1, kind: input, shape index: {}]
  %s2 = inlined_call_operand.vmem [shape: f32[32,128], index: 2, kind: input, shape index: {}]
  %s3 = inlined_call_operand.vmem [shape: f32[1,128], index: 3, kind: input, shape index: {}]
  %s4 = inlined_call_operand.vmem [shape: f32[64,32], index: 4, kind: input, shape index: {}]
  %s5 = inlined_call_operand.vmem [shape: f32[1,32], index: 5, kind: input, shape index: {}]
  %s6 = inlined_call_operand.vmem [shape: f32[32,64], index: 6, kind: input, shape index: {}]
  %s7 = inlined_call_operand.vmem [shape: f32[1,64], index: 7, kind: input, shape index: {}]
  %s8 = inlined_call_operand.vmem [shape: f32[80,96], index: 8, kind: input, shape index: {}]
  %s9 = inlined_call_operand.vmem [shape: f32[1,96], index: 9, kind: input, shape index: {}]
  %s10 = inlined_call_operand.vmem [shape: f32[96,48], index: 10, kind: input, shape index: {}]
  %s11 = inlined_call_operand.vmem [shape: f32[1,48], index: 11, kind: input, shape index: {}]
  %s12 = inlined_call_operand.vmem [shape: f32[48,32], index: 12, kind: input, shape index: {}]
  %s13 = inlined_call_operand.vmem [shape: f32[1,32], index: 13, kind: input, shape index: {}]
  %s14 = inlined_call_operand.vmem [shape: f32[32,1], index: 14, kind: input, shape index: {}]
  %s15 = inlined_call_operand.<no memory space> [shape: f32[1,1], index: 15, kind: input, shape index: {}]
  %s16 = inlined_call_operand.vmem [shape: f32[2,1], index: 16, kind: output, shape index: {0}]
  %s17 = inlined_call_operand.hbm [shape: f32[2,48], index: 17, kind: output, shape index: {1}]
  %18 = xla_tuple %s16, %s17
  %s19 = sld [smem:[#allocation0]]
  $region82: #{tpu_custom_call.1} parent=0
    _
  %s21 = ssub.s32 1, %s19
  %s22 = scalar_select 0, %s21, %s19
  %v23 = vstv %s15
  %24 = vst [vmem:[#allocation2] sm:$0x1] %v23
  $region1: #{tpu_custom_call.1} parent=0
    #allocation3 [shape = 'u8[1024]{0}', space=vmem, size = 0x400, scoped, tag = 'output window, operand 1, single buffered']
    #allocation4 [shape = 's32[1]{0}', space=sflag, size = 0x4, scoped, tag = 'scoped memory for tpu_custom_call.1']
    %25 = vsyncpa [#allocation4], 0
    // Predicated region
    $region2: #{tpu_custom_call.1} parent=1 // pred_check
      _
    $region3: #{tpu_custom_call.1} parent=1 // pred_check_branch
      %27 = sbr.rel (0) target = $region5
    $region4: #{tpu_custom_call.1} parent=1 // pred_region
      _
    $region5: #{tpu_custom_call.1} parent=1 // pred_fallthru
      _
    // Predicated region
    $region6: #{tpu_custom_call.1} parent=1 // pred_check
      _
    $region7: #{tpu_custom_call.1} parent=1 // pred_check_branch
      %29 = sbr.rel (0) target = $region9
    $region8: #{tpu_custom_call.1} parent=1 // pred_region
      _
    $region9: #{tpu_custom_call.1} parent=1 // pred_fallthru
      _
    // Predicated region
    $region10: #{tpu_custom_call.1} parent=1 // pred_check
      _
    $region11: #{tpu_custom_call.1} parent=1 // pred_check_branch
      %31 = sbr.rel (0) target = $region13
    $region12: #{tpu_custom_call.1} parent=1 // pred_region
      _
    $region13: #{tpu_custom_call.1} parent=1 // pred_fallthru
      _
    // Predicated region
    $region14: #{tpu_custom_call.1} parent=1 // pred_check
      _
    $region15: #{tpu_custom_call.1} parent=1 // pred_check_branch
      %33 = sbr.rel (0) target = $region17
    $region16: #{tpu_custom_call.1} parent=1 // pred_region
      _
    $region17: #{tpu_custom_call.1} parent=1 // pred_fallthru
      _
    // Predicated region
    $region18: #{tpu_custom_call.1} parent=1 // pred_check
      _
    $region19: #{tpu_custom_call.1} parent=1 // pred_check_branch
      %35 = sbr.rel (0) target = $region21
    $region20: #{tpu_custom_call.1} parent=1 // pred_region
      _
    $region21: #{tpu_custom_call.1} parent=1 // pred_fallthru
      _
    // Predicated region
    $region22: #{tpu_custom_call.1} parent=1 // pred_check
      _
    $region23: #{tpu_custom_call.1} parent=1 // pred_check_branch
      %37 = sbr.rel (0) target = $region25
    $region24: #{tpu_custom_call.1} parent=1 // pred_region
      _
    $region25: #{tpu_custom_call.1} parent=1 // pred_fallthru
      _
    // Predicated region
    $region26: #{tpu_custom_call.1} parent=1 // pred_check
      _
    $region27: #{tpu_custom_call.1} parent=1 // pred_check_branch
      %39 = sbr.rel (0) target = $region29
    $region28: #{tpu_custom_call.1} parent=1 // pred_region
      _
    $region29: #{tpu_custom_call.1} parent=1 // pred_fallthru
      _
    // Predicated region
    $region30: #{tpu_custom_call.1} parent=1 // pred_check
      _
    $region31: #{tpu_custom_call.1} parent=1 // pred_check_branch
      %41 = sbr.rel (0) target = $region33
    $region32: #{tpu_custom_call.1} parent=1 // pred_region
      _
    $region33: #{tpu_custom_call.1} parent=1 // pred_fallthru
      _
    // Predicated region
    $region34: #{tpu_custom_call.1} parent=1 // pred_check
      _
    $region35: #{tpu_custom_call.1} parent=1 // pred_check_branch
      %43 = sbr.rel (0) target = $region37
    $region36: #{tpu_custom_call.1} parent=1 // pred_region
      _
    $region37: #{tpu_custom_call.1} parent=1 // pred_fallthru
      _
    // Predicated region
    $region38: #{tpu_custom_call.1} parent=1 // pred_check
      _
    $region39: #{tpu_custom_call.1} parent=1 // pred_check_branch
      %45 = sbr.rel (0) target = $region41
    $region40: #{tpu_custom_call.1} parent=1 // pred_region
      _
    $region41: #{tpu_custom_call.1} parent=1 // pred_fallthru
      _
    // Predicated region
    $region42: #{tpu_custom_call.1} parent=1 // pred_check
      _
    $region43: #{tpu_custom_call.1} parent=1 // pred_check_branch
      %47 = sbr.rel (0) target = $region45
    $region44: #{tpu_custom_call.1} parent=1 // pred_region
      _
    $region45: #{tpu_custom_call.1} parent=1 // pred_fallthru
      _
    // Predicated region
    $region46: #{tpu_custom_call.1} parent=1 // pred_check
      _
    $region47: #{tpu_custom_call.1} parent=1 // pred_check_branch
      %49 = sbr.rel (0) target = $region49
    $region48: #{tpu_custom_call.1} parent=1 // pred_region
      _
    $region49: #{tpu_custom_call.1} parent=1 // pred_fallthru
      _
    // Predicated region
    $region50: #{tpu_custom_call.1} parent=1 // pred_check
      _
    $region51: #{tpu_custom_call.1} parent=1 // pred_check_branch
      %51 = sbr.rel (0) target = $region53
    $region52: #{tpu_custom_call.1} parent=1 // pred_region
      _
    $region53: #{tpu_custom_call.1} parent=1 // pred_fallthru
      _
    // Predicated region
    $region54: #{tpu_custom_call.1} parent=1 // pred_check
      _
    $region55: #{tpu_custom_call.1} parent=1 // pred_check_branch
      %53 = sbr.rel (0) target = $region57
    $region56: #{tpu_custom_call.1} parent=1 // pred_region
      _
    $region57: #{tpu_custom_call.1} parent=1 // pred_fallthru
      _
    // Predicated region
    $region58: #{tpu_custom_call.1} parent=1 // pred_check
      _
    $region59: #{tpu_custom_call.1} parent=1 // pred_check_branch
      %55 = sbr.rel (0) target = $region61
    $region60: #{tpu_custom_call.1} parent=1 // pred_region
      _
    $region61: #{tpu_custom_call.1} parent=1 // pred_fallthru
      _
    // Predicated region
    $region62: #{tpu_custom_call.1} parent=1 // pred_check
      _
    $region63: #{tpu_custom_call.1} parent=1 // pred_check_branch
      %57 = sbr.rel (0) target = $region65
    $region64: #{tpu_custom_call.1} parent=1 // pred_region
      _
    $region65: #{tpu_custom_call.1} parent=1 // pred_fallthru
      _
    %v58 = vld [vmem:[%s1] sm:$0xff]
    %v59 = vld [vmem:[%s1 + $0x8] sm:$0xff]
    %v60 = vld [vmem:[%s2] sm:$0xff]
    %v61 = vld [vmem:[%s2 + $0x8] sm:$0xff]
    %v62 = vld [vmem:[%s2 + $0x10] sm:$0xff]
    %v63 = vld [vmem:[%s2 + $0x18] sm:$0xff]
    %v64 = vld [vmem:[%s3] sm:$0x1]
    %v66 = vlaneseq
    %v67 = vshrl.u32 %v66, 7
    %v68 = vsub.s32 0, %v67
    %v69 = vrot.slane %v64, %v68
    %v71 = vld [vmem:[%s4] sm:$0xff]
    %v72 = vld [vmem:[%s4 + $0x8] sm:$0xff]
    %v73 = vld [vmem:[%s4 + $0x10] sm:$0xff]
    %v74 = vld [vmem:[%s4 + $0x18] sm:$0xff]
    %v75 = vld [vmem:[%s4 + $0x20] sm:$0xff]
    %v76 = vld [vmem:[%s4 + $0x28] sm:$0xff]
    %v77 = vld [vmem:[%s4 + $0x30] sm:$0xff]
    %v78 = vld [vmem:[%s4 + $0x38] sm:$0xff]
    %v79 = vld [vmem:[%s5] sm:$0x1]
    %v81 = vlaneseq
    %v82 = vshrl.u32 %v81, 7
    %v83 = vsub.s32 0, %v82
    %v84 = vrot.slane %v79, %v83
    %v86 = vld [vmem:[%s6] sm:$0xff]
    %v87 = vld [vmem:[%s6 + $0x8] sm:$0xff]
    %v88 = vld [vmem:[%s6 + $0x10] sm:$0xff]
    %v89 = vld [vmem:[%s6 + $0x18] sm:$0xff]
    %v90 = vld [vmem:[%s7] sm:$0x1]
    %v92 = vlaneseq
    %v93 = vshrl.u32 %v92, 7
    %v94 = vsub.s32 0, %v93
    %v95 = vrot.slane %v90, %v94
    %v97 = vld [vmem:[%s8] sm:$0xff]
    %v98 = vld [vmem:[%s8 + $0x8] sm:$0xff]
    %v99 = vld [vmem:[%s8 + $0x10] sm:$0xff]
    %v100 = vld [vmem:[%s8 + $0x18] sm:$0xff]
    %v101 = vld [vmem:[%s8 + $0x20] sm:$0xff]
    %v102 = vld [vmem:[%s8 + $0x28] sm:$0xff]
    %v103 = vld [vmem:[%s8 + $0x30] sm:$0xff]
    %v104 = vld [vmem:[%s8 + $0x38] sm:$0xff]
    %v105 = vld [vmem:[%s8 + $0x40] sm:$0xff]
    %v106 = vld [vmem:[%s8 + $0x48] sm:$0xff]
    %v107 = vld [vmem:[%s9] sm:$0x1]
    %v109 = vlaneseq
    %v110 = vshrl.u32 %v109, 7
    %v111 = vsub.s32 0, %v110
    %v112 = vrot.slane %v107, %v111
    %v114 = vld [vmem:[%s10] sm:$0xff]
    %v115 = vld [vmem:[%s10 + $0x8] sm:$0xff]
    %v116 = vld [vmem:[%s10 + $0x10] sm:$0xff]
    %v117 = vld [vmem:[%s10 + $0x18] sm:$0xff]
    %v118 = vld [vmem:[%s10 + $0x20] sm:$0xff]
    %v119 = vld [vmem:[%s10 + $0x28] sm:$0xff]
    %v120 = vld [vmem:[%s10 + $0x30] sm:$0xff]
    %v121 = vld [vmem:[%s10 + $0x38] sm:$0xff]
    %v122 = vld [vmem:[%s10 + $0x40] sm:$0xff]
    %v123 = vld [vmem:[%s10 + $0x48] sm:$0xff]
    %v124 = vld [vmem:[%s10 + $0x50] sm:$0xff]
    %v125 = vld [vmem:[%s10 + $0x58] sm:$0xff]
    %v126 = vld [vmem:[%s11] sm:$0x1]
    %v128 = vlaneseq
    %v129 = vshrl.u32 %v128, 7
    %v130 = vsub.s32 0, %v129
    %v131 = vrot.slane %v126, %v130
    %v133 = vld [vmem:[%s0] sm:$0x3]
    %vm134 = vcmask 261120
    %v136 = vsel %vm134, 0.0, 0
    %138 = vmatprep.subr.mxu0 0.0
    %139 = vmatpush1.msra.mxu0 %v60
    %140 = vmatprep.subr.mxu0 0.0
    %141 = vmatpush1.msra.mxu0 %v61
    %142 = vmatprep.subr.mxu0 0.0
    %143 = vmatpush1.msra.mxu0 %v62
    %144 = vmatprep.subr.mxu0 0.0
    %145 = vmatpush1.msra.mxu0 %v63
    %146 = vmatprep.subr.mxu0 0.0
    %147 = vmatpush1.msra.mxu0 0.0
    %148 = vmatprep.subr.mxu0 0.0
    %149 = vmatpush1.msra.mxu0 0.0
    %150 = vmatprep.subr.mxu0 0.0
    %151 = vmatpush1.msra.mxu0 0.0
    %152 = vmatprep.subr.mxu0 0.0
    %153 = vmatpush1.msra.mxu0 0.0
    %154 = vmatprep.subr.mxu0 0.0
    %155 = vmatpush1.msra.mxu0 0.0
    %156 = vmatprep.subr.mxu0 0.0
    %157 = vmatpush1.msra.mxu0 0.0
    %158 = vmatprep.subr.mxu0 0.0
    %159 = vmatpush1.msra.mxu0 0.0
    %160 = vmatprep.subr.mxu0 0.0
    %161 = vmatpush1.msra.mxu0 0.0
    %162 = vmatprep.subr.mxu0 0.0
    %163 = vmatpush1.msra.mxu0 0.0
    %164 = vmatprep.subr.mxu0 0.0
    %165 = vmatpush1.msra.mxu0 0.0
    %166 = vmatprep.subr.mxu0 0.0
    %167 = vmatpush1.msra.mxu0 0.0
    %168 = vmatprep.subr.mxu0 0.0
    %169 = vmatpush1.msra.mxu0 0.0
    %170 = vmatprep.subr.mxu0 0.0
    %171 = vmatpush1.msra.mxu0 0.0
    %172 = vmatprep.subr.mxu0 0.0
    %173 = vmatpush1.msra.mxu0 0.0
    %174 = vmatprep.subr.mxu0 0.0
    %175 = vmatpush1.msra.mxu0 0.0
    %176 = vmatprep.subr.mxu0 0.0
    %177 = vmatpush1.msra.mxu0 0.0
    %178 = vmatprep.subr.mxu0 0.0
    %179 = vmatpush1.msra.mxu0 0.0
    %180 = vmatprep.subr.mxu0 0.0
    %181 = vmatpush1.msra.mxu0 0.0
    %182 = vmatprep.subr.mxu0 0.0
    %183 = vmatpush1.msra.mxu0 0.0
    %184 = vmatprep.subr.mxu0 0.0
    %185 = vmatpush1.msra.mxu0 0.0
    %186 = vmatprep.subr.mxu0 0.0
    %187 = vmatpush1.msra.mxu0 0.0
    %188 = vmatprep.subr.mxu0 0.0
    %189 = vmatpush1.msra.mxu0 0.0
    %190 = vmatprep.subr.mxu0 0.0
    %191 = vmatpush1.msra.mxu0 0.0
    %192 = vmatprep.subr.mxu0 0.0
    %193 = vmatpush1.msra.mxu0 0.0
    %194 = vmatprep.subr.mxu0 0.0
    %195 = vmatpush1.msra.mxu0 0.0
    %196 = vmatprep.subr.mxu0 0.0
    %197 = vmatpush1.msra.mxu0 0.0
    %198 = vmatprep.subr.mxu0 0.0
    %199 = vmatpush1.msra.mxu0 0.0
    %200 = vmatprep.subr.mxu0 0.0
    %201 = vmatpush1.msra.mxu0 0.0
    %202 = vmatprep.mubr.f32.mxu0 0.0
    %203 = vmatmul.mubr.f32.gmra.mrb[0].mxu0 %v136
    %v204 = vpop.f32.mrb[0].mxu0
    %v205 = vadd.f32 0.0, %v204
    %v206 = vpop.f32.mrb[0].mxu0
    %207 = vdwg.mxu0
    %vm208 = vcmask 130048
    %v210 = vsel %vm208, %v133, 0
    %212 = vmatprep.subr.mxu0 0.0
    %213 = vmatpush1.msra.mxu0 %v58
    %214 = vmatprep.subr.mxu0 0.0
    %215 = vmatpush1.msra.mxu0 %v59
    %216 = vmatprep.subr.mxu0 0.0
    %217 = vmatpush1.msra.mxu0 0.0
    %218 = vmatprep.subr.mxu0 0.0
    %219 = vmatpush1.msra.mxu0 0.0
    %220 = vmatprep.subr.mxu0 0.0
    %221 = vmatpush1.msra.mxu0 0.0
    %222 = vmatprep.subr.mxu0 0.0
    %223 = vmatpush1.msra.mxu0 0.0
    %224 = vmatprep.subr.mxu0 0.0
    %225 = vmatpush1.msra.mxu0 0.0
    %226 = vmatprep.subr.mxu0 0.0
    %227 = vmatpush1.msra.mxu0 0.0
    %228 = vmatprep.subr.mxu0 0.0
    %229 = vmatpush1.msra.mxu0 0.0
    %230 = vmatprep.subr.mxu0 0.0
    %231 = vmatpush1.msra.mxu0 0.0
    %232 = vmatprep.subr.mxu0 0.0
    %233 = vmatpush1.msra.mxu0 0.0
    %234 = vmatprep.subr.mxu0 0.0
    %235 = vmatpush1.msra.mxu0 0.0
    %236 = vmatprep.subr.mxu0 0.0
    %237 = vmatpush1.msra.mxu0 0.0
    %238 = vmatprep.subr.mxu0 0.0
    %239 = vmatpush1.msra.mxu0 0.0
    %240 = vmatprep.subr.mxu0 0.0
    %241 = vmatpush1.msra.mxu0 0.0
    %242 = vmatprep.subr.mxu0 0.0
    %243 = vmatpush1.msra.mxu0 0.0
    %244 = vmatprep.subr.mxu0 0.0
    %245 = vmatpush1.msra.mxu0 0.0
    %246 = vmatprep.subr.mxu0 0.0
    %247 = vmatpush1.msra.mxu0 0.0
    %248 = vmatprep.subr.mxu0 0.0
    %249 = vmatpush1.msra.mxu0 0.0
    %250 = vmatprep.subr.mxu0 0.0
    %251 = vmatpush1.msra.mxu0 0.0
    %252 = vmatprep.subr.mxu0 0.0
    %253 = vmatpush1.msra.mxu0 0.0
    %254 = vmatprep.subr.mxu0 0.0
    %255 = vmatpush1.msra.mxu0 0.0
    %256 = vmatprep.subr.mxu0 0.0
    %257 = vmatpush1.msra.mxu0 0.0
    %258 = vmatprep.subr.mxu0 0.0
    %259 = vmatpush1.msra.mxu0 0.0
    %260 = vmatprep.subr.mxu0 0.0
    %261 = vmatpush1.msra.mxu0 0.0
    %262 = vmatprep.subr.mxu0 0.0
    %263 = vmatpush1.msra.mxu0 0.0
    %264 = vmatprep.subr.mxu0 0.0
    %265 = vmatpush1.msra.mxu0 0.0
    %266 = vmatprep.subr.mxu0 0.0
    %267 = vmatpush1.msra.mxu0 0.0
    %268 = vmatprep.subr.mxu0 0.0
    %269 = vmatpush1.msra.mxu0 0.0
    %270 = vmatprep.subr.mxu0 0.0
    %271 = vmatpush1.msra.mxu0 0.0
    %272 = vmatprep.subr.mxu0 0.0
    %273 = vmatpush1.msra.mxu0 0.0
    %274 = vmatprep.subr.mxu0 0.0
    %275 = vmatpush1.msra.mxu0 0.0
    %276 = vmatprep.mubr.f32.mxu0 0.0
    %277 = vmatmul.mubr.f32.gmra.mrb[0].mxu0 %v210
    %v278 = vpop.f32.mrb[0].mxu0
    %v279 = vadd.f32 %v205, %v278
    %v280 = vpop.f32.mrb[0].mxu0
    %281 = vdwg.mxu0
    %v282 = vadd.f32 %v279, %v69
    %v283 = vmul.f32 %v282, 0.5
    %v284 = vtanh.pop %v283
    %v285 = vadd.f32 %v284, 1.0
    %v286 = vmul.f32 %v285, 0.5
    %v287 = vtanh.pop %v282
    %v288 = vmul.f32 %v286, 0.0
    %290 = vrot.lane.b32.xlu0 %v287, 32
    %v291 = vpop.permute.xlu0 %290
    %v293 = vmul.f32 %v286, %v291
    %295 = vrot.lane.b32.xlu0 %v293, 32
    %v296 = vpop.permute.xlu0 %295
    %v298 = vadd.f32 %v288, %v296
    %v299 = vtanh.pop %v298
    %301 = vrot.lane.b32.xlu0 %v299, 32
    %v302 = vpop.permute.xlu0 %301
    %v304 = vmul.f32 %v286, %v302
    %v305 = vsel %vm134, 0.0, %v298
    %vm306 = vcmask 523264
    %v308 = vsel %vm306, %v305, 0
    %310 = vmatprep.subr.mxu0 0.0
    %311 = vmatpush1.msra.mxu0 %v71
    %312 = vmatprep.subr.mxu0 0.0
    %313 = vmatpush1.msra.mxu0 %v72
    %314 = vmatprep.subr.mxu0 0.0
    %315 = vmatpush1.msra.mxu0 %v73
    %316 = vmatprep.subr.mxu0 0.0
    %317 = vmatpush1.msra.mxu0 %v74
    %318 = vmatprep.subr.mxu0 0.0
    %319 = vmatpush1.msra.mxu0 %v75
    %320 = vmatprep.subr.mxu0 0.0
    %321 = vmatpush1.msra.mxu0 %v76
    %322 = vmatprep.subr.mxu0 0.0
    %323 = vmatpush1.msra.mxu0 %v77
    %324 = vmatprep.subr.mxu0 0.0
    %325 = vmatpush1.msra.mxu0 %v78
    %326 = vmatprep.subr.mxu0 0.0
    %327 = vmatpush1.msra.mxu0 0.0
    %328 = vmatprep.subr.mxu0 0.0
    %329 = vmatpush1.msra.mxu0 0.0
    %330 = vmatprep.subr.mxu0 0.0
    %331 = vmatpush1.msra.mxu0 0.0
    %332 = vmatprep.subr.mxu0 0.0
    %333 = vmatpush1.msra.mxu0 0.0
    %334 = vmatprep.subr.mxu0 0.0
    %335 = vmatpush1.msra.mxu0 0.0
    %336 = vmatprep.subr.mxu0 0.0
    %337 = vmatpush1.msra.mxu0 0.0
    %338 = vmatprep.subr.mxu0 0.0
    %339 = vmatpush1.msra.mxu0 0.0
    %340 = vmatprep.subr.mxu0 0.0
    %341 = vmatpush1.msra.mxu0 0.0
    %342 = vmatprep.subr.mxu0 0.0
    %343 = vmatpush1.msra.mxu0 0.0
    %344 = vmatprep.subr.mxu0 0.0
    %345 = vmatpush1.msra.mxu0 0.0
    %346 = vmatprep.subr.mxu0 0.0
    %347 = vmatpush1.msra.mxu0 0.0
    %348 = vmatprep.subr.mxu0 0.0
    %349 = vmatpush1.msra.mxu0 0.0
    %350 = vmatprep.subr.mxu0 0.0
    %351 = vmatpush1.msra.mxu0 0.0
    %352 = vmatprep.subr.mxu0 0.0
    %353 = vmatpush1.msra.mxu0 0.0
    %354 = vmatprep.subr.mxu0 0.0
    %355 = vmatpush1.msra.mxu0 0.0
    %356 = vmatprep.subr.mxu0 0.0
    %357 = vmatpush1.msra.mxu0 0.0
    %358 = vmatprep.subr.mxu0 0.0
    %359 = vmatpush1.msra.mxu0 0.0
    %360 = vmatprep.subr.mxu0 0.0
    %361 = vmatpush1.msra.mxu0 0.0
    %362 = vmatprep.subr.mxu0 0.0
    %363 = vmatpush1.msra.mxu0 0.0
    %364 = vmatprep.subr.mxu0 0.0
    %365 = vmatpush1.msra.mxu0 0.0
    %366 = vmatprep.subr.mxu0 0.0
    %367 = vmatpush1.msra.mxu0 0.0
    %368 = vmatprep.subr.mxu0 0.0
    %369 = vmatpush1.msra.mxu0 0.0
    %370 = vmatprep.subr.mxu0 0.0
    %371 = vmatpush1.msra.mxu0 0.0
    %372 = vmatprep.subr.mxu0 0.0
    %373 = vmatpush1.msra.mxu0 0.0
    %374 = vmatprep.mubr.f32.mxu0 0.0
    %375 = vmatmul.mubr.f32.gmra.mrb[0].mxu0 %v308
    %v376 = vpop.f32.mrb[0].mxu0
    %v377 = vadd.f32 %v84, %v376
    %v378 = vpop.f32.mrb[0].mxu0
    %379 = vdwg.mxu0
    %v380 = vmax.f32 %v377, 0.0
    %v382 = vsel %vm134, %v380, 0
    %384 = vmatprep.subr.mxu0 0.0
    %385 = vmatpush1.msra.mxu0 %v86
    %386 = vmatprep.subr.mxu0 0.0
    %387 = vmatpush1.msra.mxu0 %v87
    %388 = vmatprep.subr.mxu0 0.0
    %389 = vmatpush1.msra.mxu0 %v88
    %390 = vmatprep.subr.mxu0 0.0
    %391 = vmatpush1.msra.mxu0 %v89
    %392 = vmatprep.subr.mxu0 0.0
    %393 = vmatpush1.msra.mxu0 0.0
    %394 = vmatprep.subr.mxu0 0.0
    %395 = vmatpush1.msra.mxu0 0.0
    %396 = vmatprep.subr.mxu0 0.0
    %397 = vmatpush1.msra.mxu0 0.0
    %398 = vmatprep.subr.mxu0 0.0
    %399 = vmatpush1.msra.mxu0 0.0
    %400 = vmatprep.subr.mxu0 0.0
    %401 = vmatpush1.msra.mxu0 0.0
    %402 = vmatprep.subr.mxu0 0.0
    %403 = vmatpush1.msra.mxu0 0.0
    %404 = vmatprep.subr.mxu0 0.0
    %405 = vmatpush1.msra.mxu0 0.0
    %406 = vmatprep.subr.mxu0 0.0
    %407 = vmatpush1.msra.mxu0 0.0
    %408 = vmatprep.subr.mxu0 0.0
    %409 = vmatpush1.msra.mxu0 0.0
    %410 = vmatprep.subr.mxu0 0.0
    %411 = vmatpush1.msra.mxu0 0.0
    %412 = vmatprep.subr.mxu0 0.0
    %413 = vmatpush1.msra.mxu0 0.0
    %414 = vmatprep.subr.mxu0 0.0
    %415 = vmatpush1.msra.mxu0 0.0
    %416 = vmatprep.subr.mxu0 0.0
    %417 = vmatpush1.msra.mxu0 0.0
    %418 = vmatprep.subr.mxu0 0.0
    %419 = vmatpush1.msra.mxu0 0.0
    %420 = vmatprep.subr.mxu0 0.0
    %421 = vmatpush1.msra.mxu0 0.0
    %422 = vmatprep.subr.mxu0 0.0
    %423 = vmatpush1.msra.mxu0 0.0
    %424 = vmatprep.subr.mxu0 0.0
    %425 = vmatpush1.msra.mxu0 0.0
    %426 = vmatprep.subr.mxu0 0.0
    %427 = vmatpush1.msra.mxu0 0.0
    %428 = vmatprep.subr.mxu0 0.0
    %429 = vmatpush1.msra.mxu0 0.0
    %430 = vmatprep.subr.mxu0 0.0
    %431 = vmatpush1.msra.mxu0 0.0
    %432 = vmatprep.subr.mxu0 0.0
    %433 = vmatpush1.msra.mxu0 0.0
    %434 = vmatprep.subr.mxu0 0.0
    %435 = vmatpush1.msra.mxu0 0.0
    %436 = vmatprep.subr.mxu0 0.0
    %437 = vmatpush1.msra.mxu0 0.0
    %438 = vmatprep.subr.mxu0 0.0
    %439 = vmatpush1.msra.mxu0 0.0
    %440 = vmatprep.subr.mxu0 0.0
    %441 = vmatpush1.msra.mxu0 0.0
    %442 = vmatprep.subr.mxu0 0.0
    %443 = vmatpush1.msra.mxu0 0.0
    %444 = vmatprep.subr.mxu0 0.0
    %445 = vmatpush1.msra.mxu0 0.0
    %446 = vmatprep.subr.mxu0 0.0
    %447 = vmatpush1.msra.mxu0 0.0
    %448 = vmatprep.mubr.f32.mxu0 0.0
    %449 = vmatmul.mubr.f32.gmra.mrb[0].mxu0 %v382
    %v450 = vpop.f32.mrb[0].mxu0
    %v451 = vadd.f32 %v95, %v450
    %v452 = vpop.f32.mrb[0].mxu0
    %453 = vdwg.mxu0
    %vm454 = vcmask 517120
    %v455 = vsel %vm454, %v451, -inf
    %456 = vmax.xlane.f32.xlu0 %v455
    %v457 = vpop.xlane.xlu0 %456
    %v458 = vsub.f32 %v451, %v457
    %v459 = vmul.f32 %v458, 1.442695
    %v460 = vpow.pop %v459
    %v461 = vsel %vm454, %v460, 0.0
    %462 = vadd.xlane.f32.xlu0 %v461
    %v463 = vpop.xlane.xlu0 %462
    %v464 = vrcp.pop %v463
    %v465 = vmul.f32 %v463, %v464
    %v466 = vsub.f32 2.0, %v465
    %v467 = vmul.f32 %v464, %v466
    %v468 = vmul.f32 %v460, %v467
    %v469 = vmul.f32 %v468, %v305
    %v470 = vsel %vm306, %v469, 0.0
    %vm471 = vcmask 654336
    %v473 = vsel %vm471, %v470, 0
    %475 = vmatprep.subr.mxu0 0.0
    %476 = vmatpush1.msra.mxu0 %v97
    %477 = vmatprep.subr.mxu0 0.0
    %478 = vmatpush1.msra.mxu0 %v98
    %479 = vmatprep.subr.mxu0 0.0
    %480 = vmatpush1.msra.mxu0 %v99
    %481 = vmatprep.subr.mxu0 0.0
    %482 = vmatpush1.msra.mxu0 %v100
    %483 = vmatprep.subr.mxu0 0.0
    %484 = vmatpush1.msra.mxu0 %v101
    %485 = vmatprep.subr.mxu0 0.0
    %486 = vmatpush1.msra.mxu0 %v102
    %487 = vmatprep.subr.mxu0 0.0
    %488 = vmatpush1.msra.mxu0 %v103
    %489 = vmatprep.subr.mxu0 0.0
    %490 = vmatpush1.msra.mxu0 %v104
    %491 = vmatprep.subr.mxu0 0.0
    %492 = vmatpush1.msra.mxu0 %v105
    %493 = vmatprep.subr.mxu0 0.0
    %494 = vmatpush1.msra.mxu0 %v106
    %495 = vmatprep.subr.mxu0 0.0
    %496 = vmatpush1.msra.mxu0 0.0
    %497 = vmatprep.subr.mxu0 0.0
    %498 = vmatpush1.msra.mxu0 0.0
    %499 = vmatprep.subr.mxu0 0.0
    %500 = vmatpush1.msra.mxu0 0.0
    %501 = vmatprep.subr.mxu0 0.0
    %502 = vmatpush1.msra.mxu0 0.0
    %503 = vmatprep.subr.mxu0 0.0
    %504 = vmatpush1.msra.mxu0 0.0
    %505 = vmatprep.subr.mxu0 0.0
    %506 = vmatpush1.msra.mxu0 0.0
    %507 = vmatprep.subr.mxu0 0.0
    %508 = vmatpush1.msra.mxu0 0.0
    %509 = vmatprep.subr.mxu0 0.0
    %510 = vmatpush1.msra.mxu0 0.0
    %511 = vmatprep.subr.mxu0 0.0
    %512 = vmatpush1.msra.mxu0 0.0
    %513 = vmatprep.subr.mxu0 0.0
    %514 = vmatpush1.msra.mxu0 0.0
    %515 = vmatprep.subr.mxu0 0.0
    %516 = vmatpush1.msra.mxu0 0.0
    %517 = vmatprep.subr.mxu0 0.0
    %518 = vmatpush1.msra.mxu0 0.0
    %519 = vmatprep.subr.mxu0 0.0
    %520 = vmatpush1.msra.mxu0 0.0
    %521 = vmatprep.subr.mxu0 0.0
    %522 = vmatpush1.msra.mxu0 0.0
    %523 = vmatprep.subr.mxu0 0.0
    %524 = vmatpush1.msra.mxu0 0.0
    %525 = vmatprep.subr.mxu0 0.0
    %526 = vmatpush1.msra.mxu0 0.0
    %527 = vmatprep.subr.mxu0 0.0
    %528 = vmatpush1.msra.mxu0 0.0
    %529 = vmatprep.subr.mxu0 0.0
    %530 = vmatpush1.msra.mxu0 0.0
    %531 = vmatprep.subr.mxu0 0.0
    %532 = vmatpush1.msra.mxu0 0.0
    %533 = vmatprep.subr.mxu0 0.0
    %534 = vmatpush1.msra.mxu0 0.0
    %535 = vmatprep.subr.mxu0 0.0
    %536 = vmatpush1.msra.mxu0 0.0
    %537 = vmatprep.subr.mxu0 0.0
    %538 = vmatpush1.msra.mxu0 0.0
    %539 = vmatprep.mubr.f32.mxu0 0.0
    %540 = vmatmul.mubr.f32.gmra.mrb[0].mxu0 %v473
    %v541 = vpop.f32.mrb[0].mxu0
    %v542 = vadd.f32 %v112, %v541
    %v543 = vpop.f32.mrb[0].mxu0
    %544 = vdwg.mxu0
    %v545 = vmax.f32 %v542, 0.0
    %vm546 = vcmask 785408
    %v548 = vsel %vm546, %v545, 0
    %550 = vmatprep.subr.mxu0 0.0
    %551 = vmatpush1.msra.mxu0 %v114
    %552 = vmatprep.subr.mxu0 0.0
    %553 = vmatpush1.msra.mxu0 %v115
    %554 = vmatprep.subr.mxu0 0.0
    %555 = vmatpush1.msra.mxu0 %v116
    %556 = vmatprep.subr.mxu0 0.0
    %557 = vmatpush1.msra.mxu0 %v117
    %558 = vmatprep.subr.mxu0 0.0
    %559 = vmatpush1.msra.mxu0 %v118
    %560 = vmatprep.subr.mxu0 0.0
    %561 = vmatpush1.msra.mxu0 %v119
    %562 = vmatprep.subr.mxu0 0.0
    %563 = vmatpush1.msra.mxu0 %v120
    %564 = vmatprep.subr.mxu0 0.0
    %565 = vmatpush1.msra.mxu0 %v121
    %566 = vmatprep.subr.mxu0 0.0
    %567 = vmatpush1.msra.mxu0 %v122
    %568 = vmatprep.subr.mxu0 0.0
    %569 = vmatpush1.msra.mxu0 %v123
    %570 = vmatprep.subr.mxu0 0.0
    %571 = vmatpush1.msra.mxu0 %v124
    %572 = vmatprep.subr.mxu0 0.0
    %573 = vmatpush1.msra.mxu0 %v125
    %574 = vmatprep.subr.mxu0 0.0
    %575 = vmatpush1.msra.mxu0 0.0
    %576 = vmatprep.subr.mxu0 0.0
    %577 = vmatpush1.msra.mxu0 0.0
    %578 = vmatprep.subr.mxu0 0.0
    %579 = vmatpush1.msra.mxu0 0.0
    %580 = vmatprep.subr.mxu0 0.0
    %581 = vmatpush1.msra.mxu0 0.0
    %582 = vmatprep.subr.mxu0 0.0
    %583 = vmatpush1.msra.mxu0 0.0
    %584 = vmatprep.subr.mxu0 0.0
    %585 = vmatpush1.msra.mxu0 0.0
    %586 = vmatprep.subr.mxu0 0.0
    %587 = vmatpush1.msra.mxu0 0.0
    %588 = vmatprep.subr.mxu0 0.0
    %589 = vmatpush1.msra.mxu0 0.0
    %590 = vmatprep.subr.mxu0 0.0
    %591 = vmatpush1.msra.mxu0 0.0
    %592 = vmatprep.subr.mxu0 0.0
    %593 = vmatpush1.msra.mxu0 0.0
    %594 = vmatprep.subr.mxu0 0.0
    %595 = vmatpush1.msra.mxu0 0.0
    %596 = vmatprep.subr.mxu0 0.0
    %597 = vmatpush1.msra.mxu0 0.0
    %598 = vmatprep.subr.mxu0 0.0
    %599 = vmatpush1.msra.mxu0 0.0
    %600 = vmatprep.subr.mxu0 0.0
    %601 = vmatpush1.msra.mxu0 0.0
    %602 = vmatprep.subr.mxu0 0.0
    %603 = vmatpush1.msra.mxu0 0.0
    %604 = vmatprep.subr.mxu0 0.0
    %605 = vmatpush1.msra.mxu0 0.0
    %606 = vmatprep.subr.mxu0 0.0
    %607 = vmatpush1.msra.mxu0 0.0
    %608 = vmatprep.subr.mxu0 0.0
    %609 = vmatpush1.msra.mxu0 0.0
    %610 = vmatprep.subr.mxu0 0.0
    %611 = vmatpush1.msra.mxu0 0.0
    %612 = vmatprep.subr.mxu0 0.0
    %613 = vmatpush1.msra.mxu0 0.0
    %614 = vmatprep.mubr.f32.mxu0 0.0
    %615 = vmatmul.mubr.f32.gmra.mrb[0].mxu0 %v548
    %v616 = vpop.f32.mrb[0].mxu0
    %v617 = vadd.f32 %v131, %v616
    %v618 = vpop.f32.mrb[0].mxu0
    %619 = vdwg.mxu0
    %v620 = vtanh.pop %v617
    %v621 = vmul.f32 %v617, 0.5
    %v622 = vtanh.pop %v621
    %v623 = vadd.f32 %v622, 1.0
    %v624 = vmul.f32 %v623, 0.5
    %v625 = vmul.f32 %v624, 0.0
    %627 = vrot.lane.b32.xlu0 %v620, 32
    %v628 = vpop.permute.xlu0 %627
    %v630 = vmul.f32 %v624, %v628
    %632 = vrot.lane.b32.xlu0 %v630, 112
    %v633 = vpop.permute.xlu0 %632
    %v635 = vadd.f32 %v625, %v633
    %s636 = scalar_lea.vmem %s0, 2
    %v637 = vld [vmem:[%s636] sm:$0x3]
    %639 = vrot.lane.b32.xlu0 %v304, 64
    %v640 = vpop.permute.xlu0 %639
    %v641 = vsel %vm134, %v640, 0
    %643 = vmatprep.subr.mxu0 0.0
    %644 = vmatpush1.msra.mxu0 %v60
    %645 = vmatprep.subr.mxu0 0.0
    %646 = vmatpush1.msra.mxu0 %v61
    %647 = vmatprep.subr.mxu0 0.0
    %648 = vmatpush1.msra.mxu0 %v62
    %649 = vmatprep.subr.mxu0 0.0
    %650 = vmatpush1.msra.mxu0 %v63
    %651 = vmatprep.subr.mxu0 0.0
    %652 = vmatpush1.msra.mxu0 0.0
    %653 = vmatprep.subr.mxu0 0.0
    %654 = vmatpush1.msra.mxu0 0.0
    %655 = vmatprep.subr.mxu0 0.0
    %656 = vmatpush1.msra.mxu0 0.0
    %657 = vmatprep.subr.mxu0 0.0
    %658 = vmatpush1.msra.mxu0 0.0
    %659 = vmatprep.subr.mxu0 0.0
    %660 = vmatpush1.msra.mxu0 0.0
    %661 = vmatprep.subr.mxu0 0.0
    %662 = vmatpush1.msra.mxu0 0.0
    %663 = vmatprep.subr.mxu0 0.0
    %664 = vmatpush1.msra.mxu0 0.0
    %665 = vmatprep.subr.mxu0 0.0
    %666 = vmatpush1.msra.mxu0 0.0
    %667 = vmatprep.subr.mxu0 0.0
    %668 = vmatpush1.msra.mxu0 0.0
    %669 = vmatprep.subr.mxu0 0.0
    %670 = vmatpush1.msra.mxu0 0.0
    %671 = vmatprep.subr.mxu0 0.0
    %672 = vmatpush1.msra.mxu0 0.0
    %673 = vmatprep.subr.mxu0 0.0
    %674 = vmatpush1.msra.mxu0 0.0
    %675 = vmatprep.subr.mxu0 0.0
    %676 = vmatpush1.msra.mxu0 0.0
    %677 = vmatprep.subr.mxu0 0.0
    %678 = vmatpush1.msra.mxu0 0.0
    %679 = vmatprep.subr.mxu0 0.0
    %680 = vmatpush1.msra.mxu0 0.0
    %681 = vmatprep.subr.mxu0 0.0
    %682 = vmatpush1.msra.mxu0 0.0
    %683 = vmatprep.subr.mxu0 0.0
    %684 = vmatpush1.msra.mxu0 0.0
    %685 = vmatprep.subr.mxu0 0.0
    %686 = vmatpush1.msra.mxu0 0.0
    %687 = vmatprep.subr.mxu0 0.0
    %688 = vmatpush1.msra.mxu0 0.0
    %689 = vmatprep.subr.mxu0 0.0
    %690 = vmatpush1.msra.mxu0 0.0
    %691 = vmatprep.subr.mxu0 0.0
    %692 = vmatpush1.msra.mxu0 0.0
    %693 = vmatprep.subr.mxu0 0.0
    %694 = vmatpush1.msra.mxu0 0.0
    %695 = vmatprep.subr.mxu0 0.0
    %696 = vmatpush1.msra.mxu0 0.0
    %697 = vmatprep.subr.mxu0 0.0
    %698 = vmatpush1.msra.mxu0 0.0
    %699 = vmatprep.subr.mxu0 0.0
    %700 = vmatpush1.msra.mxu0 0.0
    %701 = vmatprep.subr.mxu0 0.0
    %702 = vmatpush1.msra.mxu0 0.0
    %703 = vmatprep.subr.mxu0 0.0
    %704 = vmatpush1.msra.mxu0 0.0
    %705 = vmatprep.subr.mxu0 0.0
    %706 = vmatpush1.msra.mxu0 0.0
    %707 = vmatprep.mubr.f32.mxu0 0.0
    %708 = vmatmul.mubr.f32.gmra.mrb[0].mxu0 %v641
    %v709 = vpop.f32.mrb[0].mxu0
    %v710 = vadd.f32 0.0, %v709
    %v711 = vpop.f32.mrb[0].mxu0
    %712 = vdwg.mxu0
    %v714 = vsel %vm208, %v637, 0
    %716 = vmatprep.subr.mxu0 0.0
    %717 = vmatpush1.msra.mxu0 %v58
    %718 = vmatprep.subr.mxu0 0.0
    %719 = vmatpush1.msra.mxu0 %v59
    %720 = vmatprep.subr.mxu0 0.0
    %721 = vmatpush1.msra.mxu0 0.0
    %722 = vmatprep.subr.mxu0 0.0
    %723 = vmatpush1.msra.mxu0 0.0
    %724 = vmatprep.subr.mxu0 0.0
    %725 = vmatpush1.msra.mxu0 0.0
    %726 = vmatprep.subr.mxu0 0.0
    %727 = vmatpush1.msra.mxu0 0.0
    %728 = vmatprep.subr.mxu0 0.0
    %729 = vmatpush1.msra.mxu0 0.0
    %730 = vmatprep.subr.mxu0 0.0
    %731 = vmatpush1.msra.mxu0 0.0
    %732 = vmatprep.subr.mxu0 0.0
    %733 = vmatpush1.msra.mxu0 0.0
    %734 = vmatprep.subr.mxu0 0.0
    %735 = vmatpush1.msra.mxu0 0.0
    %736 = vmatprep.subr.mxu0 0.0
    %737 = vmatpush1.msra.mxu0 0.0
    %738 = vmatprep.subr.mxu0 0.0
    %739 = vmatpush1.msra.mxu0 0.0
    %740 = vmatprep.subr.mxu0 0.0
    %741 = vmatpush1.msra.mxu0 0.0
    %742 = vmatprep.subr.mxu0 0.0
    %743 = vmatpush1.msra.mxu0 0.0
    %744 = vmatprep.subr.mxu0 0.0
    %745 = vmatpush1.msra.mxu0 0.0
    %746 = vmatprep.subr.mxu0 0.0
    %747 = vmatpush1.msra.mxu0 0.0
    %748 = vmatprep.subr.mxu0 0.0
    %749 = vmatpush1.msra.mxu0 0.0
    %750 = vmatprep.subr.mxu0 0.0
    %751 = vmatpush1.msra.mxu0 0.0
    %752 = vmatprep.subr.mxu0 0.0
    %753 = vmatpush1.msra.mxu0 0.0
    %754 = vmatprep.subr.mxu0 0.0
    %755 = vmatpush1.msra.mxu0 0.0
    %756 = vmatprep.subr.mxu0 0.0
    %757 = vmatpush1.msra.mxu0 0.0
    %758 = vmatprep.subr.mxu0 0.0
    %759 = vmatpush1.msra.mxu0 0.0
    %760 = vmatprep.subr.mxu0 0.0
    %761 = vmatpush1.msra.mxu0 0.0
    %762 = vmatprep.subr.mxu0 0.0
    %763 = vmatpush1.msra.mxu0 0.0
    %764 = vmatprep.subr.mxu0 0.0
    %765 = vmatpush1.msra.mxu0 0.0
    %766 = vmatprep.subr.mxu0 0.0
    %767 = vmatpush1.msra.mxu0 0.0
    %768 = vmatprep.subr.mxu0 0.0
    %769 = vmatpush1.msra.mxu0 0.0
    %770 = vmatprep.subr.mxu0 0.0
    %771 = vmatpush1.msra.mxu0 0.0
    %772 = vmatprep.subr.mxu0 0.0
    %773 = vmatpush1.msra.mxu0 0.0
    %774 = vmatprep.subr.mxu0 0.0
    %775 = vmatpush1.msra.mxu0 0.0
    %776 = vmatprep.subr.mxu0 0.0
    %777 = vmatpush1.msra.mxu0 0.0
    %778 = vmatprep.subr.mxu0 0.0
    %779 = vmatpush1.msra.mxu0 0.0
    %780 = vmatprep.mubr.f32.mxu0 0.0
    %781 = vmatmul.mubr.f32.gmra.mrb[0].mxu0 %v714
    %v782 = vpop.f32.mrb[0].mxu0
    %v783 = vadd.f32 %v710, %v782
    %v784 = vpop.f32.mrb[0].mxu0
    %785 = vdwg.mxu0
    %v786 = vadd.f32 %v783, %v69
    %v787 = vmul.f32 %v786, 0.5
    %v788 = vtanh.pop %v787
    %v789 = vadd.f32 %v788, 1.0
    %v790 = vmul.f32 %v789, 0.5
    %v791 = vtanh.pop %v786
    %v792 = vmul.f32 %v790, %v298
    %794 = vrot.lane.b32.xlu0 %v791, 32
    %v795 = vpop.permute.xlu0 %794
    %v797 = vmul.f32 %v790, %v795
    %799 = vrot.lane.b32.xlu0 %v797, 32
    %v800 = vpop.permute.xlu0 %799
    %v802 = vadd.f32 %v792, %v800
    %v803 = vtanh.pop %v802
    %805 = vrot.lane.b32.xlu0 %v803, 32
    %v806 = vpop.permute.xlu0 %805
    %v808 = vmul.f32 %v790, %v806
    %810 = vrot.lane.b32.xlu0 %v298, 96
    %v811 = vpop.permute.xlu0 %810
    %v813 = vsel %vm134, %v811, %v802
    %v815 = vsel %vm306, %v813, 0
    %817 = vmatprep.subr.mxu0 0.0
    %818 = vmatpush1.msra.mxu0 %v71
    %819 = vmatprep.subr.mxu0 0.0
    %820 = vmatpush1.msra.mxu0 %v72
    %821 = vmatprep.subr.mxu0 0.0
    %822 = vmatpush1.msra.mxu0 %v73
    %823 = vmatprep.subr.mxu0 0.0
    %824 = vmatpush1.msra.mxu0 %v74
    %825 = vmatprep.subr.mxu0 0.0
    %826 = vmatpush1.msra.mxu0 %v75
    %827 = vmatprep.subr.mxu0 0.0
    %828 = vmatpush1.msra.mxu0 %v76
    %829 = vmatprep.subr.mxu0 0.0
    %830 = vmatpush1.msra.mxu0 %v77
    %831 = vmatprep.subr.mxu0 0.0
    %832 = vmatpush1.msra.mxu0 %v78
    %833 = vmatprep.subr.mxu0 0.0
    %834 = vmatpush1.msra.mxu0 0.0
    %835 = vmatprep.subr.mxu0 0.0
    %836 = vmatpush1.msra.mxu0 0.0
    %837 = vmatprep.subr.mxu0 0.0
    %838 = vmatpush1.msra.mxu0 0.0
    %839 = vmatprep.subr.mxu0 0.0
    %840 = vmatpush1.msra.mxu0 0.0
    %841 = vmatprep.subr.mxu0 0.0
    %842 = vmatpush1.msra.mxu0 0.0
    %843 = vmatprep.subr.mxu0 0.0
    %844 = vmatpush1.msra.mxu0 0.0
    %845 = vmatprep.subr.mxu0 0.0
    %846 = vmatpush1.msra.mxu0 0.0
    %847 = vmatprep.subr.mxu0 0.0
    %848 = vmatpush1.msra.mxu0 0.0
    %849 = vmatprep.subr.mxu0 0.0
    %850 = vmatpush1.msra.mxu0 0.0
    %851 = vmatprep.subr.mxu0 0.0
    %852 = vmatpush1.msra.mxu0 0.0
    %853 = vmatprep.subr.mxu0 0.0
    %854 = vmatpush1.msra.mxu0 0.0
    %855 = vmatprep.subr.mxu0 0.0
    %856 = vmatpush1.msra.mxu0 0.0
    %857 = vmatprep.subr.mxu0 0.0
    %858 = vmatpush1.msra.mxu0 0.0
    %859 = vmatprep.subr.mxu0 0.0
    %860 = vmatpush1.msra.mxu0 0.0
    %861 = vmatprep.subr.mxu0 0.0
    %862 = vmatpush1.msra.mxu0 0.0
    %863 = vmatprep.subr.mxu0 0.0
    %864 = vmatpush1.msra.mxu0 0.0
    %865 = vmatprep.subr.mxu0 0.0
    %866 = vmatpush1.msra.mxu0 0.0
    %867 = vmatprep.subr.mxu0 0.0
    %868 = vmatpush1.msra.mxu0 0.0
    %869 = vmatprep.subr.mxu0 0.0
    %870 = vmatpush1.msra.mxu0 0.0
    %871 = vmatprep.subr.mxu0 0.0
    %872 = vmatpush1.msra.mxu0 0.0
    %873 = vmatprep.subr.mxu0 0.0
    %874 = vmatpush1.msra.mxu0 0.0
    %875 = vmatprep.subr.mxu0 0.0
    %876 = vmatpush1.msra.mxu0 0.0
    %877 = vmatprep.subr.mxu0 0.0
    %878 = vmatpush1.msra.mxu0 0.0
    %879 = vmatprep.subr.mxu0 0.0
    %880 = vmatpush1.msra.mxu0 0.0
    %881 = vmatprep.mubr.f32.mxu0 0.0
    %882 = vmatmul.mubr.f32.gmra.mrb[0].mxu0 %v815
    %v883 = vpop.f32.mrb[0].mxu0
    %v884 = vadd.f32 %v84, %v883
    %v885 = vpop.f32.mrb[0].mxu0
    %886 = vdwg.mxu0
    %v887 = vmax.f32 %v884, 0.0
    %v889 = vsel %vm134, %v887, 0
    %891 = vmatprep.subr.mxu0 0.0
    %892 = vmatpush1.msra.mxu0 %v86
    %893 = vmatprep.subr.mxu0 0.0
    %894 = vmatpush1.msra.mxu0 %v87
    %895 = vmatprep.subr.mxu0 0.0
    %896 = vmatpush1.msra.mxu0 %v88
    %897 = vmatprep.subr.mxu0 0.0
    %898 = vmatpush1.msra.mxu0 %v89
    %899 = vmatprep.subr.mxu0 0.0
    %900 = vmatpush1.msra.mxu0 0.0
    %901 = vmatprep.subr.mxu0 0.0
    %902 = vmatpush1.msra.mxu0 0.0
    %903 = vmatprep.subr.mxu0 0.0
    %904 = vmatpush1.msra.mxu0 0.0
    %905 = vmatprep.subr.mxu0 0.0
    %906 = vmatpush1.msra.mxu0 0.0
    %907 = vmatprep.subr.mxu0 0.0
    %908 = vmatpush1.msra.mxu0 0.0
    %909 = vmatprep.subr.mxu0 0.0
    %910 = vmatpush1.msra.mxu0 0.0
    %911 = vmatprep.subr.mxu0 0.0
    %912 = vmatpush1.msra.mxu0 0.0
    %913 = vmatprep.subr.mxu0 0.0
    %914 = vmatpush1.msra.mxu0 0.0
    %915 = vmatprep.subr.mxu0 0.0
    %916 = vmatpush1.msra.mxu0 0.0
    %917 = vmatprep.subr.mxu0 0.0
    %918 = vmatpush1.msra.mxu0 0.0
    %919 = vmatprep.subr.mxu0 0.0
    %920 = vmatpush1.msra.mxu0 0.0
    %921 = vmatprep.subr.mxu0 0.0
    %922 = vmatpush1.msra.mxu0 0.0
    %923 = vmatprep.subr.mxu0 0.0
    %924 = vmatpush1.msra.mxu0 0.0
    %925 = vmatprep.subr.mxu0 0.0
    %926 = vmatpush1.msra.mxu0 0.0
    %927 = vmatprep.subr.mxu0 0.0
    %928 = vmatpush1.msra.mxu0 0.0
    %929 = vmatprep.subr.mxu0 0.0
    %930 = vmatpush1.msra.mxu0 0.0
    %931 = vmatprep.subr.mxu0 0.0
    %932 = vmatpush1.msra.mxu0 0.0
    %933 = vmatprep.subr.mxu0 0.0
    %934 = vmatpush1.msra.mxu0 0.0
    %935 = vmatprep.subr.mxu0 0.0
    %936 = vmatpush1.msra.mxu0 0.0
    %937 = vmatprep.subr.mxu0 0.0
    %938 = vmatpush1.msra.mxu0 0.0
    %939 = vmatprep.subr.mxu0 0.0
    %940 = vmatpush1.msra.mxu0 0.0
    %941 = vmatprep.subr.mxu0 0.0
    %942 = vmatpush1.msra.mxu0 0.0
    %943 = vmatprep.subr.mxu0 0.0
    %944 = vmatpush1.msra.mxu0 0.0
    %945 = vmatprep.subr.mxu0 0.0
    %946 = vmatpush1.msra.mxu0 0.0
    %947 = vmatprep.subr.mxu0 0.0
    %948 = vmatpush1.msra.mxu0 0.0
    %949 = vmatprep.subr.mxu0 0.0
    %950 = vmatpush1.msra.mxu0 0.0
    %951 = vmatprep.subr.mxu0 0.0
    %952 = vmatpush1.msra.mxu0 0.0
    %953 = vmatprep.subr.mxu0 0.0
    %954 = vmatpush1.msra.mxu0 0.0
    %955 = vmatprep.mubr.f32.mxu0 0.0
    %956 = vmatmul.mubr.f32.gmra.mrb[0].mxu0 %v889
    %v957 = vpop.f32.mrb[0].mxu0
    %v958 = vadd.f32 %v95, %v957
    %v959 = vpop.f32.mrb[0].mxu0
    %960 = vdwg.mxu0
    %v961 = vsel %vm454, %v958, -inf
    %962 = vmax.xlane.f32.xlu0 %v961
    %v963 = vpop.xlane.xlu0 %962
    %v964 = vsub.f32 %v958, %v963
    %v965 = vmul.f32 %v964, 1.442695
    %v966 = vpow.pop %v965
    %v967 = vsel %vm454, %v966, 0.0
    %968 = vadd.xlane.f32.xlu0 %v967
    %v969 = vpop.xlane.xlu0 %968
    %v970 = vrcp.pop %v969
    %v971 = vmul.f32 %v969, %v970
    %v972 = vsub.f32 2.0, %v971
    %v973 = vmul.f32 %v970, %v972
    %v974 = vmul.f32 %v966, %v973
    %v975 = vmul.f32 %v974, %v813
    %977 = vrot.lane.b32.xlu0 %v635, 48
    %v978 = vpop.permute.xlu0 %977
    %v980 = vsel %vm306, %v975, %v978
    %v982 = vsel %vm471, %v980, 0
    %984 = vmatprep.subr.mxu0 0.0
    %985 = vmatpush1.msra.mxu0 %v97
    %986 = vmatprep.subr.mxu0 0.0
    %987 = vmatpush1.msra.mxu0 %v98
    %988 = vmatprep.subr.mxu0 0.0
    %989 = vmatpush1.msra.mxu0 %v99
    %990 = vmatprep.subr.mxu0 0.0
    %991 = vmatpush1.msra.mxu0 %v100
    %992 = vmatprep.subr.mxu0 0.0
    %993 = vmatpush1.msra.mxu0 %v101
    %994 = vmatprep.subr.mxu0 0.0
    %995 = vmatpush1.msra.mxu0 %v102
    %996 = vmatprep.subr.mxu0 0.0
    %997 = vmatpush1.msra.mxu0 %v103
    %998 = vmatprep.subr.mxu0 0.0
    %999 = vmatpush1.msra.mxu0 %v104
    %1000 = vmatprep.subr.mxu0 0.0
    %1001 = vmatpush1.msra.mxu0 %v105
    %1002 = vmatprep.subr.mxu0 0.0
    %1003 = vmatpush1.msra.mxu0 %v106
    %1004 = vmatprep.subr.mxu0 0.0
    %1005 = vmatpush1.msra.mxu0 0.0
    %1006 = vmatprep.subr.mxu0 0.0
    %1007 = vmatpush1.msra.mxu0 0.0
    %1008 = vmatprep.subr.mxu0 0.0
    %1009 = vmatpush1.msra.mxu0 0.0
    %1010 = vmatprep.subr.mxu0 0.0
    %1011 = vmatpush1.msra.mxu0 0.0
    %1012 = vmatprep.subr.mxu0 0.0
    %1013 = vmatpush1.msra.mxu0 0.0
    %1014 = vmatprep.subr.mxu0 0.0
    %1015 = vmatpush1.msra.mxu0 0.0
    %1016 = vmatprep.subr.mxu0 0.0
    %1017 = vmatpush1.msra.mxu0 0.0
    %1018 = vmatprep.subr.mxu0 0.0
    %1019 = vmatpush1.msra.mxu0 0.0
    %1020 = vmatprep.subr.mxu0 0.0
    %1021 = vmatpush1.msra.mxu0 0.0
    %1022 = vmatprep.subr.mxu0 0.0
    %1023 = vmatpush1.msra.mxu0 0.0
    %1024 = vmatprep.subr.mxu0 0.0
    %1025 = vmatpush1.msra.mxu0 0.0
    %1026 = vmatprep.subr.mxu0 0.0
    %1027 = vmatpush1.msra.mxu0 0.0
    %1028 = vmatprep.subr.mxu0 0.0
    %1029 = vmatpush1.msra.mxu0 0.0
    %1030 = vmatprep.subr.mxu0 0.0
    %1031 = vmatpush1.msra.mxu0 0.0
    %1032 = vmatprep.subr.mxu0 0.0
    %1033 = vmatpush1.msra.mxu0 0.0
    %1034 = vmatprep.subr.mxu0 0.0
    %1035 = vmatpush1.msra.mxu0 0.0
    %1036 = vmatprep.subr.mxu0 0.0
    %1037 = vmatpush1.msra.mxu0 0.0
    %1038 = vmatprep.subr.mxu0 0.0
    %1039 = vmatpush1.msra.mxu0 0.0
    %1040 = vmatprep.subr.mxu0 0.0
    %1041 = vmatpush1.msra.mxu0 0.0
    %1042 = vmatprep.subr.mxu0 0.0
    %1043 = vmatpush1.msra.mxu0 0.0
    %1044 = vmatprep.subr.mxu0 0.0
    %1045 = vmatpush1.msra.mxu0 0.0
    %1046 = vmatprep.subr.mxu0 0.0
    %1047 = vmatpush1.msra.mxu0 0.0
    %1048 = vmatprep.mubr.f32.mxu0 0.0
    %1049 = vmatmul.mubr.f32.gmra.mrb[0].mxu0 %v982
    %v1050 = vpop.f32.mrb[0].mxu0
    %v1051 = vadd.f32 %v112, %v1050
    %v1052 = vpop.f32.mrb[0].mxu0
    %1053 = vdwg.mxu0
    %v1054 = vmax.f32 %v1051, 0.0
    %v1056 = vsel %vm546, %v1054, 0
    %1058 = vmatprep.subr.mxu0 0.0
    %1059 = vmatpush1.msra.mxu0 %v114
    %1060 = vmatprep.subr.mxu0 0.0
    %1061 = vmatpush1.msra.mxu0 %v115
    %1062 = vmatprep.subr.mxu0 0.0
    %1063 = vmatpush1.msra.mxu0 %v116
    %1064 = vmatprep.subr.mxu0 0.0
    %1065 = vmatpush1.msra.mxu0 %v117
    %1066 = vmatprep.subr.mxu0 0.0
    %1067 = vmatpush1.msra.mxu0 %v118
    %1068 = vmatprep.subr.mxu0 0.0
    %1069 = vmatpush1.msra.mxu0 %v119
    %1070 = vmatprep.subr.mxu0 0.0
    %1071 = vmatpush1.msra.mxu0 %v120
    %1072 = vmatprep.subr.mxu0 0.0
    %1073 = vmatpush1.msra.mxu0 %v121
    %1074 = vmatprep.subr.mxu0 0.0
    %1075 = vmatpush1.msra.mxu0 %v122
    %1076 = vmatprep.subr.mxu0 0.0
    %1077 = vmatpush1.msra.mxu0 %v123
    %1078 = vmatprep.subr.mxu0 0.0
    %1079 = vmatpush1.msra.mxu0 %v124
    %1080 = vmatprep.subr.mxu0 0.0
    %1081 = vmatpush1.msra.mxu0 %v125
    %1082 = vmatprep.subr.mxu0 0.0
    %1083 = vmatpush1.msra.mxu0 0.0
    %1084 = vmatprep.subr.mxu0 0.0
    %1085 = vmatpush1.msra.mxu0 0.0
    %1086 = vmatprep.subr.mxu0 0.0
    %1087 = vmatpush1.msra.mxu0 0.0
    %1088 = vmatprep.subr.mxu0 0.0
    %1089 = vmatpush1.msra.mxu0 0.0
    %1090 = vmatprep.subr.mxu0 0.0
    %1091 = vmatpush1.msra.mxu0 0.0
    %1092 = vmatprep.subr.mxu0 0.0
    %1093 = vmatpush1.msra.mxu0 0.0
    %1094 = vmatprep.subr.mxu0 0.0
    %1095 = vmatpush1.msra.mxu0 0.0
    %1096 = vmatprep.subr.mxu0 0.0
    %1097 = vmatpush1.msra.mxu0 0.0
    %1098 = vmatprep.subr.mxu0 0.0
    %1099 = vmatpush1.msra.mxu0 0.0
    %1100 = vmatprep.subr.mxu0 0.0
    %1101 = vmatpush1.msra.mxu0 0.0
    %1102 = vmatprep.subr.mxu0 0.0
    %1103 = vmatpush1.msra.mxu0 0.0
    %1104 = vmatprep.subr.mxu0 0.0
    %1105 = vmatpush1.msra.mxu0 0.0
    %1106 = vmatprep.subr.mxu0 0.0
    %1107 = vmatpush1.msra.mxu0 0.0
    %1108 = vmatprep.subr.mxu0 0.0
    %1109 = vmatpush1.msra.mxu0 0.0
    %1110 = vmatprep.subr.mxu0 0.0
    %1111 = vmatpush1.msra.mxu0 0.0
    %1112 = vmatprep.subr.mxu0 0.0
    %1113 = vmatpush1.msra.mxu0 0.0
    %1114 = vmatprep.subr.mxu0 0.0
    %1115 = vmatpush1.msra.mxu0 0.0
    %1116 = vmatprep.subr.mxu0 0.0
    %1117 = vmatpush1.msra.mxu0 0.0
    %1118 = vmatprep.subr.mxu0 0.0
    %1119 = vmatpush1.msra.mxu0 0.0
    %1120 = vmatprep.subr.mxu0 0.0
    %1121 = vmatpush1.msra.mxu0 0.0
    %1122 = vmatprep.mubr.f32.mxu0 0.0
    %1123 = vmatmul.mubr.f32.gmra.mrb[0].mxu0 %v1056
    %v1124 = vpop.f32.mrb[0].mxu0
    %v1125 = vadd.f32 %v131, %v1124
    %v1126 = vpop.f32.mrb[0].mxu0
    %1127 = vdwg.mxu0
    %v1128 = vtanh.pop %v1125
    %v1129 = vmul.f32 %v1125, 0.5
    %v1130 = vtanh.pop %v1129
    %v1131 = vadd.f32 %v1130, 1.0
    %v1132 = vmul.f32 %v1131, 0.5
    %v1133 = vmul.f32 %v1132, %v635
    %1135 = vrot.lane.b32.xlu0 %v1128, 32
    %v1136 = vpop.permute.xlu0 %1135
    %v1138 = vmul.f32 %v1132, %v1136
    %1140 = vrot.lane.b32.xlu0 %v1138, 112
    %v1141 = vpop.permute.xlu0 %1140
    %v1143 = vadd.f32 %v1133, %v1141
    %s1144 = scalar_lea.vmem %s0, 4
    %v1145 = vld [vmem:[%s1144] sm:$0x3]
    %1147 = vrot.lane.b32.xlu0 %v808, 64
    %v1148 = vpop.permute.xlu0 %1147
    %v1149 = vsel %vm134, %v1148, 0
    %1151 = vmatprep.subr.mxu0 0.0
    %1152 = vmatpush1.msra.mxu0 %v60
    %1153 = vmatprep.subr.mxu0 0.0
    %1154 = vmatpush1.msra.mxu0 %v61
    %1155 = vmatprep.subr.mxu0 0.0
    %1156 = vmatpush1.msra.mxu0 %v62
    %1157 = vmatprep.subr.mxu0 0.0
    %1158 = vmatpush1.msra.mxu0 %v63
    %1159 = vmatprep.subr.mxu0 0.0
    %1160 = vmatpush1.msra.mxu0 0.0
    %1161 = vmatprep.subr.mxu0 0.0
    %1162 = vmatpush1.msra.mxu0 0.0
    %1163 = vmatprep.subr.mxu0 0.0
    %1164 = vmatpush1.msra.mxu0 0.0
    %1165 = vmatprep.subr.mxu0 0.0
    %1166 = vmatpush1.msra.mxu0 0.0
    %1167 = vmatprep.subr.mxu0 0.0
    %1168 = vmatpush1.msra.mxu0 0.0
    %1169 = vmatprep.subr.mxu0 0.0
    %1170 = vmatpush1.msra.mxu0 0.0
    %1171 = vmatprep.subr.mxu0 0.0
    %1172 = vmatpush1.msra.mxu0 0.0
    %1173 = vmatprep.subr.mxu0 0.0
    %1174 = vmatpush1.msra.mxu0 0.0
    %1175 = vmatprep.subr.mxu0 0.0
    %1176 = vmatpush1.msra.mxu0 0.0
    %1177 = vmatprep.subr.mxu0 0.0
    %1178 = vmatpush1.msra.mxu0 0.0
    %1179 = vmatprep.subr.mxu0 0.0
    %1180 = vmatpush1.msra.mxu0 0.0
    %1181 = vmatprep.subr.mxu0 0.0
    %1182 = vmatpush1.msra.mxu0 0.0
    %1183 = vmatprep.subr.mxu0 0.0
    %1184 = vmatpush1.msra.mxu0 0.0
    %1185 = vmatprep.subr.mxu0 0.0
    %1186 = vmatpush1.msra.mxu0 0.0
    %1187 = vmatprep.subr.mxu0 0.0
    %1188 = vmatpush1.msra.mxu0 0.0
    %1189 = vmatprep.subr.mxu0 0.0
    %1190 = vmatpush1.msra.mxu0 0.0
    %1191 = vmatprep.subr.mxu0 0.0
    %1192 = vmatpush1.msra.mxu0 0.0
    %1193 = vmatprep.subr.mxu0 0.0
    %1194 = vmatpush1.msra.mxu0 0.0
    %1195 = vmatprep.subr.mxu0 0.0
    %1196 = vmatpush1.msra.mxu0 0.0
    %1197 = vmatprep.subr.mxu0 0.0
    %1198 = vmatpush1.msra.mxu0 0.0
    %1199 = vmatprep.subr.mxu0 0.0
    %1200 = vmatpush1.msra.mxu0 0.0
    %1201 = vmatprep.subr.mxu0 0.0
    %1202 = vmatpush1.msra.mxu0 0.0
    %1203 = vmatprep.subr.mxu0 0.0
    %1204 = vmatpush1.msra.mxu0 0.0
    %1205 = vmatprep.subr.mxu0 0.0
    %1206 = vmatpush1.msra.mxu0 0.0
    %1207 = vmatprep.subr.mxu0 0.0
    %1208 = vmatpush1.msra.mxu0 0.0
    %1209 = vmatprep.subr.mxu0 0.0
    %1210 = vmatpush1.msra.mxu0 0.0
    %1211 = vmatprep.subr.mxu0 0.0
    %1212 = vmatpush1.msra.mxu0 0.0
    %1213 = vmatprep.subr.mxu0 0.0
    %1214 = vmatpush1.msra.mxu0 0.0
    %1215 = vmatprep.mubr.f32.mxu0 0.0
    %1216 = vmatmul.mubr.f32.gmra.mrb[0].mxu0 %v1149
    %v1217 = vpop.f32.mrb[0].mxu0
    %v1218 = vadd.f32 0.0, %v1217
    %v1219 = vpop.f32.mrb[0].mxu0
    %1220 = vdwg.mxu0
    %v1222 = vsel %vm208, %v1145, 0
    %1224 = vmatprep.subr.mxu0 0.0
    %1225 = vmatpush1.msra.mxu0 %v58
    %1226 = vmatprep.subr.mxu0 0.0
    %1227 = vmatpush1.msra.mxu0 %v59
    %1228 = vmatprep.subr.mxu0 0.0
    %1229 = vmatpush1.msra.mxu0 0.0
    %1230 = vmatprep.subr.mxu0 0.0
    %1231 = vmatpush1.msra.mxu0 0.0
    %1232 = vmatprep.subr.mxu0 0.0
    %1233 = vmatpush1.msra.mxu0 0.0
    %1234 = vmatprep.subr.mxu0 0.0
    %1235 = vmatpush1.msra.mxu0 0.0
    %1236 = vmatprep.subr.mxu0 0.0
    %1237 = vmatpush1.msra.mxu0 0.0
    %1238 = vmatprep.subr.mxu0 0.0
    %1239 = vmatpush1.msra.mxu0 0.0
    %1240 = vmatprep.subr.mxu0 0.0
    %1241 = vmatpush1.msra.mxu0 0.0
    %1242 = vmatprep.subr.mxu0 0.0
    %1243 = vmatpush1.msra.mxu0 0.0
    %1244 = vmatprep.subr.mxu0 0.0
    %1245 = vmatpush1.msra.mxu0 0.0
    %1246 = vmatprep.subr.mxu0 0.0
    %1247 = vmatpush1.msra.mxu0 0.0
    %1248 = vmatprep.subr.mxu0 0.0
    %1249 = vmatpush1.msra.mxu0 0.0
    %1250 = vmatprep.subr.mxu0 0.0
    %1251 = vmatpush1.msra.mxu0 0.0
    %1252 = vmatprep.subr.mxu0 0.0
    %1253 = vmatpush1.msra.mxu0 0.0
    %1254 = vmatprep.subr.mxu0 0.0
    %1255 = vmatpush1.msra.mxu0 0.0
    %1256 = vmatprep.subr.mxu0 0.0
    %1257 = vmatpush1.msra.mxu0 0.0
    %1258 = vmatprep.subr.mxu0 0.0
    %1259 = vmatpush1.msra.mxu0 0.0
    %1260 = vmatprep.subr.mxu0 0.0
    %1261 = vmatpush1.msra.mxu0 0.0
    %1262 = vmatprep.subr.mxu0 0.0
    %1263 = vmatpush1.msra.mxu0 0.0
    %1264 = vmatprep.subr.mxu0 0.0
    %1265 = vmatpush1.msra.mxu0 0.0
    %1266 = vmatprep.subr.mxu0 0.0
    %1267 = vmatpush1.msra.mxu0 0.0
    %1268 = vmatprep.subr.mxu0 0.0
    %1269 = vmatpush1.msra.mxu0 0.0
    %1270 = vmatprep.subr.mxu0 0.0
    %1271 = vmatpush1.msra.mxu0 0.0
    %1272 = vmatprep.subr.mxu0 0.0
    %1273 = vmatpush1.msra.mxu0 0.0
    %1274 = vmatprep.subr.mxu0 0.0
    %1275 = vmatpush1.msra.mxu0 0.0
    %1276 = vmatprep.subr.mxu0 0.0
    %1277 = vmatpush1.msra.mxu0 0.0
    %1278 = vmatprep.subr.mxu0 0.0
    %1279 = vmatpush1.msra.mxu0 0.0
    %1280 = vmatprep.subr.mxu0 0.0
    %1281 = vmatpush1.msra.mxu0 0.0
    %1282 = vmatprep.subr.mxu0 0.0
    %1283 = vmatpush1.msra.mxu0 0.0
    %1284 = vmatprep.subr.mxu0 0.0
    %1285 = vmatpush1.msra.mxu0 0.0
    %1286 = vmatprep.subr.mxu0 0.0
    %1287 = vmatpush1.msra.mxu0 0.0
    %1288 = vmatprep.mubr.f32.mxu0 0.0
    %1289 = vmatmul.mubr.f32.gmra.mrb[0].mxu0 %v1222
    %v1290 = vpop.f32.mrb[0].mxu0
    %v1291 = vadd.f32 %v1218, %v1290
    %v1292 = vpop.f32.mrb[0].mxu0
    %1293 = vdwg.mxu0
    %v1294 = vadd.f32 %v1291, %v69
    %v1295 = vmul.f32 %v1294, 0.5
    %v1296 = vtanh.pop %v1295
    %v1297 = vadd.f32 %v1296, 1.0
    %v1298 = vmul.f32 %v1297, 0.5
    %v1299 = vtanh.pop %v1294
    %v1300 = vmul.f32 %v1298, %v802
    %1302 = vrot.lane.b32.xlu0 %v1299, 32
    %v1303 = vpop.permute.xlu0 %1302
    %v1305 = vmul.f32 %v1298, %v1303
    %1307 = vrot.lane.b32.xlu0 %v1305, 32
    %v1308 = vpop.permute.xlu0 %1307
    %v1310 = vadd.f32 %v1300, %v1308
    %v1311 = vtanh.pop %v1310
    %1313 = vrot.lane.b32.xlu0 %v1311, 32
    %v1314 = vpop.permute.xlu0 %1313
    %v1316 = vmul.f32 %v1298, %v1314
    %1318 = vrot.lane.b32.xlu0 %v802, 96
    %v1319 = vpop.permute.xlu0 %1318
    %v1321 = vsel %vm134, %v1319, %v1310
    %v1323 = vsel %vm306, %v1321, 0
    %1325 = vmatprep.subr.mxu0 0.0
    %1326 = vmatpush1.msra.mxu0 %v71
    %1327 = vmatprep.subr.mxu0 0.0
    %1328 = vmatpush1.msra.mxu0 %v72
    %1329 = vmatprep.subr.mxu0 0.0
    %1330 = vmatpush1.msra.mxu0 %v73
    %1331 = vmatprep.subr.mxu0 0.0
    %1332 = vmatpush1.msra.mxu0 %v74
    %1333 = vmatprep.subr.mxu0 0.0
    %1334 = vmatpush1.msra.mxu0 %v75
    %1335 = vmatprep.subr.mxu0 0.0
    %1336 = vmatpush1.msra.mxu0 %v76
    %1337 = vmatprep.subr.mxu0 0.0
    %1338 = vmatpush1.msra.mxu0 %v77
    %1339 = vmatprep.subr.mxu0 0.0
    %1340 = vmatpush1.msra.mxu0 %v78
    %1341 = vmatprep.subr.mxu0 0.0
    %1342 = vmatpush1.msra.mxu0 0.0
    %1343 = vmatprep.subr.mxu0 0.0
    %1344 = vmatpush1.msra.mxu0 0.0
    %1345 = vmatprep.subr.mxu0 0.0
    %1346 = vmatpush1.msra.mxu0 0.0
    %1347 = vmatprep.subr.mxu0 0.0
    %1348 = vmatpush1.msra.mxu0 0.0
    %1349 = vmatprep.subr.mxu0 0.0
    %1350 = vmatpush1.msra.mxu0 0.0
    %1351 = vmatprep.subr.mxu0 0.0
    %1352 = vmatpush1.msra.mxu0 0.0
    %1353 = vmatprep.subr.mxu0 0.0
    %1354 = vmatpush1.msra.mxu0 0.0
    %1355 = vmatprep.subr.mxu0 0.0
    %1356 = vmatpush1.msra.mxu0 0.0
    %1357 = vmatprep.subr.mxu0 0.0
    %1358 = vmatpush1.msra.mxu0 0.0
    %1359 = vmatprep.subr.mxu0 0.0
    %1360 = vmatpush1.msra.mxu0 0.0
    %1361 = vmatprep.subr.mxu0 0.0
    %1362 = vmatpush1.msra.mxu0 0.0
    %1363 = vmatprep.subr.mxu0 0.0
    %1364 = vmatpush1.msra.mxu0 0.0
    %1365 = vmatprep.subr.mxu0 0.0
    %1366 = vmatpush1.msra.mxu0 0.0
    %1367 = vmatprep.subr.mxu0 0.0
    %1368 = vmatpush1.msra.mxu0 0.0
    %1369 = vmatprep.subr.mxu0 0.0
    %1370 = vmatpush1.msra.mxu0 0.0
    %1371 = vmatprep.subr.mxu0 0.0
    %1372 = vmatpush1.msra.mxu0 0.0
    %1373 = vmatprep.subr.mxu0 0.0
    %1374 = vmatpush1.msra.mxu0 0.0
    %1375 = vmatprep.subr.mxu0 0.0
    %1376 = vmatpush1.msra.mxu0 0.0
    %1377 = vmatprep.subr.mxu0 0.0
    %1378 = vmatpush1.msra.mxu0 0.0
    %1379 = vmatprep.subr.mxu0 0.0
    %1380 = vmatpush1.msra.mxu0 0.0
    %1381 = vmatprep.subr.mxu0 0.0
    %1382 = vmatpush1.msra.mxu0 0.0
    %1383 = vmatprep.subr.mxu0 0.0
    %1384 = vmatpush1.msra.mxu0 0.0
    %1385 = vmatprep.subr.mxu0 0.0
    %1386 = vmatpush1.msra.mxu0 0.0
    %1387 = vmatprep.subr.mxu0 0.0
    %1388 = vmatpush1.msra.mxu0 0.0
    %1389 = vmatprep.mubr.f32.mxu0 0.0
    %1390 = vmatmul.mubr.f32.gmra.mrb[0].mxu0 %v1323
    %v1391 = vpop.f32.mrb[0].mxu0
    %v1392 = vadd.f32 %v84, %v1391
    %v1393 = vpop.f32.mrb[0].mxu0
    %1394 = vdwg.mxu0
    %v1395 = vmax.f32 %v1392, 0.0
    %v1397 = vsel %vm134, %v1395, 0
    %1399 = vmatprep.subr.mxu0 0.0
    %1400 = vmatpush1.msra.mxu0 %v86
    %1401 = vmatprep.subr.mxu0 0.0
    %1402 = vmatpush1.msra.mxu0 %v87
    %1403 = vmatprep.subr.mxu0 0.0
    %1404 = vmatpush1.msra.mxu0 %v88
    %1405 = vmatprep.subr.mxu0 0.0
    %1406 = vmatpush1.msra.mxu0 %v89
    %1407 = vmatprep.subr.mxu0 0.0
    %1408 = vmatpush1.msra.mxu0 0.0
    %1409 = vmatprep.subr.mxu0 0.0
    %1410 = vmatpush1.msra.mxu0 0.0
    %1411 = vmatprep.subr.mxu0 0.0
    %1412 = vmatpush1.msra.mxu0 0.0
    %1413 = vmatprep.subr.mxu0 0.0
    %1414 = vmatpush1.msra.mxu0 0.0
    %1415 = vmatprep.subr.mxu0 0.0
    %1416 = vmatpush1.msra.mxu0 0.0
    %1417 = vmatprep.subr.mxu0 0.0
    %1418 = vmatpush1.msra.mxu0 0.0
    %1419 = vmatprep.subr.mxu0 0.0
    %1420 = vmatpush1.msra.mxu0 0.0
    %1421 = vmatprep.subr.mxu0 0.0
    %1422 = vmatpush1.msra.mxu0 0.0
    %1423 = vmatprep.subr.mxu0 0.0
    %1424 = vmatpush1.msra.mxu0 0.0
    %1425 = vmatprep.subr.mxu0 0.0
    %1426 = vmatpush1.msra.mxu0 0.0
    %1427 = vmatprep.subr.mxu0 0.0
    %1428 = vmatpush1.msra.mxu0 0.0
    %1429 = vmatprep.subr.mxu0 0.0
    %1430 = vmatpush1.msra.mxu0 0.0
    %1431 = vmatprep.subr.mxu0 0.0
    %1432 = vmatpush1.msra.mxu0 0.0
    %1433 = vmatprep.subr.mxu0 0.0
    %1434 = vmatpush1.msra.mxu0 0.0
    %1435 = vmatprep.subr.mxu0 0.0
    %1436 = vmatpush1.msra.mxu0 0.0
    %1437 = vmatprep.subr.mxu0 0.0
    %1438 = vmatpush1.msra.mxu0 0.0
    %1439 = vmatprep.subr.mxu0 0.0
    %1440 = vmatpush1.msra.mxu0 0.0
    %1441 = vmatprep.subr.mxu0 0.0
    %1442 = vmatpush1.msra.mxu0 0.0
    %1443 = vmatprep.subr.mxu0 0.0
    %1444 = vmatpush1.msra.mxu0 0.0
    %1445 = vmatprep.subr.mxu0 0.0
    %1446 = vmatpush1.msra.mxu0 0.0
    %1447 = vmatprep.subr.mxu0 0.0
    %1448 = vmatpush1.msra.mxu0 0.0
    %1449 = vmatprep.subr.mxu0 0.0
    %1450 = vmatpush1.msra.mxu0 0.0
    %1451 = vmatprep.subr.mxu0 0.0
    %1452 = vmatpush1.msra.mxu0 0.0
    %1453 = vmatprep.subr.mxu0 0.0
    %1454 = vmatpush1.msra.mxu0 0.0
    %1455 = vmatprep.subr.mxu0 0.0
    %1456 = vmatpush1.msra.mxu0 0.0
    %1457 = vmatprep.subr.mxu0 0.0
    %1458 = vmatpush1.msra.mxu0 0.0
    %1459 = vmatprep.subr.mxu0 0.0
    %1460 = vmatpush1.msra.mxu0 0.0
    %1461 = vmatprep.subr.mxu0 0.0
    %1462 = vmatpush1.msra.mxu0 0.0
    %1463 = vmatprep.mubr.f32.mxu0 0.0
    %1464 = vmatmul.mubr.f32.gmra.mrb[0].mxu0 %v1397
    %v1465 = vpop.f32.mrb[0].mxu0
    %v1466 = vadd.f32 %v95, %v1465
    %v1467 = vpop.f32.mrb[0].mxu0
    %1468 = vdwg.mxu0
    %v1469 = vsel %vm454, %v1466, -inf
    %1470 = vmax.xlane.f32.xlu0 %v1469
    %v1471 = vpop.xlane.xlu0 %1470
    %v1472 = vsub.f32 %v1466, %v1471
    %v1473 = vmul.f32 %v1472, 1.442695
    %v1474 = vpow.pop %v1473
    %v1475 = vsel %vm454, %v1474, 0.0
    %1476 = vadd.xlane.f32.xlu0 %v1475
    %v1477 = vpop.xlane.xlu0 %1476
    %v1478 = vrcp.pop %v1477
    %v1479 = vmul.f32 %v1477, %v1478
    %v1480 = vsub.f32 2.0, %v1479
    %v1481 = vmul.f32 %v1478, %v1480
    %v1482 = vmul.f32 %v1474, %v1481
    %v1483 = vmul.f32 %v1482, %v1321
    %1485 = vrot.lane.b32.xlu0 %v1143, 48
    %v1486 = vpop.permute.xlu0 %1485
    %v1488 = vsel %vm306, %v1483, %v1486
    %v1490 = vsel %vm471, %v1488, 0
    %1492 = vmatprep.subr.mxu0 0.0
    %1493 = vmatpush1.msra.mxu0 %v97
    %1494 = vmatprep.subr.mxu0 0.0
    %1495 = vmatpush1.msra.mxu0 %v98
    %1496 = vmatprep.subr.mxu0 0.0
    %1497 = vmatpush1.msra.mxu0 %v99
    %1498 = vmatprep.subr.mxu0 0.0
    %1499 = vmatpush1.msra.mxu0 %v100
    %1500 = vmatprep.subr.mxu0 0.0
    %1501 = vmatpush1.msra.mxu0 %v101
    %1502 = vmatprep.subr.mxu0 0.0
    %1503 = vmatpush1.msra.mxu0 %v102
    %1504 = vmatprep.subr.mxu0 0.0
    %1505 = vmatpush1.msra.mxu0 %v103
    %1506 = vmatprep.subr.mxu0 0.0
    %1507 = vmatpush1.msra.mxu0 %v104
    %1508 = vmatprep.subr.mxu0 0.0
    %1509 = vmatpush1.msra.mxu0 %v105
    %1510 = vmatprep.subr.mxu0 0.0
    %1511 = vmatpush1.msra.mxu0 %v106
    %1512 = vmatprep.subr.mxu0 0.0
    %1513 = vmatpush1.msra.mxu0 0.0
    %1514 = vmatprep.subr.mxu0 0.0
    %1515 = vmatpush1.msra.mxu0 0.0
    %1516 = vmatprep.subr.mxu0 0.0
    %1517 = vmatpush1.msra.mxu0 0.0
    %1518 = vmatprep.subr.mxu0 0.0
    %1519 = vmatpush1.msra.mxu0 0.0
    %1520 = vmatprep.subr.mxu0 0.0
    %1521 = vmatpush1.msra.mxu0 0.0
    %1522 = vmatprep.subr.mxu0 0.0
    %1523 = vmatpush1.msra.mxu0 0.0
    %1524 = vmatprep.subr.mxu0 0.0
    %1525 = vmatpush1.msra.mxu0 0.0
    %1526 = vmatprep.subr.mxu0 0.0
    %1527 = vmatpush1.msra.mxu0 0.0
    %1528 = vmatprep.subr.mxu0 0.0
    %1529 = vmatpush1.msra.mxu0 0.0
    %1530 = vmatprep.subr.mxu0 0.0
    %1531 = vmatpush1.msra.mxu0 0.0
    %1532 = vmatprep.subr.mxu0 0.0
    %1533 = vmatpush1.msra.mxu0 0.0
    %1534 = vmatprep.subr.mxu0 0.0
    %1535 = vmatpush1.msra.mxu0 0.0
    %1536 = vmatprep.subr.mxu0 0.0
    %1537 = vmatpush1.msra.mxu0 0.0
    %1538 = vmatprep.subr.mxu0 0.0
    %1539 = vmatpush1.msra.mxu0 0.0
    %1540 = vmatprep.subr.mxu0 0.0
    %1541 = vmatpush1.msra.mxu0 0.0
    %1542 = vmatprep.subr.mxu0 0.0
    %1543 = vmatpush1.msra.mxu0 0.0
    %1544 = vmatprep.subr.mxu0 0.0
    %1545 = vmatpush1.msra.mxu0 0.0
    %1546 = vmatprep.subr.mxu0 0.0
    %1547 = vmatpush1.msra.mxu0 0.0
    %1548 = vmatprep.subr.mxu0 0.0
    %1549 = vmatpush1.msra.mxu0 0.0
    %1550 = vmatprep.subr.mxu0 0.0
    %1551 = vmatpush1.msra.mxu0 0.0
    %1552 = vmatprep.subr.mxu0 0.0
    %1553 = vmatpush1.msra.mxu0 0.0
    %1554 = vmatprep.subr.mxu0 0.0
    %1555 = vmatpush1.msra.mxu0 0.0
    %1556 = vmatprep.mubr.f32.mxu0 0.0
    %1557 = vmatmul.mubr.f32.gmra.mrb[0].mxu0 %v1490
    %v1558 = vpop.f32.mrb[0].mxu0
    %v1559 = vadd.f32 %v112, %v1558
    %v1560 = vpop.f32.mrb[0].mxu0
    %1561 = vdwg.mxu0
    %v1562 = vmax.f32 %v1559, 0.0
    %v1564 = vsel %vm546, %v1562, 0
    %1566 = vmatprep.subr.mxu0 0.0
    %1567 = vmatpush1.msra.mxu0 %v114
    %1568 = vmatprep.subr.mxu0 0.0
    %1569 = vmatpush1.msra.mxu0 %v115
    %1570 = vmatprep.subr.mxu0 0.0
    %1571 = vmatpush1.msra.mxu0 %v116
    %1572 = vmatprep.subr.mxu0 0.0
    %1573 = vmatpush1.msra.mxu0 %v117
    %1574 = vmatprep.subr.mxu0 0.0
    %1575 = vmatpush1.msra.mxu0 %v118
    %1576 = vmatprep.subr.mxu0 0.0
    %1577 = vmatpush1.msra.mxu0 %v119
    %1578 = vmatprep.subr.mxu0 0.0
    %1579 = vmatpush1.msra.mxu0 %v120
    %1580 = vmatprep.subr.mxu0 0.0
    %1581 = vmatpush1.msra.mxu0 %v121
    %1582 = vmatprep.subr.mxu0 0.0
    %1583 = vmatpush1.msra.mxu0 %v122
    %1584 = vmatprep.subr.mxu0 0.0
    %1585 = vmatpush1.msra.mxu0 %v123
    %1586 = vmatprep.subr.mxu0 0.0
    %1587 = vmatpush1.msra.mxu0 %v124
    %1588 = vmatprep.subr.mxu0 0.0
    %1589 = vmatpush1.msra.mxu0 %v125
    %1590 = vmatprep.subr.mxu0 0.0
    %1591 = vmatpush1.msra.mxu0 0.0
    %1592 = vmatprep.subr.mxu0 0.0
    %1593 = vmatpush1.msra.mxu0 0.0
    %1594 = vmatprep.subr.mxu0 0.0
    %1595 = vmatpush1.msra.mxu0 0.0
    %1596 = vmatprep.subr.mxu0 0.0
    %1597 = vmatpush1.msra.mxu0 0.0
    %1598 = vmatprep.subr.mxu0 0.0
    %1599 = vmatpush1.msra.mxu0 0.0
    %1600 = vmatprep.subr.mxu0 0.0
    %1601 = vmatpush1.msra.mxu0 0.0
    %1602 = vmatprep.subr.mxu0 0.0
    %1603 = vmatpush1.msra.mxu0 0.0
    %1604 = vmatprep.subr.mxu0 0.0
    %1605 = vmatpush1.msra.mxu0 0.0
    %1606 = vmatprep.subr.mxu0 0.0
    %1607 = vmatpush1.msra.mxu0 0.0
    %1608 = vmatprep.subr.mxu0 0.0
    %1609 = vmatpush1.msra.mxu0 0.0
    %1610 = vmatprep.subr.mxu0 0.0
    %1611 = vmatpush1.msra.mxu0 0.0
    %1612 = vmatprep.subr.mxu0 0.0
    %1613 = vmatpush1.msra.mxu0 0.0
    %1614 = vmatprep.subr.mxu0 0.0
    %1615 = vmatpush1.msra.mxu0 0.0
    %1616 = vmatprep.subr.mxu0 0.0
    %1617 = vmatpush1.msra.mxu0 0.0
    %1618 = vmatprep.subr.mxu0 0.0
    %1619 = vmatpush1.msra.mxu0 0.0
    %1620 = vmatprep.subr.mxu0 0.0
    %1621 = vmatpush1.msra.mxu0 0.0
    %1622 = vmatprep.subr.mxu0 0.0
    %1623 = vmatpush1.msra.mxu0 0.0
    %1624 = vmatprep.subr.mxu0 0.0
    %1625 = vmatpush1.msra.mxu0 0.0
    %1626 = vmatprep.subr.mxu0 0.0
    %1627 = vmatpush1.msra.mxu0 0.0
    %1628 = vmatprep.subr.mxu0 0.0
    %1629 = vmatpush1.msra.mxu0 0.0
    %1630 = vmatprep.mubr.f32.mxu0 0.0
    %1631 = vmatmul.mubr.f32.gmra.mrb[0].mxu0 %v1564
    %v1632 = vpop.f32.mrb[0].mxu0
    %v1633 = vadd.f32 %v131, %v1632
    %v1634 = vpop.f32.mrb[0].mxu0
    %1635 = vdwg.mxu0
    %v1636 = vtanh.pop %v1633
    %v1637 = vmul.f32 %v1633, 0.5
    %v1638 = vtanh.pop %v1637
    %v1639 = vadd.f32 %v1638, 1.0
    %v1640 = vmul.f32 %v1639, 0.5
    %v1641 = vmul.f32 %v1640, %v1143
    %1643 = vrot.lane.b32.xlu0 %v1636, 32
    %v1644 = vpop.permute.xlu0 %1643
    %v1646 = vmul.f32 %v1640, %v1644
    %1648 = vrot.lane.b32.xlu0 %v1646, 112
    %v1649 = vpop.permute.xlu0 %1648
    %v1651 = vadd.f32 %v1641, %v1649
    %s1652 = scalar_lea.vmem %s0, 6
    %v1653 = vld [vmem:[%s1652] sm:$0x3]
    %1655 = vrot.lane.b32.xlu0 %v1316, 64
    %v1656 = vpop.permute.xlu0 %1655
    %v1657 = vsel %vm134, %v1656, 0
    %1659 = vmatprep.subr.mxu0 0.0
    %1660 = vmatpush1.msra.mxu0 %v60
    %1661 = vmatprep.subr.mxu0 0.0
    %1662 = vmatpush1.msra.mxu0 %v61
    %1663 = vmatprep.subr.mxu0 0.0
    %1664 = vmatpush1.msra.mxu0 %v62
    %1665 = vmatprep.subr.mxu0 0.0
    %1666 = vmatpush1.msra.mxu0 %v63
    %1667 = vmatprep.subr.mxu0 0.0
    %1668 = vmatpush1.msra.mxu0 0.0
    %1669 = vmatprep.subr.mxu0 0.0
    %1670 = vmatpush1.msra.mxu0 0.0
    %1671 = vmatprep.subr.mxu0 0.0
    %1672 = vmatpush1.msra.mxu0 0.0
    %1673 = vmatprep.subr.mxu0 0.0
    %1674 = vmatpush1.msra.mxu0 0.0
    %1675 = vmatprep.subr.mxu0 0.0
    %1676 = vmatpush1.msra.mxu0 0.0
    %1677 = vmatprep.subr.mxu0 0.0
    %1678 = vmatpush1.msra.mxu0 0.0
    %1679 = vmatprep.subr.mxu0 0.0
    %1680 = vmatpush1.msra.mxu0 0.0
    %1681 = vmatprep.subr.mxu0 0.0
    %1682 = vmatpush1.msra.mxu0 0.0
    %1683 = vmatprep.subr.mxu0 0.0
    %1684 = vmatpush1.msra.mxu0 0.0
    %1685 = vmatprep.subr.mxu0 0.0
    %1686 = vmatpush1.msra.mxu0 0.0
    %1687 = vmatprep.subr.mxu0 0.0
    %1688 = vmatpush1.msra.mxu0 0.0
    %1689 = vmatprep.subr.mxu0 0.0
    %1690 = vmatpush1.msra.mxu0 0.0
    %1691 = vmatprep.subr.mxu0 0.0
    %1692 = vmatpush1.msra.mxu0 0.0
    %1693 = vmatprep.subr.mxu0 0.0
    %1694 = vmatpush1.msra.mxu0 0.0
    %1695 = vmatprep.subr.mxu0 0.0
    %1696 = vmatpush1.msra.mxu0 0.0
    %1697 = vmatprep.subr.mxu0 0.0
    %1698 = vmatpush1.msra.mxu0 0.0
    %1699 = vmatprep.subr.mxu0 0.0
    %1700 = vmatpush1.msra.mxu0 0.0
    %1701 = vmatprep.subr.mxu0 0.0
    %1702 = vmatpush1.msra.mxu0 0.0
    %1703 = vmatprep.subr.mxu0 0.0
    %1704 = vmatpush1.msra.mxu0 0.0
    %1705 = vmatprep.subr.mxu0 0.0
    %1706 = vmatpush1.msra.mxu0 0.0
    %1707 = vmatprep.subr.mxu0 0.0
    %1708 = vmatpush1.msra.mxu0 0.0
    %1709 = vmatprep.subr.mxu0 0.0
    %1710 = vmatpush1.msra.mxu0 0.0
    %1711 = vmatprep.subr.mxu0 0.0
    %1712 = vmatpush1.msra.mxu0 0.0
    %1713 = vmatprep.subr.mxu0 0.0
    %1714 = vmatpush1.msra.mxu0 0.0
    %1715 = vmatprep.subr.mxu0 0.0
    %1716 = vmatpush1.msra.mxu0 0.0
    %1717 = vmatprep.subr.mxu0 0.0
    %1718 = vmatpush1.msra.mxu0 0.0
    %1719 = vmatprep.subr.mxu0 0.0
    %1720 = vmatpush1.msra.mxu0 0.0
    %1721 = vmatprep.subr.mxu0 0.0
    %1722 = vmatpush1.msra.mxu0 0.0
    %1723 = vmatprep.mubr.f32.mxu0 0.0
    %1724 = vmatmul.mubr.f32.gmra.mrb[0].mxu0 %v1657
    %v1725 = vpop.f32.mrb[0].mxu0
    %v1726 = vadd.f32 0.0, %v1725
    %v1727 = vpop.f32.mrb[0].mxu0
    %1728 = vdwg.mxu0
    %v1730 = vsel %vm208, %v1653, 0
    %1732 = vmatprep.subr.mxu0 0.0
    %1733 = vmatpush1.msra.mxu0 %v58
    %1734 = vmatprep.subr.mxu0 0.0
    %1735 = vmatpush1.msra.mxu0 %v59
    %1736 = vmatprep.subr.mxu0 0.0
    %1737 = vmatpush1.msra.mxu0 0.0
    %1738 = vmatprep.subr.mxu0 0.0
    %1739 = vmatpush1.msra.mxu0 0.0
    %1740 = vmatprep.subr.mxu0 0.0
    %1741 = vmatpush1.msra.mxu0 0.0
    %1742 = vmatprep.subr.mxu0 0.0
    %1743 = vmatpush1.msra.mxu0 0.0
    %1744 = vmatprep.subr.mxu0 0.0
    %1745 = vmatpush1.msra.mxu0 0.0
    %1746 = vmatprep.subr.mxu0 0.0
    %1747 = vmatpush1.msra.mxu0 0.0
    %1748 = vmatprep.subr.mxu0 0.0
    %1749 = vmatpush1.msra.mxu0 0.0
    %1750 = vmatprep.subr.mxu0 0.0
    %1751 = vmatpush1.msra.mxu0 0.0
    %1752 = vmatprep.subr.mxu0 0.0
    %1753 = vmatpush1.msra.mxu0 0.0
    %1754 = vmatprep.subr.mxu0 0.0
    %1755 = vmatpush1.msra.mxu0 0.0
    %1756 = vmatprep.subr.mxu0 0.0
    %1757 = vmatpush1.msra.mxu0 0.0
    %1758 = vmatprep.subr.mxu0 0.0
    %1759 = vmatpush1.msra.mxu0 0.0
    %1760 = vmatprep.subr.mxu0 0.0
    %1761 = vmatpush1.msra.mxu0 0.0
    %1762 = vmatprep.subr.mxu0 0.0
    %1763 = vmatpush1.msra.mxu0 0.0
    %1764 = vmatprep.subr.mxu0 0.0
    %1765 = vmatpush1.msra.mxu0 0.0
    %1766 = vmatprep.subr.mxu0 0.0
    %1767 = vmatpush1.msra.mxu0 0.0
    %1768 = vmatprep.subr.mxu0 0.0
    %1769 = vmatpush1.msra.mxu0 0.0
    %1770 = vmatprep.subr.mxu0 0.0
    %1771 = vmatpush1.msra.mxu0 0.0
    %1772 = vmatprep.subr.mxu0 0.0
    %1773 = vmatpush1.msra.mxu0 0.0
    %1774 = vmatprep.subr.mxu0 0.0
    %1775 = vmatpush1.msra.mxu0 0.0
    %1776 = vmatprep.subr.mxu0 0.0
    %1777 = vmatpush1.msra.mxu0 0.0
    %1778 = vmatprep.subr.mxu0 0.0
    %1779 = vmatpush1.msra.mxu0 0.0
    %1780 = vmatprep.subr.mxu0 0.0
    %1781 = vmatpush1.msra.mxu0 0.0
    %1782 = vmatprep.subr.mxu0 0.0
    %1783 = vmatpush1.msra.mxu0 0.0
    %1784 = vmatprep.subr.mxu0 0.0
    %1785 = vmatpush1.msra.mxu0 0.0
    %1786 = vmatprep.subr.mxu0 0.0
    %1787 = vmatpush1.msra.mxu0 0.0
    %1788 = vmatprep.subr.mxu0 0.0
    %1789 = vmatpush1.msra.mxu0 0.0
    %1790 = vmatprep.subr.mxu0 0.0
    %1791 = vmatpush1.msra.mxu0 0.0
    %1792 = vmatprep.subr.mxu0 0.0
    %1793 = vmatpush1.msra.mxu0 0.0
    %1794 = vmatprep.subr.mxu0 0.0
    %1795 = vmatpush1.msra.mxu0 0.0
    %1796 = vmatprep.mubr.f32.mxu0 0.0
    %1797 = vmatmul.mubr.f32.gmra.mrb[0].mxu0 %v1730
    %v1798 = vpop.f32.mrb[0].mxu0
    %v1799 = vadd.f32 %v1726, %v1798
    %v1800 = vpop.f32.mrb[0].mxu0
    %1801 = vdwg.mxu0
    %v1802 = vadd.f32 %v1799, %v69
    %v1803 = vmul.f32 %v1802, 0.5
    %v1804 = vtanh.pop %v1803
    %v1805 = vadd.f32 %v1804, 1.0
    %v1806 = vmul.f32 %v1805, 0.5
    %v1807 = vtanh.pop %v1802
    %v1808 = vmul.f32 %v1806, %v1310
    %1810 = vrot.lane.b32.xlu0 %v1807, 32
    %v1811 = vpop.permute.xlu0 %1810
    %v1813 = vmul.f32 %v1806, %v1811
    %1815 = vrot.lane.b32.xlu0 %v1813, 32
    %v1816 = vpop.permute.xlu0 %1815
    %v1818 = vadd.f32 %v1808, %v1816
    %v1819 = vtanh.pop %v1818
    %1821 = vrot.lane.b32.xlu0 %v1819, 32
    %v1822 = vpop.permute.xlu0 %1821
    %v1824 = vmul.f32 %v1806, %v1822
    %1826 = vrot.lane.b32.xlu0 %v1310, 96
    %v1827 = vpop.permute.xlu0 %1826
    %v1829 = vsel %vm134, %v1827, %v1818
    %v1831 = vsel %vm306, %v1829, 0
    %1833 = vmatprep.subr.mxu0 0.0
    %1834 = vmatpush1.msra.mxu0 %v71
    %1835 = vmatprep.subr.mxu0 0.0
    %1836 = vmatpush1.msra.mxu0 %v72
    %1837 = vmatprep.subr.mxu0 0.0
    %1838 = vmatpush1.msra.mxu0 %v73
    %1839 = vmatprep.subr.mxu0 0.0
    %1840 = vmatpush1.msra.mxu0 %v74
    %1841 = vmatprep.subr.mxu0 0.0
    %1842 = vmatpush1.msra.mxu0 %v75
    %1843 = vmatprep.subr.mxu0 0.0
    %1844 = vmatpush1.msra.mxu0 %v76
    %1845 = vmatprep.subr.mxu0 0.0
    %1846 = vmatpush1.msra.mxu0 %v77
    %1847 = vmatprep.subr.mxu0 0.0
    %1848 = vmatpush1.msra.mxu0 %v78
    %1849 = vmatprep.subr.mxu0 0.0
    %1850 = vmatpush1.msra.mxu0 0.0
    %1851 = vmatprep.subr.mxu0 0.0
    %1852 = vmatpush1.msra.mxu0 0.0
    %1853 = vmatprep.subr.mxu0 0.0
    %1854 = vmatpush1.msra.mxu0 0.0
    %1855 = vmatprep.subr.mxu0 0.0
    %1856 = vmatpush1.msra.mxu0 0.0
    %1857 = vmatprep.subr.mxu0 0.0
    %1858 = vmatpush1.msra.mxu0 0.0
    %1859 = vmatprep.subr.mxu0 0.0
    %1860 = vmatpush1.msra.mxu0 0.0
    %1861 = vmatprep.subr.mxu0 0.0
    %1862 = vmatpush1.msra.mxu0 0.0
    %1863 = vmatprep.subr.mxu0 0.0
    %1864 = vmatpush1.msra.mxu0 0.0
    %1865 = vmatprep.subr.mxu0 0.0
    %1866 = vmatpush1.msra.mxu0 0.0
    %1867 = vmatprep.subr.mxu0 0.0
    %1868 = vmatpush1.msra.mxu0 0.0
    %1869 = vmatprep.subr.mxu0 0.0
    %1870 = vmatpush1.msra.mxu0 0.0
    %1871 = vmatprep.subr.mxu0 0.0
    %1872 = vmatpush1.msra.mxu0 0.0
    %1873 = vmatprep.subr.mxu0 0.0
    %1874 = vmatpush1.msra.mxu0 0.0
    %1875 = vmatprep.subr.mxu0 0.0
    %1876 = vmatpush1.msra.mxu0 0.0
    %1877 = vmatprep.subr.mxu0 0.0
    %1878 = vmatpush1.msra.mxu0 0.0
    %1879 = vmatprep.subr.mxu0 0.0
    %1880 = vmatpush1.msra.mxu0 0.0
    %1881 = vmatprep.subr.mxu0 0.0
    %1882 = vmatpush1.msra.mxu0 0.0
    %1883 = vmatprep.subr.mxu0 0.0
    %1884 = vmatpush1.msra.mxu0 0.0
    %1885 = vmatprep.subr.mxu0 0.0
    %1886 = vmatpush1.msra.mxu0 0.0
    %1887 = vmatprep.subr.mxu0 0.0
    %1888 = vmatpush1.msra.mxu0 0.0
    %1889 = vmatprep.subr.mxu0 0.0
    %1890 = vmatpush1.msra.mxu0 0.0
    %1891 = vmatprep.subr.mxu0 0.0
    %1892 = vmatpush1.msra.mxu0 0.0
    %1893 = vmatprep.subr.mxu0 0.0
    %1894 = vmatpush1.msra.mxu0 0.0
    %1895 = vmatprep.subr.mxu0 0.0
    %1896 = vmatpush1.msra.mxu0 0.0
    %1897 = vmatprep.mubr.f32.mxu0 0.0
    %1898 = vmatmul.mubr.f32.gmra.mrb[0].mxu0 %v1831
    %v1899 = vpop.f32.mrb[0].mxu0
    %v1900 = vadd.f32 %v84, %v1899
    %v1901 = vpop.f32.mrb[0].mxu0
    %1902 = vdwg.mxu0
    %v1903 = vmax.f32 %v1900, 0.0
    %v1905 = vsel %vm134, %v1903, 0
    %1907 = vmatprep.subr.mxu0 0.0
    %1908 = vmatpush1.msra.mxu0 %v86
    %1909 = vmatprep.subr.mxu0 0.0
    %1910 = vmatpush1.msra.mxu0 %v87
    %1911 = vmatprep.subr.mxu0 0.0
    %1912 = vmatpush1.msra.mxu0 %v88
    %1913 = vmatprep.subr.mxu0 0.0
    %1914 = vmatpush1.msra.mxu0 %v89
    %1915 = vmatprep.subr.mxu0 0.0
    %1916 = vmatpush1.msra.mxu0 0.0
    %1917 = vmatprep.subr.mxu0 0.0
    %1918 = vmatpush1.msra.mxu0 0.0
    %1919 = vmatprep.subr.mxu0 0.0
    %1920 = vmatpush1.msra.mxu0 0.0
    %1921 = vmatprep.subr.mxu0 0.0
    %1922 = vmatpush1.msra.mxu0 0.0
    %1923 = vmatprep.subr.mxu0 0.0
    %1924 = vmatpush1.msra.mxu0 0.0
    %1925 = vmatprep.subr.mxu0 0.0
    %1926 = vmatpush1.msra.mxu0 0.0
    %1927 = vmatprep.subr.mxu0 0.0
    %1928 = vmatpush1.msra.mxu0 0.0
    %1929 = vmatprep.subr.mxu0 0.0
    %1930 = vmatpush1.msra.mxu0 0.0
    %1931 = vmatprep.subr.mxu0 0.0
    %1932 = vmatpush1.msra.mxu0 0.0
    %1933 = vmatprep.subr.mxu0 0.0
    %1934 = vmatpush1.msra.mxu0 0.0
    %1935 = vmatprep.subr.mxu0 0.0
    %1936 = vmatpush1.msra.mxu0 0.0
    %1937 = vmatprep.subr.mxu0 0.0
    %1938 = vmatpush1.msra.mxu0 0.0
    %1939 = vmatprep.subr.mxu0 0.0
    %1940 = vmatpush1.msra.mxu0 0.0
    %1941 = vmatprep.subr.mxu0 0.0
    %1942 = vmatpush1.msra.mxu0 0.0
    %1943 = vmatprep.subr.mxu0 0.0
    %1944 = vmatpush1.msra.mxu0 0.0
    %1945 = vmatprep.subr.mxu0 0.0
    %1946 = vmatpush1.msra.mxu0 0.0
    %1947 = vmatprep.subr.mxu0 0.0
    %1948 = vmatpush1.msra.mxu0 0.0
    %1949 = vmatprep.subr.mxu0 0.0
    %1950 = vmatpush1.msra.mxu0 0.0
    %1951 = vmatprep.subr.mxu0 0.0
    %1952 = vmatpush1.msra.mxu0 0.0
    %1953 = vmatprep.subr.mxu0 0.0
    %1954 = vmatpush1.msra.mxu0 0.0
    %1955 = vmatprep.subr.mxu0 0.0
    %1956 = vmatpush1.msra.mxu0 0.0
    %1957 = vmatprep.subr.mxu0 0.0
    %1958 = vmatpush1.msra.mxu0 0.0
    %1959 = vmatprep.subr.mxu0 0.0
    %1960 = vmatpush1.msra.mxu0 0.0
    %1961 = vmatprep.subr.mxu0 0.0
    %1962 = vmatpush1.msra.mxu0 0.0
    %1963 = vmatprep.subr.mxu0 0.0
    %1964 = vmatpush1.msra.mxu0 0.0
    %1965 = vmatprep.subr.mxu0 0.0
    %1966 = vmatpush1.msra.mxu0 0.0
    %1967 = vmatprep.subr.mxu0 0.0
    %1968 = vmatpush1.msra.mxu0 0.0
    %1969 = vmatprep.subr.mxu0 0.0
    %1970 = vmatpush1.msra.mxu0 0.0
    %1971 = vmatprep.mubr.f32.mxu0 0.0
    %1972 = vmatmul.mubr.f32.gmra.mrb[0].mxu0 %v1905
    %v1973 = vpop.f32.mrb[0].mxu0
    %v1974 = vadd.f32 %v95, %v1973
    %v1975 = vpop.f32.mrb[0].mxu0
    %1976 = vdwg.mxu0
    %v1977 = vsel %vm454, %v1974, -inf
    %1978 = vmax.xlane.f32.xlu0 %v1977
    %v1979 = vpop.xlane.xlu0 %1978
    %v1980 = vsub.f32 %v1974, %v1979
    %v1981 = vmul.f32 %v1980, 1.442695
    %v1982 = vpow.pop %v1981
    %v1983 = vsel %vm454, %v1982, 0.0
    %1984 = vadd.xlane.f32.xlu0 %v1983
    %v1985 = vpop.xlane.xlu0 %1984
    %v1986 = vrcp.pop %v1985
    %v1987 = vmul.f32 %v1985, %v1986
    %v1988 = vsub.f32 2.0, %v1987
    %v1989 = vmul.f32 %v1986, %v1988
    %v1990 = vmul.f32 %v1982, %v1989
    %v1991 = vmul.f32 %v1990, %v1829
    %1993 = vrot.lane.b32.xlu0 %v1651, 48
    %v1994 = vpop.permute.xlu0 %1993
    %v1996 = vsel %vm306, %v1991, %v1994
    %v1998 = vsel %vm471, %v1996, 0
    %2000 = vmatprep.subr.mxu0 0.0
    %2001 = vmatpush1.msra.mxu0 %v97
    %2002 = vmatprep.subr.mxu0 0.0
    %2003 = vmatpush1.msra.mxu0 %v98
    %2004 = vmatprep.subr.mxu0 0.0
    %2005 = vmatpush1.msra.mxu0 %v99
    %2006 = vmatprep.subr.mxu0 0.0
    %2007 = vmatpush1.msra.mxu0 %v100
    %2008 = vmatprep.subr.mxu0 0.0
    %2009 = vmatpush1.msra.mxu0 %v101
    %2010 = vmatprep.subr.mxu0 0.0
    %2011 = vmatpush1.msra.mxu0 %v102
    %2012 = vmatprep.subr.mxu0 0.0
    %2013 = vmatpush1.msra.mxu0 %v103
    %2014 = vmatprep.subr.mxu0 0.0
    %2015 = vmatpush1.msra.mxu0 %v104
    %2016 = vmatprep.subr.mxu0 0.0
    %2017 = vmatpush1.msra.mxu0 %v105
    %2018 = vmatprep.subr.mxu0 0.0
    %2019 = vmatpush1.msra.mxu0 %v106
    %2020 = vmatprep.subr.mxu0 0.0
    %2021 = vmatpush1.msra.mxu0 0.0
    %2022 = vmatprep.subr.mxu0 0.0
    %2023 = vmatpush1.msra.mxu0 0.0
    %2024 = vmatprep.subr.mxu0 0.0
    %2025 = vmatpush1.msra.mxu0 0.0
    %2026 = vmatprep.subr.mxu0 0.0
    %2027 = vmatpush1.msra.mxu0 0.0
    %2028 = vmatprep.subr.mxu0 0.0
    %2029 = vmatpush1.msra.mxu0 0.0
    %2030 = vmatprep.subr.mxu0 0.0
    %2031 = vmatpush1.msra.mxu0 0.0
    %2032 = vmatprep.subr.mxu0 0.0
    %2033 = vmatpush1.msra.mxu0 0.0
    %2034 = vmatprep.subr.mxu0 0.0
    %2035 = vmatpush1.msra.mxu0 0.0
    %2036 = vmatprep.subr.mxu0 0.0
    %2037 = vmatpush1.msra.mxu0 0.0
    %2038 = vmatprep.subr.mxu0 0.0
    %2039 = vmatpush1.msra.mxu0 0.0
    %2040 = vmatprep.subr.mxu0 0.0
    %2041 = vmatpush1.msra.mxu0 0.0
    %2042 = vmatprep.subr.mxu0 0.0
    %2043 = vmatpush1.msra.mxu0 0.0
    %2044 = vmatprep.subr.mxu0 0.0
    %2045 = vmatpush1.msra.mxu0 0.0
    %2046 = vmatprep.subr.mxu0 0.0
    %2047 = vmatpush1.msra.mxu0 0.0
    %2048 = vmatprep.subr.mxu0 0.0
    %2049 = vmatpush1.msra.mxu0 0.0
    %2050 = vmatprep.subr.mxu0 0.0
    %2051 = vmatpush1.msra.mxu0 0.0
    %2052 = vmatprep.subr.mxu0 0.0
    %2053 = vmatpush1.msra.mxu0 0.0
    %2054 = vmatprep.subr.mxu0 0.0
    %2055 = vmatpush1.msra.mxu0 0.0
    %2056 = vmatprep.subr.mxu0 0.0
    %2057 = vmatpush1.msra.mxu0 0.0
    %2058 = vmatprep.subr.mxu0 0.0
    %2059 = vmatpush1.msra.mxu0 0.0
    %2060 = vmatprep.subr.mxu0 0.0
    %2061 = vmatpush1.msra.mxu0 0.0
    %2062 = vmatprep.subr.mxu0 0.0
    %2063 = vmatpush1.msra.mxu0 0.0
    %2064 = vmatprep.mubr.f32.mxu0 0.0
    %2065 = vmatmul.mubr.f32.gmra.mrb[0].mxu0 %v1998
    %v2066 = vpop.f32.mrb[0].mxu0
    %v2067 = vadd.f32 %v112, %v2066
    %v2068 = vpop.f32.mrb[0].mxu0
    %2069 = vdwg.mxu0
    %v2070 = vmax.f32 %v2067, 0.0
    %v2072 = vsel %vm546, %v2070, 0
    %2074 = vmatprep.subr.mxu0 0.0
    %2075 = vmatpush1.msra.mxu0 %v114
    %2076 = vmatprep.subr.mxu0 0.0
    %2077 = vmatpush1.msra.mxu0 %v115
    %2078 = vmatprep.subr.mxu0 0.0
    %2079 = vmatpush1.msra.mxu0 %v116
    %2080 = vmatprep.subr.mxu0 0.0
    %2081 = vmatpush1.msra.mxu0 %v117
    %2082 = vmatprep.subr.mxu0 0.0
    %2083 = vmatpush1.msra.mxu0 %v118
    %2084 = vmatprep.subr.mxu0 0.0
    %2085 = vmatpush1.msra.mxu0 %v119
    %2086 = vmatprep.subr.mxu0 0.0
    %2087 = vmatpush1.msra.mxu0 %v120
    %2088 = vmatprep.subr.mxu0 0.0
    %2089 = vmatpush1.msra.mxu0 %v121
    %2090 = vmatprep.subr.mxu0 0.0
    %2091 = vmatpush1.msra.mxu0 %v122
    %2092 = vmatprep.subr.mxu0 0.0
    %2093 = vmatpush1.msra.mxu0 %v123
    %2094 = vmatprep.subr.mxu0 0.0
    %2095 = vmatpush1.msra.mxu0 %v124
    %2096 = vmatprep.subr.mxu0 0.0
    %2097 = vmatpush1.msra.mxu0 %v125
    %2098 = vmatprep.subr.mxu0 0.0
    %2099 = vmatpush1.msra.mxu0 0.0
    %2100 = vmatprep.subr.mxu0 0.0
    %2101 = vmatpush1.msra.mxu0 0.0
    %2102 = vmatprep.subr.mxu0 0.0
    %2103 = vmatpush1.msra.mxu0 0.0
    %2104 = vmatprep.subr.mxu0 0.0
    %2105 = vmatpush1.msra.mxu0 0.0
    %2106 = vmatprep.subr.mxu0 0.0
    %2107 = vmatpush1.msra.mxu0 0.0
    %2108 = vmatprep.subr.mxu0 0.0
    %2109 = vmatpush1.msra.mxu0 0.0
    %2110 = vmatprep.subr.mxu0 0.0
    %2111 = vmatpush1.msra.mxu0 0.0
    %2112 = vmatprep.subr.mxu0 0.0
    %2113 = vmatpush1.msra.mxu0 0.0
    %2114 = vmatprep.subr.mxu0 0.0
    %2115 = vmatpush1.msra.mxu0 0.0
    %2116 = vmatprep.subr.mxu0 0.0
    %2117 = vmatpush1.msra.mxu0 0.0
    %2118 = vmatprep.subr.mxu0 0.0
    %2119 = vmatpush1.msra.mxu0 0.0
    %2120 = vmatprep.subr.mxu0 0.0
    %2121 = vmatpush1.msra.mxu0 0.0
    %2122 = vmatprep.subr.mxu0 0.0
    %2123 = vmatpush1.msra.mxu0 0.0
    %2124 = vmatprep.subr.mxu0 0.0
    %2125 = vmatpush1.msra.mxu0 0.0
    %2126 = vmatprep.subr.mxu0 0.0
    %2127 = vmatpush1.msra.mxu0 0.0
    %2128 = vmatprep.subr.mxu0 0.0
    %2129 = vmatpush1.msra.mxu0 0.0
    %2130 = vmatprep.subr.mxu0 0.0
    %2131 = vmatpush1.msra.mxu0 0.0
    %2132 = vmatprep.subr.mxu0 0.0
    %2133 = vmatpush1.msra.mxu0 0.0
    %2134 = vmatprep.subr.mxu0 0.0
    %2135 = vmatpush1.msra.mxu0 0.0
    %2136 = vmatprep.subr.mxu0 0.0
    %2137 = vmatpush1.msra.mxu0 0.0
    %2138 = vmatprep.mubr.f32.mxu0 0.0
    %2139 = vmatmul.mubr.f32.gmra.mrb[0].mxu0 %v2072
    %v2140 = vpop.f32.mrb[0].mxu0
    %v2141 = vadd.f32 %v131, %v2140
    %v2142 = vpop.f32.mrb[0].mxu0
    %2143 = vdwg.mxu0
    %v2144 = vtanh.pop %v2141
    %v2145 = vmul.f32 %v2141, 0.5
    %v2146 = vtanh.pop %v2145
    %v2147 = vadd.f32 %v2146, 1.0
    %v2148 = vmul.f32 %v2147, 0.5
    %v2149 = vmul.f32 %v2148, %v1651
    %2151 = vrot.lane.b32.xlu0 %v2144, 32
    %v2152 = vpop.permute.xlu0 %2151
    %v2154 = vmul.f32 %v2148, %v2152
    %2156 = vrot.lane.b32.xlu0 %v2154, 112
    %v2157 = vpop.permute.xlu0 %2156
    %v2159 = vadd.f32 %v2149, %v2157
    %s2160 = scalar_lea.vmem %s0, 8
    %v2161 = vld [vmem:[%s2160] sm:$0x3]
    %2163 = vrot.lane.b32.xlu0 %v1824, 64
    %v2164 = vpop.permute.xlu0 %2163
    %v2165 = vsel %vm134, %v2164, 0
    %2167 = vmatprep.subr.mxu0 0.0
    %2168 = vmatpush1.msra.mxu0 %v60
    %2169 = vmatprep.subr.mxu0 0.0
    %2170 = vmatpush1.msra.mxu0 %v61
    %2171 = vmatprep.subr.mxu0 0.0
    %2172 = vmatpush1.msra.mxu0 %v62
    %2173 = vmatprep.subr.mxu0 0.0
    %2174 = vmatpush1.msra.mxu0 %v63
    %2175 = vmatprep.subr.mxu0 0.0
    %2176 = vmatpush1.msra.mxu0 0.0
    %2177 = vmatprep.subr.mxu0 0.0
    %2178 = vmatpush1.msra.mxu0 0.0
    %2179 = vmatprep.subr.mxu0 0.0
    %2180 = vmatpush1.msra.mxu0 0.0
    %2181 = vmatprep.subr.mxu0 0.0
    %2182 = vmatpush1.msra.mxu0 0.0
    %2183 = vmatprep.subr.mxu0 0.0
    %2184 = vmatpush1.msra.mxu0 0.0
    %2185 = vmatprep.subr.mxu0 0.0
    %2186 = vmatpush1.msra.mxu0 0.0
    %2187 = vmatprep.subr.mxu0 0.0
    %2188 = vmatpush1.msra.mxu0 0.0
    %2189 = vmatprep.subr.mxu0 0.0
    %2190 = vmatpush1.msra.mxu0 0.0
    %2191 = vmatprep.subr.mxu0 0.0
    %2192 = vmatpush1.msra.mxu0 0.0
    %2193 = vmatprep.subr.mxu0 0.0
    %2194 = vmatpush1.msra.mxu0 0.0
    %2195 = vmatprep.subr.mxu0 0.0
    %2196 = vmatpush1.msra.mxu0 0.0
    %2197 = vmatprep.subr.mxu0 0.0
    %2198 = vmatpush1.msra.mxu0 0.0
    %2199 = vmatprep.subr.mxu0 0.0
    %2200 = vmatpush1.msra.mxu0 0.0
    %2201 = vmatprep.subr.mxu0 0.0
    %2202 = vmatpush1.msra.mxu0 0.0
    %2203 = vmatprep.subr.mxu0 0.0
    %2204 = vmatpush1.msra.mxu0 0.0
    %2205 = vmatprep.subr.mxu0 0.0
    %2206 = vmatpush1.msra.mxu0 0.0
    %2207 = vmatprep.subr.mxu0 0.0
    %2208 = vmatpush1.msra.mxu0 0.0
    %2209 = vmatprep.subr.mxu0 0.0
    %2210 = vmatpush1.msra.mxu0 0.0
    %2211 = vmatprep.subr.mxu0 0.0
    %2212 = vmatpush1.msra.mxu0 0.0
    %2213 = vmatprep.subr.mxu0 0.0
    %2214 = vmatpush1.msra.mxu0 0.0
    %2215 = vmatprep.subr.mxu0 0.0
    %2216 = vmatpush1.msra.mxu0 0.0
    %2217 = vmatprep.subr.mxu0 0.0
    %2218 = vmatpush1.msra.mxu0 0.0
    %2219 = vmatprep.subr.mxu0 0.0
    %2220 = vmatpush1.msra.mxu0 0.0
    %2221 = vmatprep.subr.mxu0 0.0
    %2222 = vmatpush1.msra.mxu0 0.0
    %2223 = vmatprep.subr.mxu0 0.0
    %2224 = vmatpush1.msra.mxu0 0.0
    %2225 = vmatprep.subr.mxu0 0.0
    %2226 = vmatpush1.msra.mxu0 0.0
    %2227 = vmatprep.subr.mxu0 0.0
    %2228 = vmatpush1.msra.mxu0 0.0
    %2229 = vmatprep.subr.mxu0 0.0
    %2230 = vmatpush1.msra.mxu0 0.0
    %2231 = vmatprep.mubr.f32.mxu0 0.0
    %2232 = vmatmul.mubr.f32.gmra.mrb[0].mxu0 %v2165
    %v2233 = vpop.f32.mrb[0].mxu0
    %v2234 = vadd.f32 0.0, %v2233
    %v2235 = vpop.f32.mrb[0].mxu0
    %2236 = vdwg.mxu0
    %v2238 = vsel %vm208, %v2161, 0
    %2240 = vmatprep.subr.mxu0 0.0
    %2241 = vmatpush1.msra.mxu0 %v58
    %2242 = vmatprep.subr.mxu0 0.0
    %2243 = vmatpush1.msra.mxu0 %v59
    %2244 = vmatprep.subr.mxu0 0.0
    %2245 = vmatpush1.msra.mxu0 0.0
    %2246 = vmatprep.subr.mxu0 0.0
    %2247 = vmatpush1.msra.mxu0 0.0
    %2248 = vmatprep.subr.mxu0 0.0
    %2249 = vmatpush1.msra.mxu0 0.0
    %2250 = vmatprep.subr.mxu0 0.0
    %2251 = vmatpush1.msra.mxu0 0.0
    %2252 = vmatprep.subr.mxu0 0.0
    %2253 = vmatpush1.msra.mxu0 0.0
    %2254 = vmatprep.subr.mxu0 0.0
    %2255 = vmatpush1.msra.mxu0 0.0
    %2256 = vmatprep.subr.mxu0 0.0
    %2257 = vmatpush1.msra.mxu0 0.0
    %2258 = vmatprep.subr.mxu0 0.0
    %2259 = vmatpush1.msra.mxu0 0.0
    %2260 = vmatprep.subr.mxu0 0.0
    %2261 = vmatpush1.msra.mxu0 0.0
    %2262 = vmatprep.subr.mxu0 0.0
    %2263 = vmatpush1.msra.mxu0 0.0
    %2264 = vmatprep.subr.mxu0 0.0
    %2265 = vmatpush1.msra.mxu0 0.0
    %2266 = vmatprep.subr.mxu0 0.0
    %2267 = vmatpush1.msra.mxu0 0.0
    %2268 = vmatprep.subr.mxu0 0.0
    %2269 = vmatpush1.msra.mxu0 0.0
    %2270 = vmatprep.subr.mxu0 0.0
    %2271 = vmatpush1.msra.mxu0 0.0
    %2272 = vmatprep.subr.mxu0 0.0
    %2273 = vmatpush1.msra.mxu0 0.0
    %2274 = vmatprep.subr.mxu0 0.0
    %2275 = vmatpush1.msra.mxu0 0.0
    %2276 = vmatprep.subr.mxu0 0.0
    %2277 = vmatpush1.msra.mxu0 0.0
    %2278 = vmatprep.subr.mxu0 0.0
    %2279 = vmatpush1.msra.mxu0 0.0
    %2280 = vmatprep.subr.mxu0 0.0
    %2281 = vmatpush1.msra.mxu0 0.0
    %2282 = vmatprep.subr.mxu0 0.0
    %2283 = vmatpush1.msra.mxu0 0.0
    %2284 = vmatprep.subr.mxu0 0.0
    %2285 = vmatpush1.msra.mxu0 0.0
    %2286 = vmatprep.subr.mxu0 0.0
    %2287 = vmatpush1.msra.mxu0 0.0
    %2288 = vmatprep.subr.mxu0 0.0
    %2289 = vmatpush1.msra.mxu0 0.0
    %2290 = vmatprep.subr.mxu0 0.0
    %2291 = vmatpush1.msra.mxu0 0.0
    %2292 = vmatprep.subr.mxu0 0.0
    %2293 = vmatpush1.msra.mxu0 0.0
    %2294 = vmatprep.subr.mxu0 0.0
    %2295 = vmatpush1.msra.mxu0 0.0
    %2296 = vmatprep.subr.mxu0 0.0
    %2297 = vmatpush1.msra.mxu0 0.0
    %2298 = vmatprep.subr.mxu0 0.0
    %2299 = vmatpush1.msra.mxu0 0.0
    %2300 = vmatprep.subr.mxu0 0.0
    %2301 = vmatpush1.msra.mxu0 0.0
    %2302 = vmatprep.subr.mxu0 0.0
    %2303 = vmatpush1.msra.mxu0 0.0
    %2304 = vmatprep.mubr.f32.mxu0 0.0
    %2305 = vmatmul.mubr.f32.gmra.mrb[0].mxu0 %v2238
    %v2306 = vpop.f32.mrb[0].mxu0
    %v2307 = vadd.f32 %v2234, %v2306
    %v2308 = vpop.f32.mrb[0].mxu0
    %2309 = vdwg.mxu0
    %v2310 = vadd.f32 %v2307, %v69
    %v2311 = vmul.f32 %v2310, 0.5
    %v2312 = vtanh.pop %v2311
    %v2313 = vadd.f32 %v2312, 1.0
    %v2314 = vmul.f32 %v2313, 0.5
    %v2315 = vtanh.pop %v2310
    %v2316 = vmul.f32 %v2314, %v1818
    %2318 = vrot.lane.b32.xlu0 %v2315, 32
    %v2319 = vpop.permute.xlu0 %2318
    %v2321 = vmul.f32 %v2314, %v2319
    %2323 = vrot.lane.b32.xlu0 %v2321, 32
    %v2324 = vpop.permute.xlu0 %2323
    %v2326 = vadd.f32 %v2316, %v2324
    %v2327 = vtanh.pop %v2326
    %2329 = vrot.lane.b32.xlu0 %v2327, 32
    %v2330 = vpop.permute.xlu0 %2329
    %v2332 = vmul.f32 %v2314, %v2330
    %2334 = vrot.lane.b32.xlu0 %v1818, 96
    %v2335 = vpop.permute.xlu0 %2334
    %v2337 = vsel %vm134, %v2335, %v2326
    %v2339 = vsel %vm306, %v2337, 0
    %2341 = vmatprep.subr.mxu0 0.0
    %2342 = vmatpush1.msra.mxu0 %v71
    %2343 = vmatprep.subr.mxu0 0.0
    %2344 = vmatpush1.msra.mxu0 %v72
    %2345 = vmatprep.subr.mxu0 0.0
    %2346 = vmatpush1.msra.mxu0 %v73
    %2347 = vmatprep.subr.mxu0 0.0
    %2348 = vmatpush1.msra.mxu0 %v74
    %2349 = vmatprep.subr.mxu0 0.0
    %2350 = vmatpush1.msra.mxu0 %v75
    %2351 = vmatprep.subr.mxu0 0.0
    %2352 = vmatpush1.msra.mxu0 %v76
    %2353 = vmatprep.subr.mxu0 0.0
    %2354 = vmatpush1.msra.mxu0 %v77
    %2355 = vmatprep.subr.mxu0 0.0
    %2356 = vmatpush1.msra.mxu0 %v78
    %2357 = vmatprep.subr.mxu0 0.0
    %2358 = vmatpush1.msra.mxu0 0.0
    %2359 = vmatprep.subr.mxu0 0.0
    %2360 = vmatpush1.msra.mxu0 0.0
    %2361 = vmatprep.subr.mxu0 0.0
    %2362 = vmatpush1.msra.mxu0 0.0
    %2363 = vmatprep.subr.mxu0 0.0
    %2364 = vmatpush1.msra.mxu0 0.0
    %2365 = vmatprep.subr.mxu0 0.0
    %2366 = vmatpush1.msra.mxu0 0.0
    %2367 = vmatprep.subr.mxu0 0.0
    %2368 = vmatpush1.msra.mxu0 0.0
    %2369 = vmatprep.subr.mxu0 0.0
    %2370 = vmatpush1.msra.mxu0 0.0
    %2371 = vmatprep.subr.mxu0 0.0
    %2372 = vmatpush1.msra.mxu0 0.0
    %2373 = vmatprep.subr.mxu0 0.0
    %2374 = vmatpush1.msra.mxu0 0.0
    %2375 = vmatprep.subr.mxu0 0.0
    %2376 = vmatpush1.msra.mxu0 0.0
    %2377 = vmatprep.subr.mxu0 0.0
    %2378 = vmatpush1.msra.mxu0 0.0
    %2379 = vmatprep.subr.mxu0 0.0
    %2380 = vmatpush1.msra.mxu0 0.0
    %2381 = vmatprep.subr.mxu0 0.0
    %2382 = vmatpush1.msra.mxu0 0.0
    %2383 = vmatprep.subr.mxu0 0.0
    %2384 = vmatpush1.msra.mxu0 0.0
    %2385 = vmatprep.subr.mxu0 0.0
    %2386 = vmatpush1.msra.mxu0 0.0
    %2387 = vmatprep.subr.mxu0 0.0
    %2388 = vmatpush1.msra.mxu0 0.0
    %2389 = vmatprep.subr.mxu0 0.0
    %2390 = vmatpush1.msra.mxu0 0.0
    %2391 = vmatprep.subr.mxu0 0.0
    %2392 = vmatpush1.msra.mxu0 0.0
    %2393 = vmatprep.subr.mxu0 0.0
    %2394 = vmatpush1.msra.mxu0 0.0
    %2395 = vmatprep.subr.mxu0 0.0
    %2396 = vmatpush1.msra.mxu0 0.0
    %2397 = vmatprep.subr.mxu0 0.0
    %2398 = vmatpush1.msra.mxu0 0.0
    %2399 = vmatprep.subr.mxu0 0.0
    %2400 = vmatpush1.msra.mxu0 0.0
    %2401 = vmatprep.subr.mxu0 0.0
    %2402 = vmatpush1.msra.mxu0 0.0
    %2403 = vmatprep.subr.mxu0 0.0
    %2404 = vmatpush1.msra.mxu0 0.0
    %2405 = vmatprep.mubr.f32.mxu0 0.0
    %2406 = vmatmul.mubr.f32.gmra.mrb[0].mxu0 %v2339
    %v2407 = vpop.f32.mrb[0].mxu0
    %v2408 = vadd.f32 %v84, %v2407
    %v2409 = vpop.f32.mrb[0].mxu0
    %2410 = vdwg.mxu0
    %v2411 = vmax.f32 %v2408, 0.0
    %v2413 = vsel %vm134, %v2411, 0
    %2415 = vmatprep.subr.mxu0 0.0
    %2416 = vmatpush1.msra.mxu0 %v86
    %2417 = vmatprep.subr.mxu0 0.0
    %2418 = vmatpush1.msra.mxu0 %v87
    %2419 = vmatprep.subr.mxu0 0.0
    %2420 = vmatpush1.msra.mxu0 %v88
    %2421 = vmatprep.subr.mxu0 0.0
    %2422 = vmatpush1.msra.mxu0 %v89
    %2423 = vmatprep.subr.mxu0 0.0
    %2424 = vmatpush1.msra.mxu0 0.0
    %2425 = vmatprep.subr.mxu0 0.0
    %2426 = vmatpush1.msra.mxu0 0.0
    %2427 = vmatprep.subr.mxu0 0.0
    %2428 = vmatpush1.msra.mxu0 0.0
    %2429 = vmatprep.subr.mxu0 0.0
    %2430 = vmatpush1.msra.mxu0 0.0
    %2431 = vmatprep.subr.mxu0 0.0
    %2432 = vmatpush1.msra.mxu0 0.0
    %2433 = vmatprep.subr.mxu0 0.0
    %2434 = vmatpush1.msra.mxu0 0.0
    %2435 = vmatprep.subr.mxu0 0.0
    %2436 = vmatpush1.msra.mxu0 0.0
    %2437 = vmatprep.subr.mxu0 0.0
    %2438 = vmatpush1.msra.mxu0 0.0
    %2439 = vmatprep.subr.mxu0 0.0
    %2440 = vmatpush1.msra.mxu0 0.0
    %2441 = vmatprep.subr.mxu0 0.0
    %2442 = vmatpush1.msra.mxu0 0.0
    %2443 = vmatprep.subr.mxu0 0.0
    %2444 = vmatpush1.msra.mxu0 0.0
    %2445 = vmatprep.subr.mxu0 0.0
    %2446 = vmatpush1.msra.mxu0 0.0
    %2447 = vmatprep.subr.mxu0 0.0
    %2448 = vmatpush1.msra.mxu0 0.0
    %2449 = vmatprep.subr.mxu0 0.0
    %2450 = vmatpush1.msra.mxu0 0.0
    %2451 = vmatprep.subr.mxu0 0.0
    %2452 = vmatpush1.msra.mxu0 0.0
    %2453 = vmatprep.subr.mxu0 0.0
    %2454 = vmatpush1.msra.mxu0 0.0
    %2455 = vmatprep.subr.mxu0 0.0
    %2456 = vmatpush1.msra.mxu0 0.0
    %2457 = vmatprep.subr.mxu0 0.0
    %2458 = vmatpush1.msra.mxu0 0.0
    %2459 = vmatprep.subr.mxu0 0.0
    %2460 = vmatpush1.msra.mxu0 0.0
    %2461 = vmatprep.subr.mxu0 0.0
    %2462 = vmatpush1.msra.mxu0 0.0
    %2463 = vmatprep.subr.mxu0 0.0
    %2464 = vmatpush1.msra.mxu0 0.0
    %2465 = vmatprep.subr.mxu0 0.0
    %2466 = vmatpush1.msra.mxu0 0.0
    %2467 = vmatprep.subr.mxu0 0.0
    %2468 = vmatpush1.msra.mxu0 0.0
    %2469 = vmatprep.subr.mxu0 0.0
    %2470 = vmatpush1.msra.mxu0 0.0
    %2471 = vmatprep.subr.mxu0 0.0
    %2472 = vmatpush1.msra.mxu0 0.0
    %2473 = vmatprep.subr.mxu0 0.0
    %2474 = vmatpush1.msra.mxu0 0.0
    %2475 = vmatprep.subr.mxu0 0.0
    %2476 = vmatpush1.msra.mxu0 0.0
    %2477 = vmatprep.subr.mxu0 0.0
    %2478 = vmatpush1.msra.mxu0 0.0
    %2479 = vmatprep.mubr.f32.mxu0 0.0
    %2480 = vmatmul.mubr.f32.gmra.mrb[0].mxu0 %v2413
    %v2481 = vpop.f32.mrb[0].mxu0
    %v2482 = vadd.f32 %v95, %v2481
    %v2483 = vpop.f32.mrb[0].mxu0
    %2484 = vdwg.mxu0
    %v2485 = vsel %vm454, %v2482, -inf
    %2486 = vmax.xlane.f32.xlu0 %v2485
    %v2487 = vpop.xlane.xlu0 %2486
    %v2488 = vsub.f32 %v2482, %v2487
    %v2489 = vmul.f32 %v2488, 1.442695
    %v2490 = vpow.pop %v2489
    %v2491 = vsel %vm454, %v2490, 0.0
    %2492 = vadd.xlane.f32.xlu0 %v2491
    %v2493 = vpop.xlane.xlu0 %2492
    %v2494 = vrcp.pop %v2493
    %v2495 = vmul.f32 %v2493, %v2494
    %v2496 = vsub.f32 2.0, %v2495
    %v2497 = vmul.f32 %v2494, %v2496
    %v2498 = vmul.f32 %v2490, %v2497
    %v2499 = vmul.f32 %v2498, %v2337
    %2501 = vrot.lane.b32.xlu0 %v2159, 48
    %v2502 = vpop.permute.xlu0 %2501
    %v2504 = vsel %vm306, %v2499, %v2502
    %v2506 = vsel %vm471, %v2504, 0
    %2508 = vmatprep.subr.mxu0 0.0
    %2509 = vmatpush1.msra.mxu0 %v97
    %2510 = vmatprep.subr.mxu0 0.0
    %2511 = vmatpush1.msra.mxu0 %v98
    %2512 = vmatprep.subr.mxu0 0.0
    %2513 = vmatpush1.msra.mxu0 %v99
    %2514 = vmatprep.subr.mxu0 0.0
    %2515 = vmatpush1.msra.mxu0 %v100
    %2516 = vmatprep.subr.mxu0 0.0
    %2517 = vmatpush1.msra.mxu0 %v101
    %2518 = vmatprep.subr.mxu0 0.0
    %2519 = vmatpush1.msra.mxu0 %v102
    %2520 = vmatprep.subr.mxu0 0.0
    %2521 = vmatpush1.msra.mxu0 %v103
    %2522 = vmatprep.subr.mxu0 0.0
    %2523 = vmatpush1.msra.mxu0 %v104
    %2524 = vmatprep.subr.mxu0 0.0
    %2525 = vmatpush1.msra.mxu0 %v105
    %2526 = vmatprep.subr.mxu0 0.0
    %2527 = vmatpush1.msra.mxu0 %v106
    %2528 = vmatprep.subr.mxu0 0.0
    %2529 = vmatpush1.msra.mxu0 0.0
    %2530 = vmatprep.subr.mxu0 0.0
    %2531 = vmatpush1.msra.mxu0 0.0
    %2532 = vmatprep.subr.mxu0 0.0
    %2533 = vmatpush1.msra.mxu0 0.0
    %2534 = vmatprep.subr.mxu0 0.0
    %2535 = vmatpush1.msra.mxu0 0.0
    %2536 = vmatprep.subr.mxu0 0.0
    %2537 = vmatpush1.msra.mxu0 0.0
    %2538 = vmatprep.subr.mxu0 0.0
    %2539 = vmatpush1.msra.mxu0 0.0
    %2540 = vmatprep.subr.mxu0 0.0
    %2541 = vmatpush1.msra.mxu0 0.0
    %2542 = vmatprep.subr.mxu0 0.0
    %2543 = vmatpush1.msra.mxu0 0.0
    %2544 = vmatprep.subr.mxu0 0.0
    %2545 = vmatpush1.msra.mxu0 0.0
    %2546 = vmatprep.subr.mxu0 0.0
    %2547 = vmatpush1.msra.mxu0 0.0
    %2548 = vmatprep.subr.mxu0 0.0
    %2549 = vmatpush1.msra.mxu0 0.0
    %2550 = vmatprep.subr.mxu0 0.0
    %2551 = vmatpush1.msra.mxu0 0.0
    %2552 = vmatprep.subr.mxu0 0.0
    %2553 = vmatpush1.msra.mxu0 0.0
    %2554 = vmatprep.subr.mxu0 0.0
    %2555 = vmatpush1.msra.mxu0 0.0
    %2556 = vmatprep.subr.mxu0 0.0
    %2557 = vmatpush1.msra.mxu0 0.0
    %2558 = vmatprep.subr.mxu0 0.0
    %2559 = vmatpush1.msra.mxu0 0.0
    %2560 = vmatprep.subr.mxu0 0.0
    %2561 = vmatpush1.msra.mxu0 0.0
    %2562 = vmatprep.subr.mxu0 0.0
    %2563 = vmatpush1.msra.mxu0 0.0
    %2564 = vmatprep.subr.mxu0 0.0
    %2565 = vmatpush1.msra.mxu0 0.0
    %2566 = vmatprep.subr.mxu0 0.0
    %2567 = vmatpush1.msra.mxu0 0.0
    %2568 = vmatprep.subr.mxu0 0.0
    %2569 = vmatpush1.msra.mxu0 0.0
    %2570 = vmatprep.subr.mxu0 0.0
    %2571 = vmatpush1.msra.mxu0 0.0
    %2572 = vmatprep.mubr.f32.mxu0 0.0
    %2573 = vmatmul.mubr.f32.gmra.mrb[0].mxu0 %v2506
    %v2574 = vpop.f32.mrb[0].mxu0
    %v2575 = vadd.f32 %v112, %v2574
    %v2576 = vpop.f32.mrb[0].mxu0
    %2577 = vdwg.mxu0
    %v2578 = vmax.f32 %v2575, 0.0
    %v2580 = vsel %vm546, %v2578, 0
    %2582 = vmatprep.subr.mxu0 0.0
    %2583 = vmatpush1.msra.mxu0 %v114
    %2584 = vmatprep.subr.mxu0 0.0
    %2585 = vmatpush1.msra.mxu0 %v115
    %2586 = vmatprep.subr.mxu0 0.0
    %2587 = vmatpush1.msra.mxu0 %v116
    %2588 = vmatprep.subr.mxu0 0.0
    %2589 = vmatpush1.msra.mxu0 %v117
    %2590 = vmatprep.subr.mxu0 0.0
    %2591 = vmatpush1.msra.mxu0 %v118
    %2592 = vmatprep.subr.mxu0 0.0
    %2593 = vmatpush1.msra.mxu0 %v119
    %2594 = vmatprep.subr.mxu0 0.0
    %2595 = vmatpush1.msra.mxu0 %v120
    %2596 = vmatprep.subr.mxu0 0.0
    %2597 = vmatpush1.msra.mxu0 %v121
    %2598 = vmatprep.subr.mxu0 0.0
    %2599 = vmatpush1.msra.mxu0 %v122
    %2600 = vmatprep.subr.mxu0 0.0
    %2601 = vmatpush1.msra.mxu0 %v123
    %2602 = vmatprep.subr.mxu0 0.0
    %2603 = vmatpush1.msra.mxu0 %v124
    %2604 = vmatprep.subr.mxu0 0.0
    %2605 = vmatpush1.msra.mxu0 %v125
    %2606 = vmatprep.subr.mxu0 0.0
    %2607 = vmatpush1.msra.mxu0 0.0
    %2608 = vmatprep.subr.mxu0 0.0
    %2609 = vmatpush1.msra.mxu0 0.0
    %2610 = vmatprep.subr.mxu0 0.0
    %2611 = vmatpush1.msra.mxu0 0.0
    %2612 = vmatprep.subr.mxu0 0.0
    %2613 = vmatpush1.msra.mxu0 0.0
    %2614 = vmatprep.subr.mxu0 0.0
    %2615 = vmatpush1.msra.mxu0 0.0
    %2616 = vmatprep.subr.mxu0 0.0
    %2617 = vmatpush1.msra.mxu0 0.0
    %2618 = vmatprep.subr.mxu0 0.0
    %2619 = vmatpush1.msra.mxu0 0.0
    %2620 = vmatprep.subr.mxu0 0.0
    %2621 = vmatpush1.msra.mxu0 0.0
    %2622 = vmatprep.subr.mxu0 0.0
    %2623 = vmatpush1.msra.mxu0 0.0
    %2624 = vmatprep.subr.mxu0 0.0
    %2625 = vmatpush1.msra.mxu0 0.0
    %2626 = vmatprep.subr.mxu0 0.0
    %2627 = vmatpush1.msra.mxu0 0.0
    %2628 = vmatprep.subr.mxu0 0.0
    %2629 = vmatpush1.msra.mxu0 0.0
    %2630 = vmatprep.subr.mxu0 0.0
    %2631 = vmatpush1.msra.mxu0 0.0
    %2632 = vmatprep.subr.mxu0 0.0
    %2633 = vmatpush1.msra.mxu0 0.0
    %2634 = vmatprep.subr.mxu0 0.0
    %2635 = vmatpush1.msra.mxu0 0.0
    %2636 = vmatprep.subr.mxu0 0.0
    %2637 = vmatpush1.msra.mxu0 0.0
    %2638 = vmatprep.subr.mxu0 0.0
    %2639 = vmatpush1.msra.mxu0 0.0
    %2640 = vmatprep.subr.mxu0 0.0
    %2641 = vmatpush1.msra.mxu0 0.0
    %2642 = vmatprep.subr.mxu0 0.0
    %2643 = vmatpush1.msra.mxu0 0.0
    %2644 = vmatprep.subr.mxu0 0.0
    %2645 = vmatpush1.msra.mxu0 0.0
    %2646 = vmatprep.mubr.f32.mxu0 0.0
    %2647 = vmatmul.mubr.f32.gmra.mrb[0].mxu0 %v2580
    %v2648 = vpop.f32.mrb[0].mxu0
    %v2649 = vadd.f32 %v131, %v2648
    %v2650 = vpop.f32.mrb[0].mxu0
    %2651 = vdwg.mxu0
    %v2652 = vtanh.pop %v2649
    %v2653 = vmul.f32 %v2649, 0.5
    %v2654 = vtanh.pop %v2653
    %v2655 = vadd.f32 %v2654, 1.0
    %v2656 = vmul.f32 %v2655, 0.5
    %v2657 = vmul.f32 %v2656, %v2159
    %2659 = vrot.lane.b32.xlu0 %v2652, 32
    %v2660 = vpop.permute.xlu0 %2659
    %v2662 = vmul.f32 %v2656, %v2660
    %2664 = vrot.lane.b32.xlu0 %v2662, 112
    %v2665 = vpop.permute.xlu0 %2664
    %v2667 = vadd.f32 %v2657, %v2665
    %s2668 = scalar_lea.vmem %s0, 10
    %v2669 = vld [vmem:[%s2668] sm:$0x3]
    %2671 = vrot.lane.b32.xlu0 %v2332, 64
    %v2672 = vpop.permute.xlu0 %2671
    %v2673 = vsel %vm134, %v2672, 0
    %2675 = vmatprep.subr.mxu0 0.0
    %2676 = vmatpush1.msra.mxu0 %v60
    %2677 = vmatprep.subr.mxu0 0.0
    %2678 = vmatpush1.msra.mxu0 %v61
    %2679 = vmatprep.subr.mxu0 0.0
    %2680 = vmatpush1.msra.mxu0 %v62
    %2681 = vmatprep.subr.mxu0 0.0
    %2682 = vmatpush1.msra.mxu0 %v63
    %2683 = vmatprep.subr.mxu0 0.0
    %2684 = vmatpush1.msra.mxu0 0.0
    %2685 = vmatprep.subr.mxu0 0.0
    %2686 = vmatpush1.msra.mxu0 0.0
    %2687 = vmatprep.subr.mxu0 0.0
    %2688 = vmatpush1.msra.mxu0 0.0
    %2689 = vmatprep.subr.mxu0 0.0
    %2690 = vmatpush1.msra.mxu0 0.0
    %2691 = vmatprep.subr.mxu0 0.0
    %2692 = vmatpush1.msra.mxu0 0.0
    %2693 = vmatprep.subr.mxu0 0.0
    %2694 = vmatpush1.msra.mxu0 0.0
    %2695 = vmatprep.subr.mxu0 0.0
    %2696 = vmatpush1.msra.mxu0 0.0
    %2697 = vmatprep.subr.mxu0 0.0
    %2698 = vmatpush1.msra.mxu0 0.0
    %2699 = vmatprep.subr.mxu0 0.0
    %2700 = vmatpush1.msra.mxu0 0.0
    %2701 = vmatprep.subr.mxu0 0.0
    %2702 = vmatpush1.msra.mxu0 0.0
    %2703 = vmatprep.subr.mxu0 0.0
    %2704 = vmatpush1.msra.mxu0 0.0
    %2705 = vmatprep.subr.mxu0 0.0
    %2706 = vmatpush1.msra.mxu0 0.0
    %2707 = vmatprep.subr.mxu0 0.0
    %2708 = vmatpush1.msra.mxu0 0.0
    %2709 = vmatprep.subr.mxu0 0.0
    %2710 = vmatpush1.msra.mxu0 0.0
    %2711 = vmatprep.subr.mxu0 0.0
    %2712 = vmatpush1.msra.mxu0 0.0
    %2713 = vmatprep.subr.mxu0 0.0
    %2714 = vmatpush1.msra.mxu0 0.0
    %2715 = vmatprep.subr.mxu0 0.0
    %2716 = vmatpush1.msra.mxu0 0.0
    %2717 = vmatprep.subr.mxu0 0.0
    %2718 = vmatpush1.msra.mxu0 0.0
    %2719 = vmatprep.subr.mxu0 0.0
    %2720 = vmatpush1.msra.mxu0 0.0
    %2721 = vmatprep.subr.mxu0 0.0
    %2722 = vmatpush1.msra.mxu0 0.0
    %2723 = vmatprep.subr.mxu0 0.0
    %2724 = vmatpush1.msra.mxu0 0.0
    %2725 = vmatprep.subr.mxu0 0.0
    %2726 = vmatpush1.msra.mxu0 0.0
    %2727 = vmatprep.subr.mxu0 0.0
    %2728 = vmatpush1.msra.mxu0 0.0
    %2729 = vmatprep.subr.mxu0 0.0
    %2730 = vmatpush1.msra.mxu0 0.0
    %2731 = vmatprep.subr.mxu0 0.0
    %2732 = vmatpush1.msra.mxu0 0.0
    %2733 = vmatprep.subr.mxu0 0.0
    %2734 = vmatpush1.msra.mxu0 0.0
    %2735 = vmatprep.subr.mxu0 0.0
    %2736 = vmatpush1.msra.mxu0 0.0
    %2737 = vmatprep.subr.mxu0 0.0
    %2738 = vmatpush1.msra.mxu0 0.0
    %2739 = vmatprep.mubr.f32.mxu0 0.0
    %2740 = vmatmul.mubr.f32.gmra.mrb[0].mxu0 %v2673
    %v2741 = vpop.f32.mrb[0].mxu0
    %v2742 = vadd.f32 0.0, %v2741
    %v2743 = vpop.f32.mrb[0].mxu0
    %2744 = vdwg.mxu0
    %v2746 = vsel %vm208, %v2669, 0
    %2748 = vmatprep.subr.mxu0 0.0
    %2749 = vmatpush1.msra.mxu0 %v58
    %2750 = vmatprep.subr.mxu0 0.0
    %2751 = vmatpush1.msra.mxu0 %v59
    %2752 = vmatprep.subr.mxu0 0.0
    %2753 = vmatpush1.msra.mxu0 0.0
    %2754 = vmatprep.subr.mxu0 0.0
    %2755 = vmatpush1.msra.mxu0 0.0
    %2756 = vmatprep.subr.mxu0 0.0
    %2757 = vmatpush1.msra.mxu0 0.0
    %2758 = vmatprep.subr.mxu0 0.0
    %2759 = vmatpush1.msra.mxu0 0.0
    %2760 = vmatprep.subr.mxu0 0.0
    %2761 = vmatpush1.msra.mxu0 0.0
    %2762 = vmatprep.subr.mxu0 0.0
    %2763 = vmatpush1.msra.mxu0 0.0
    %2764 = vmatprep.subr.mxu0 0.0
    %2765 = vmatpush1.msra.mxu0 0.0
    %2766 = vmatprep.subr.mxu0 0.0
    %2767 = vmatpush1.msra.mxu0 0.0
    %2768 = vmatprep.subr.mxu0 0.0
    %2769 = vmatpush1.msra.mxu0 0.0
    %2770 = vmatprep.subr.mxu0 0.0
    %2771 = vmatpush1.msra.mxu0 0.0
    %2772 = vmatprep.subr.mxu0 0.0
    %2773 = vmatpush1.msra.mxu0 0.0
    %2774 = vmatprep.subr.mxu0 0.0
    %2775 = vmatpush1.msra.mxu0 0.0
    %2776 = vmatprep.subr.mxu0 0.0
    %2777 = vmatpush1.msra.mxu0 0.0
    %2778 = vmatprep.subr.mxu0 0.0
    %2779 = vmatpush1.msra.mxu0 0.0
    %2780 = vmatprep.subr.mxu0 0.0
    %2781 = vmatpush1.msra.mxu0 0.0
    %2782 = vmatprep.subr.mxu0 0.0
    %2783 = vmatpush1.msra.mxu0 0.0
    %2784 = vmatprep.subr.mxu0 0.0
    %2785 = vmatpush1.msra.mxu0 0.0
    %2786 = vmatprep.subr.mxu0 0.0
    %2787 = vmatpush1.msra.mxu0 0.0
    %2788 = vmatprep.subr.mxu0 0.0
    %2789 = vmatpush1.msra.mxu0 0.0
    %2790 = vmatprep.subr.mxu0 0.0
    %2791 = vmatpush1.msra.mxu0 0.0
    %2792 = vmatprep.subr.mxu0 0.0
    %2793 = vmatpush1.msra.mxu0 0.0
    %2794 = vmatprep.subr.mxu0 0.0
    %2795 = vmatpush1.msra.mxu0 0.0
    %2796 = vmatprep.subr.mxu0 0.0
    %2797 = vmatpush1.msra.mxu0 0.0
    %2798 = vmatprep.subr.mxu0 0.0
    %2799 = vmatpush1.msra.mxu0 0.0
    %2800 = vmatprep.subr.mxu0 0.0
    %2801 = vmatpush1.msra.mxu0 0.0
    %2802 = vmatprep.subr.mxu0 0.0
    %2803 = vmatpush1.msra.mxu0 0.0
    %2804 = vmatprep.subr.mxu0 0.0
    %2805 = vmatpush1.msra.mxu0 0.0
    %2806 = vmatprep.subr.mxu0 0.0
    %2807 = vmatpush1.msra.mxu0 0.0
    %2808 = vmatprep.subr.mxu0 0.0
    %2809 = vmatpush1.msra.mxu0 0.0
    %2810 = vmatprep.subr.mxu0 0.0
    %2811 = vmatpush1.msra.mxu0 0.0
    %2812 = vmatprep.mubr.f32.mxu0 0.0
    %2813 = vmatmul.mubr.f32.gmra.mrb[0].mxu0 %v2746
    %v2814 = vpop.f32.mrb[0].mxu0
    %v2815 = vadd.f32 %v2742, %v2814
    %v2816 = vpop.f32.mrb[0].mxu0
    %2817 = vdwg.mxu0
    %v2818 = vadd.f32 %v2815, %v69
    %v2819 = vmul.f32 %v2818, 0.5
    %v2820 = vtanh.pop %v2819
    %v2821 = vadd.f32 %v2820, 1.0
    %v2822 = vmul.f32 %v2821, 0.5
    %v2823 = vtanh.pop %v2818
    %v2824 = vmul.f32 %v2822, %v2326
    %2826 = vrot.lane.b32.xlu0 %v2823, 32
    %v2827 = vpop.permute.xlu0 %2826
    %v2829 = vmul.f32 %v2822, %v2827
    %2831 = vrot.lane.b32.xlu0 %v2829, 32
    %v2832 = vpop.permute.xlu0 %2831
    %v2834 = vadd.f32 %v2824, %v2832
    %v2835 = vtanh.pop %v2834
    %2837 = vrot.lane.b32.xlu0 %v2835, 32
    %v2838 = vpop.permute.xlu0 %2837
    %v2840 = vmul.f32 %v2822, %v2838
    %2842 = vrot.lane.b32.xlu0 %v2326, 96
    %v2843 = vpop.permute.xlu0 %2842
    %v2845 = vsel %vm134, %v2843, %v2834
    %v2847 = vsel %vm306, %v2845, 0
    %2849 = vmatprep.subr.mxu0 0.0
    %2850 = vmatpush1.msra.mxu0 %v71
    %2851 = vmatprep.subr.mxu0 0.0
    %2852 = vmatpush1.msra.mxu0 %v72
    %2853 = vmatprep.subr.mxu0 0.0
    %2854 = vmatpush1.msra.mxu0 %v73
    %2855 = vmatprep.subr.mxu0 0.0
    %2856 = vmatpush1.msra.mxu0 %v74
    %2857 = vmatprep.subr.mxu0 0.0
    %2858 = vmatpush1.msra.mxu0 %v75
    %2859 = vmatprep.subr.mxu0 0.0
    %2860 = vmatpush1.msra.mxu0 %v76
    %2861 = vmatprep.subr.mxu0 0.0
    %2862 = vmatpush1.msra.mxu0 %v77
    %2863 = vmatprep.subr.mxu0 0.0
    %2864 = vmatpush1.msra.mxu0 %v78
    %2865 = vmatprep.subr.mxu0 0.0
    %2866 = vmatpush1.msra.mxu0 0.0
    %2867 = vmatprep.subr.mxu0 0.0
    %2868 = vmatpush1.msra.mxu0 0.0
    %2869 = vmatprep.subr.mxu0 0.0
    %2870 = vmatpush1.msra.mxu0 0.0
    %2871 = vmatprep.subr.mxu0 0.0
    %2872 = vmatpush1.msra.mxu0 0.0
    %2873 = vmatprep.subr.mxu0 0.0
    %2874 = vmatpush1.msra.mxu0 0.0
    %2875 = vmatprep.subr.mxu0 0.0
    %2876 = vmatpush1.msra.mxu0 0.0
    %2877 = vmatprep.subr.mxu0 0.0
    %2878 = vmatpush1.msra.mxu0 0.0
    %2879 = vmatprep.subr.mxu0 0.0
    %2880 = vmatpush1.msra.mxu0 0.0
    %2881 = vmatprep.subr.mxu0 0.0
    %2882 = vmatpush1.msra.mxu0 0.0
    %2883 = vmatprep.subr.mxu0 0.0
    %2884 = vmatpush1.msra.mxu0 0.0
    %2885 = vmatprep.subr.mxu0 0.0
    %2886 = vmatpush1.msra.mxu0 0.0
    %2887 = vmatprep.subr.mxu0 0.0
    %2888 = vmatpush1.msra.mxu0 0.0
    %2889 = vmatprep.subr.mxu0 0.0
    %2890 = vmatpush1.msra.mxu0 0.0
    %2891 = vmatprep.subr.mxu0 0.0
    %2892 = vmatpush1.msra.mxu0 0.0
    %2893 = vmatprep.subr.mxu0 0.0
    %2894 = vmatpush1.msra.mxu0 0.0
    %2895 = vmatprep.subr.mxu0 0.0
    %2896 = vmatpush1.msra.mxu0 0.0
    %2897 = vmatprep.subr.mxu0 0.0
    %2898 = vmatpush1.msra.mxu0 0.0
    %2899 = vmatprep.subr.mxu0 0.0
    %2900 = vmatpush1.msra.mxu0 0.0
    %2901 = vmatprep.subr.mxu0 0.0
    %2902 = vmatpush1.msra.mxu0 0.0
    %2903 = vmatprep.subr.mxu0 0.0
    %2904 = vmatpush1.msra.mxu0 0.0
    %2905 = vmatprep.subr.mxu0 0.0
    %2906 = vmatpush1.msra.mxu0 0.0
    %2907 = vmatprep.subr.mxu0 0.0
    %2908 = vmatpush1.msra.mxu0 0.0
    %2909 = vmatprep.subr.mxu0 0.0
    %2910 = vmatpush1.msra.mxu0 0.0
    %2911 = vmatprep.subr.mxu0 0.0
    %2912 = vmatpush1.msra.mxu0 0.0
    %2913 = vmatprep.mubr.f32.mxu0 0.0
    %2914 = vmatmul.mubr.f32.gmra.mrb[0].mxu0 %v2847
    %v2915 = vpop.f32.mrb[0].mxu0
    %v2916 = vadd.f32 %v84, %v2915
    %v2917 = vpop.f32.mrb[0].mxu0
    %2918 = vdwg.mxu0
    %v2919 = vmax.f32 %v2916, 0.0
    %v2921 = vsel %vm134, %v2919, 0
    %2923 = vmatprep.subr.mxu0 0.0
    %2924 = vmatpush1.msra.mxu0 %v86
    %2925 = vmatprep.subr.mxu0 0.0
    %2926 = vmatpush1.msra.mxu0 %v87
    %2927 = vmatprep.subr.mxu0 0.0
    %2928 = vmatpush1.msra.mxu0 %v88
    %2929 = vmatprep.subr.mxu0 0.0
    %2930 = vmatpush1.msra.mxu0 %v89
    %2931 = vmatprep.subr.mxu0 0.0
    %2932 = vmatpush1.msra.mxu0 0.0
    %2933 = vmatprep.subr.mxu0 0.0
    %2934 = vmatpush1.msra.mxu0 0.0
    %2935 = vmatprep.subr.mxu0 0.0
    %2936 = vmatpush1.msra.mxu0 0.0
    %2937 = vmatprep.subr.mxu0 0.0
    %2938 = vmatpush1.msra.mxu0 0.0
    %2939 = vmatprep.subr.mxu0 0.0
    %2940 = vmatpush1.msra.mxu0 0.0
    %2941 = vmatprep.subr.mxu0 0.0
    %2942 = vmatpush1.msra.mxu0 0.0
    %2943 = vmatprep.subr.mxu0 0.0
    %2944 = vmatpush1.msra.mxu0 0.0
    %2945 = vmatprep.subr.mxu0 0.0
    %2946 = vmatpush1.msra.mxu0 0.0
    %2947 = vmatprep.subr.mxu0 0.0
    %2948 = vmatpush1.msra.mxu0 0.0
    %2949 = vmatprep.subr.mxu0 0.0
    %2950 = vmatpush1.msra.mxu0 0.0
    %2951 = vmatprep.subr.mxu0 0.0
    %2952 = vmatpush1.msra.mxu0 0.0
    %2953 = vmatprep.subr.mxu0 0.0
    %2954 = vmatpush1.msra.mxu0 0.0
    %2955 = vmatprep.subr.mxu0 0.0
    %2956 = vmatpush1.msra.mxu0 0.0
    %2957 = vmatprep.subr.mxu0 0.0
    %2958 = vmatpush1.msra.mxu0 0.0
    %2959 = vmatprep.subr.mxu0 0.0
    %2960 = vmatpush1.msra.mxu0 0.0
    %2961 = vmatprep.subr.mxu0 0.0
    %2962 = vmatpush1.msra.mxu0 0.0
    %2963 = vmatprep.subr.mxu0 0.0
    %2964 = vmatpush1.msra.mxu0 0.0
    %2965 = vmatprep.subr.mxu0 0.0
    %2966 = vmatpush1.msra.mxu0 0.0
    %2967 = vmatprep.subr.mxu0 0.0
    %2968 = vmatpush1.msra.mxu0 0.0
    %2969 = vmatprep.subr.mxu0 0.0
    %2970 = vmatpush1.msra.mxu0 0.0
    %2971 = vmatprep.subr.mxu0 0.0
    %2972 = vmatpush1.msra.mxu0 0.0
    %2973 = vmatprep.subr.mxu0 0.0
    %2974 = vmatpush1.msra.mxu0 0.0
    %2975 = vmatprep.subr.mxu0 0.0
    %2976 = vmatpush1.msra.mxu0 0.0
    %2977 = vmatprep.subr.mxu0 0.0
    %2978 = vmatpush1.msra.mxu0 0.0
    %2979 = vmatprep.subr.mxu0 0.0
    %2980 = vmatpush1.msra.mxu0 0.0
    %2981 = vmatprep.subr.mxu0 0.0
    %2982 = vmatpush1.msra.mxu0 0.0
    %2983 = vmatprep.subr.mxu0 0.0
    %2984 = vmatpush1.msra.mxu0 0.0
    %2985 = vmatprep.subr.mxu0 0.0
    %2986 = vmatpush1.msra.mxu0 0.0
    %2987 = vmatprep.mubr.f32.mxu0 0.0
    %2988 = vmatmul.mubr.f32.gmra.mrb[0].mxu0 %v2921
    %v2989 = vpop.f32.mrb[0].mxu0
    %v2990 = vadd.f32 %v95, %v2989
    %v2991 = vpop.f32.mrb[0].mxu0
    %2992 = vdwg.mxu0
    %v2993 = vsel %vm454, %v2990, -inf
    %2994 = vmax.xlane.f32.xlu0 %v2993
    %v2995 = vpop.xlane.xlu0 %2994
    %v2996 = vsub.f32 %v2990, %v2995
    %v2997 = vmul.f32 %v2996, 1.442695
    %v2998 = vpow.pop %v2997
    %v2999 = vsel %vm454, %v2998, 0.0
    %3000 = vadd.xlane.f32.xlu0 %v2999
    %v3001 = vpop.xlane.xlu0 %3000
    %v3002 = vrcp.pop %v3001
    %v3003 = vmul.f32 %v3001, %v3002
    %v3004 = vsub.f32 2.0, %v3003
    %v3005 = vmul.f32 %v3002, %v3004
    %v3006 = vmul.f32 %v2998, %v3005
    %v3007 = vmul.f32 %v3006, %v2845
    %3009 = vrot.lane.b32.xlu0 %v2667, 48
    %v3010 = vpop.permute.xlu0 %3009
    %v3012 = vsel %vm306, %v3007, %v3010
    %v3014 = vsel %vm471, %v3012, 0
    %3016 = vmatprep.subr.mxu0 0.0
    %3017 = vmatpush1.msra.mxu0 %v97
    %3018 = vmatprep.subr.mxu0 0.0
    %3019 = vmatpush1.msra.mxu0 %v98
    %3020 = vmatprep.subr.mxu0 0.0
    %3021 = vmatpush1.msra.mxu0 %v99
    %3022 = vmatprep.subr.mxu0 0.0
    %3023 = vmatpush1.msra.mxu0 %v100
    %3024 = vmatprep.subr.mxu0 0.0
    %3025 = vmatpush1.msra.mxu0 %v101
    %3026 = vmatprep.subr.mxu0 0.0
    %3027 = vmatpush1.msra.mxu0 %v102
    %3028 = vmatprep.subr.mxu0 0.0
    %3029 = vmatpush1.msra.mxu0 %v103
    %3030 = vmatprep.subr.mxu0 0.0
    %3031 = vmatpush1.msra.mxu0 %v104
    %3032 = vmatprep.subr.mxu0 0.0
    %3033 = vmatpush1.msra.mxu0 %v105
    %3034 = vmatprep.subr.mxu0 0.0
    %3035 = vmatpush1.msra.mxu0 %v106
    %3036 = vmatprep.subr.mxu0 0.0
    %3037 = vmatpush1.msra.mxu0 0.0
    %3038 = vmatprep.subr.mxu0 0.0
    %3039 = vmatpush1.msra.mxu0 0.0
    %3040 = vmatprep.subr.mxu0 0.0
    %3041 = vmatpush1.msra.mxu0 0.0
    %3042 = vmatprep.subr.mxu0 0.0
    %3043 = vmatpush1.msra.mxu0 0.0
    %3044 = vmatprep.subr.mxu0 0.0
    %3045 = vmatpush1.msra.mxu0 0.0
    %3046 = vmatprep.subr.mxu0 0.0
    %3047 = vmatpush1.msra.mxu0 0.0
    %3048 = vmatprep.subr.mxu0 0.0
    %3049 = vmatpush1.msra.mxu0 0.0
    %3050 = vmatprep.subr.mxu0 0.0
    %3051 = vmatpush1.msra.mxu0 0.0
    %3052 = vmatprep.subr.mxu0 0.0
    %3053 = vmatpush1.msra.mxu0 0.0
    %3054 = vmatprep.subr.mxu0 0.0
    %3055 = vmatpush1.msra.mxu0 0.0
    %3056 = vmatprep.subr.mxu0 0.0
    %3057 = vmatpush1.msra.mxu0 0.0
    %3058 = vmatprep.subr.mxu0 0.0
    %3059 = vmatpush1.msra.mxu0 0.0
    %3060 = vmatprep.subr.mxu0 0.0
    %3061 = vmatpush1.msra.mxu0 0.0
    %3062 = vmatprep.subr.mxu0 0.0
    %3063 = vmatpush1.msra.mxu0 0.0
    %3064 = vmatprep.subr.mxu0 0.0
    %3065 = vmatpush1.msra.mxu0 0.0
    %3066 = vmatprep.subr.mxu0 0.0
    %3067 = vmatpush1.msra.mxu0 0.0
    %3068 = vmatprep.subr.mxu0 0.0
    %3069 = vmatpush1.msra.mxu0 0.0
    %3070 = vmatprep.subr.mxu0 0.0
    %3071 = vmatpush1.msra.mxu0 0.0
    %3072 = vmatprep.subr.mxu0 0.0
    %3073 = vmatpush1.msra.mxu0 0.0
    %3074 = vmatprep.subr.mxu0 0.0
    %3075 = vmatpush1.msra.mxu0 0.0
    %3076 = vmatprep.subr.mxu0 0.0
    %3077 = vmatpush1.msra.mxu0 0.0
    %3078 = vmatprep.subr.mxu0 0.0
    %3079 = vmatpush1.msra.mxu0 0.0
    %3080 = vmatprep.mubr.f32.mxu0 0.0
    %3081 = vmatmul.mubr.f32.gmra.mrb[0].mxu0 %v3014
    %v3082 = vpop.f32.mrb[0].mxu0
    %v3083 = vadd.f32 %v112, %v3082
    %v3084 = vpop.f32.mrb[0].mxu0
    %3085 = vdwg.mxu0
    %v3086 = vmax.f32 %v3083, 0.0
    %v3088 = vsel %vm546, %v3086, 0
    %3090 = vmatprep.subr.mxu0 0.0
    %3091 = vmatpush1.msra.mxu0 %v114
    %3092 = vmatprep.subr.mxu0 0.0
    %3093 = vmatpush1.msra.mxu0 %v115
    %3094 = vmatprep.subr.mxu0 0.0
    %3095 = vmatpush1.msra.mxu0 %v116
    %3096 = vmatprep.subr.mxu0 0.0
    %3097 = vmatpush1.msra.mxu0 %v117
    %3098 = vmatprep.subr.mxu0 0.0
    %3099 = vmatpush1.msra.mxu0 %v118
    %3100 = vmatprep.subr.mxu0 0.0
    %3101 = vmatpush1.msra.mxu0 %v119
    %3102 = vmatprep.subr.mxu0 0.0
    %3103 = vmatpush1.msra.mxu0 %v120
    %3104 = vmatprep.subr.mxu0 0.0
    %3105 = vmatpush1.msra.mxu0 %v121
    %3106 = vmatprep.subr.mxu0 0.0
    %3107 = vmatpush1.msra.mxu0 %v122
    %3108 = vmatprep.subr.mxu0 0.0
    %3109 = vmatpush1.msra.mxu0 %v123
    %3110 = vmatprep.subr.mxu0 0.0
    %3111 = vmatpush1.msra.mxu0 %v124
    %3112 = vmatprep.subr.mxu0 0.0
    %3113 = vmatpush1.msra.mxu0 %v125
    %3114 = vmatprep.subr.mxu0 0.0
    %3115 = vmatpush1.msra.mxu0 0.0
    %3116 = vmatprep.subr.mxu0 0.0
    %3117 = vmatpush1.msra.mxu0 0.0
    %3118 = vmatprep.subr.mxu0 0.0
    %3119 = vmatpush1.msra.mxu0 0.0
    %3120 = vmatprep.subr.mxu0 0.0
    %3121 = vmatpush1.msra.mxu0 0.0
    %3122 = vmatprep.subr.mxu0 0.0
    %3123 = vmatpush1.msra.mxu0 0.0
    %3124 = vmatprep.subr.mxu0 0.0
    %3125 = vmatpush1.msra.mxu0 0.0
    %3126 = vmatprep.subr.mxu0 0.0
    %3127 = vmatpush1.msra.mxu0 0.0
    %3128 = vmatprep.subr.mxu0 0.0
    %3129 = vmatpush1.msra.mxu0 0.0
    %3130 = vmatprep.subr.mxu0 0.0
    %3131 = vmatpush1.msra.mxu0 0.0
    %3132 = vmatprep.subr.mxu0 0.0
    %3133 = vmatpush1.msra.mxu0 0.0
    %3134 = vmatprep.subr.mxu0 0.0
    %3135 = vmatpush1.msra.mxu0 0.0
    %3136 = vmatprep.subr.mxu0 0.0
    %3137 = vmatpush1.msra.mxu0 0.0
    %3138 = vmatprep.subr.mxu0 0.0
    %3139 = vmatpush1.msra.mxu0 0.0
    %3140 = vmatprep.subr.mxu0 0.0
    %3141 = vmatpush1.msra.mxu0 0.0
    %3142 = vmatprep.subr.mxu0 0.0
    %3143 = vmatpush1.msra.mxu0 0.0
    %3144 = vmatprep.subr.mxu0 0.0
    %3145 = vmatpush1.msra.mxu0 0.0
    %3146 = vmatprep.subr.mxu0 0.0
    %3147 = vmatpush1.msra.mxu0 0.0
    %3148 = vmatprep.subr.mxu0 0.0
    %3149 = vmatpush1.msra.mxu0 0.0
    %3150 = vmatprep.subr.mxu0 0.0
    %3151 = vmatpush1.msra.mxu0 0.0
    %3152 = vmatprep.subr.mxu0 0.0
    %3153 = vmatpush1.msra.mxu0 0.0
    %3154 = vmatprep.mubr.f32.mxu0 0.0
    %3155 = vmatmul.mubr.f32.gmra.mrb[0].mxu0 %v3088
    %v3156 = vpop.f32.mrb[0].mxu0
    %v3157 = vadd.f32 %v131, %v3156
    %v3158 = vpop.f32.mrb[0].mxu0
    %3159 = vdwg.mxu0
    %v3160 = vtanh.pop %v3157
    %v3161 = vmul.f32 %v3157, 0.5
    %v3162 = vtanh.pop %v3161
    %v3163 = vadd.f32 %v3162, 1.0
    %v3164 = vmul.f32 %v3163, 0.5
    %v3165 = vmul.f32 %v3164, %v2667
    %3167 = vrot.lane.b32.xlu0 %v3160, 32
    %v3168 = vpop.permute.xlu0 %3167
    %v3170 = vmul.f32 %v3164, %v3168
    %3172 = vrot.lane.b32.xlu0 %v3170, 112
    %v3173 = vpop.permute.xlu0 %3172
    %v3175 = vadd.f32 %v3165, %v3173
    %s3176 = scalar_lea.vmem %s0, 12
    %v3177 = vld [vmem:[%s3176] sm:$0x3]
    %3179 = vrot.lane.b32.xlu0 %v2840, 64
    %v3180 = vpop.permute.xlu0 %3179
    %v3181 = vsel %vm134, %v3180, 0
    %3183 = vmatprep.subr.mxu0 0.0
    %3184 = vmatpush1.msra.mxu0 %v60
    %3185 = vmatprep.subr.mxu0 0.0
    %3186 = vmatpush1.msra.mxu0 %v61
    %3187 = vmatprep.subr.mxu0 0.0
    %3188 = vmatpush1.msra.mxu0 %v62
    %3189 = vmatprep.subr.mxu0 0.0
    %3190 = vmatpush1.msra.mxu0 %v63
    %3191 = vmatprep.subr.mxu0 0.0
    %3192 = vmatpush1.msra.mxu0 0.0
    %3193 = vmatprep.subr.mxu0 0.0
    %3194 = vmatpush1.msra.mxu0 0.0
    %3195 = vmatprep.subr.mxu0 0.0
    %3196 = vmatpush1.msra.mxu0 0.0
    %3197 = vmatprep.subr.mxu0 0.0
    %3198 = vmatpush1.msra.mxu0 0.0
    %3199 = vmatprep.subr.mxu0 0.0
    %3200 = vmatpush1.msra.mxu0 0.0
    %3201 = vmatprep.subr.mxu0 0.0
    %3202 = vmatpush1.msra.mxu0 0.0
    %3203 = vmatprep.subr.mxu0 0.0
    %3204 = vmatpush1.msra.mxu0 0.0
    %3205 = vmatprep.subr.mxu0 0.0
    %3206 = vmatpush1.msra.mxu0 0.0
    %3207 = vmatprep.subr.mxu0 0.0
    %3208 = vmatpush1.msra.mxu0 0.0
    %3209 = vmatprep.subr.mxu0 0.0
    %3210 = vmatpush1.msra.mxu0 0.0
    %3211 = vmatprep.subr.mxu0 0.0
    %3212 = vmatpush1.msra.mxu0 0.0
    %3213 = vmatprep.subr.mxu0 0.0
    %3214 = vmatpush1.msra.mxu0 0.0
    %3215 = vmatprep.subr.mxu0 0.0
    %3216 = vmatpush1.msra.mxu0 0.0
    %3217 = vmatprep.subr.mxu0 0.0
    %3218 = vmatpush1.msra.mxu0 0.0
    %3219 = vmatprep.subr.mxu0 0.0
    %3220 = vmatpush1.msra.mxu0 0.0
    %3221 = vmatprep.subr.mxu0 0.0
    %3222 = vmatpush1.msra.mxu0 0.0
    %3223 = vmatprep.subr.mxu0 0.0
    %3224 = vmatpush1.msra.mxu0 0.0
    %3225 = vmatprep.subr.mxu0 0.0
    %3226 = vmatpush1.msra.mxu0 0.0
    %3227 = vmatprep.subr.mxu0 0.0
    %3228 = vmatpush1.msra.mxu0 0.0
    %3229 = vmatprep.subr.mxu0 0.0
    %3230 = vmatpush1.msra.mxu0 0.0
    %3231 = vmatprep.subr.mxu0 0.0
    %3232 = vmatpush1.msra.mxu0 0.0
    %3233 = vmatprep.subr.mxu0 0.0
    %3234 = vmatpush1.msra.mxu0 0.0
    %3235 = vmatprep.subr.mxu0 0.0
    %3236 = vmatpush1.msra.mxu0 0.0
    %3237 = vmatprep.subr.mxu0 0.0
    %3238 = vmatpush1.msra.mxu0 0.0
    %3239 = vmatprep.subr.mxu0 0.0
    %3240 = vmatpush1.msra.mxu0 0.0
    %3241 = vmatprep.subr.mxu0 0.0
    %3242 = vmatpush1.msra.mxu0 0.0
    %3243 = vmatprep.subr.mxu0 0.0
    %3244 = vmatpush1.msra.mxu0 0.0
    %3245 = vmatprep.subr.mxu0 0.0
    %3246 = vmatpush1.msra.mxu0 0.0
    %3247 = vmatprep.mubr.f32.mxu0 0.0
    %3248 = vmatmul.mubr.f32.gmra.mrb[0].mxu0 %v3181
    %v3249 = vpop.f32.mrb[0].mxu0
    %v3250 = vadd.f32 0.0, %v3249
    %v3251 = vpop.f32.mrb[0].mxu0
    %3252 = vdwg.mxu0
    %v3254 = vsel %vm208, %v3177, 0
    %3256 = vmatprep.subr.mxu0 0.0
    %3257 = vmatpush1.msra.mxu0 %v58
    %3258 = vmatprep.subr.mxu0 0.0
    %3259 = vmatpush1.msra.mxu0 %v59
    %3260 = vmatprep.subr.mxu0 0.0
    %3261 = vmatpush1.msra.mxu0 0.0
    %3262 = vmatprep.subr.mxu0 0.0
    %3263 = vmatpush1.msra.mxu0 0.0
    %3264 = vmatprep.subr.mxu0 0.0
    %3265 = vmatpush1.msra.mxu0 0.0
    %3266 = vmatprep.subr.mxu0 0.0
    %3267 = vmatpush1.msra.mxu0 0.0
    %3268 = vmatprep.subr.mxu0 0.0
    %3269 = vmatpush1.msra.mxu0 0.0
    %3270 = vmatprep.subr.mxu0 0.0
    %3271 = vmatpush1.msra.mxu0 0.0
    %3272 = vmatprep.subr.mxu0 0.0
    %3273 = vmatpush1.msra.mxu0 0.0
    %3274 = vmatprep.subr.mxu0 0.0
    %3275 = vmatpush1.msra.mxu0 0.0
    %3276 = vmatprep.subr.mxu0 0.0
    %3277 = vmatpush1.msra.mxu0 0.0
    %3278 = vmatprep.subr.mxu0 0.0
    %3279 = vmatpush1.msra.mxu0 0.0
    %3280 = vmatprep.subr.mxu0 0.0
    %3281 = vmatpush1.msra.mxu0 0.0
    %3282 = vmatprep.subr.mxu0 0.0
    %3283 = vmatpush1.msra.mxu0 0.0
    %3284 = vmatprep.subr.mxu0 0.0
    %3285 = vmatpush1.msra.mxu0 0.0
    %3286 = vmatprep.subr.mxu0 0.0
    %3287 = vmatpush1.msra.mxu0 0.0
    %3288 = vmatprep.subr.mxu0 0.0
    %3289 = vmatpush1.msra.mxu0 0.0
    %3290 = vmatprep.subr.mxu0 0.0
    %3291 = vmatpush1.msra.mxu0 0.0
    %3292 = vmatprep.subr.mxu0 0.0
    %3293 = vmatpush1.msra.mxu0 0.0
    %3294 = vmatprep.subr.mxu0 0.0
    %3295 = vmatpush1.msra.mxu0 0.0
    %3296 = vmatprep.subr.mxu0 0.0
    %3297 = vmatpush1.msra.mxu0 0.0
    %3298 = vmatprep.subr.mxu0 0.0
    %3299 = vmatpush1.msra.mxu0 0.0
    %3300 = vmatprep.subr.mxu0 0.0
    %3301 = vmatpush1.msra.mxu0 0.0
    %3302 = vmatprep.subr.mxu0 0.0
    %3303 = vmatpush1.msra.mxu0 0.0
    %3304 = vmatprep.subr.mxu0 0.0
    %3305 = vmatpush1.msra.mxu0 0.0
    %3306 = vmatprep.subr.mxu0 0.0
    %3307 = vmatpush1.msra.mxu0 0.0
    %3308 = vmatprep.subr.mxu0 0.0
    %3309 = vmatpush1.msra.mxu0 0.0
    %3310 = vmatprep.subr.mxu0 0.0
    %3311 = vmatpush1.msra.mxu0 0.0
    %3312 = vmatprep.subr.mxu0 0.0
    %3313 = vmatpush1.msra.mxu0 0.0
    %3314 = vmatprep.subr.mxu0 0.0
    %3315 = vmatpush1.msra.mxu0 0.0
    %3316 = vmatprep.subr.mxu0 0.0
    %3317 = vmatpush1.msra.mxu0 0.0
    %3318 = vmatprep.subr.mxu0 0.0
    %3319 = vmatpush1.msra.mxu0 0.0
    %3320 = vmatprep.mubr.f32.mxu0 0.0
    %3321 = vmatmul.mubr.f32.gmra.mrb[0].mxu0 %v3254
    %v3322 = vpop.f32.mrb[0].mxu0
    %v3323 = vadd.f32 %v3250, %v3322
    %v3324 = vpop.f32.mrb[0].mxu0
    %3325 = vdwg.mxu0
    %v3326 = vadd.f32 %v3323, %v69
    %v3327 = vmul.f32 %v3326, 0.5
    %v3328 = vtanh.pop %v3327
    %v3329 = vadd.f32 %v3328, 1.0
    %v3330 = vmul.f32 %v3329, 0.5
    %v3331 = vtanh.pop %v3326
    %v3332 = vmul.f32 %v3330, %v2834
    %3334 = vrot.lane.b32.xlu0 %v3331, 32
    %v3335 = vpop.permute.xlu0 %3334
    %v3337 = vmul.f32 %v3330, %v3335
    %3339 = vrot.lane.b32.xlu0 %v3337, 32
    %v3340 = vpop.permute.xlu0 %3339
    %v3342 = vadd.f32 %v3332, %v3340
    %v3343 = vtanh.pop %v3342
    %3345 = vrot.lane.b32.xlu0 %v3343, 32
    %v3346 = vpop.permute.xlu0 %3345
    %v3348 = vmul.f32 %v3330, %v3346
    %3350 = vrot.lane.b32.xlu0 %v2834, 96
    %v3351 = vpop.permute.xlu0 %3350
    %v3353 = vsel %vm134, %v3351, %v3342
    %v3355 = vsel %vm306, %v3353, 0
    %3357 = vmatprep.subr.mxu0 0.0
    %3358 = vmatpush1.msra.mxu0 %v71
    %3359 = vmatprep.subr.mxu0 0.0
    %3360 = vmatpush1.msra.mxu0 %v72
    %3361 = vmatprep.subr.mxu0 0.0
    %3362 = vmatpush1.msra.mxu0 %v73
    %3363 = vmatprep.subr.mxu0 0.0
    %3364 = vmatpush1.msra.mxu0 %v74
    %3365 = vmatprep.subr.mxu0 0.0
    %3366 = vmatpush1.msra.mxu0 %v75
    %3367 = vmatprep.subr.mxu0 0.0
    %3368 = vmatpush1.msra.mxu0 %v76
    %3369 = vmatprep.subr.mxu0 0.0
    %3370 = vmatpush1.msra.mxu0 %v77
    %3371 = vmatprep.subr.mxu0 0.0
    %3372 = vmatpush1.msra.mxu0 %v78
    %3373 = vmatprep.subr.mxu0 0.0
    %3374 = vmatpush1.msra.mxu0 0.0
    %3375 = vmatprep.subr.mxu0 0.0
    %3376 = vmatpush1.msra.mxu0 0.0
    %3377 = vmatprep.subr.mxu0 0.0
    %3378 = vmatpush1.msra.mxu0 0.0
    %3379 = vmatprep.subr.mxu0 0.0
    %3380 = vmatpush1.msra.mxu0 0.0
    %3381 = vmatprep.subr.mxu0 0.0
    %3382 = vmatpush1.msra.mxu0 0.0
    %3383 = vmatprep.subr.mxu0 0.0
    %3384 = vmatpush1.msra.mxu0 0.0
    %3385 = vmatprep.subr.mxu0 0.0
    %3386 = vmatpush1.msra.mxu0 0.0
    %3387 = vmatprep.subr.mxu0 0.0
    %3388 = vmatpush1.msra.mxu0 0.0
    %3389 = vmatprep.subr.mxu0 0.0
    %3390 = vmatpush1.msra.mxu0 0.0
    %3391 = vmatprep.subr.mxu0 0.0
    %3392 = vmatpush1.msra.mxu0 0.0
    %3393 = vmatprep.subr.mxu0 0.0
    %3394 = vmatpush1.msra.mxu0 0.0
    %3395 = vmatprep.subr.mxu0 0.0
    %3396 = vmatpush1.msra.mxu0 0.0
    %3397 = vmatprep.subr.mxu0 0.0
    %3398 = vmatpush1.msra.mxu0 0.0
    %3399 = vmatprep.subr.mxu0 0.0
    %3400 = vmatpush1.msra.mxu0 0.0
    %3401 = vmatprep.subr.mxu0 0.0
    %3402 = vmatpush1.msra.mxu0 0.0
    %3403 = vmatprep.subr.mxu0 0.0
    %3404 = vmatpush1.msra.mxu0 0.0
    %3405 = vmatprep.subr.mxu0 0.0
    %3406 = vmatpush1.msra.mxu0 0.0
    %3407 = vmatprep.subr.mxu0 0.0
    %3408 = vmatpush1.msra.mxu0 0.0
    %3409 = vmatprep.subr.mxu0 0.0
    %3410 = vmatpush1.msra.mxu0 0.0
    %3411 = vmatprep.subr.mxu0 0.0
    %3412 = vmatpush1.msra.mxu0 0.0
    %3413 = vmatprep.subr.mxu0 0.0
    %3414 = vmatpush1.msra.mxu0 0.0
    %3415 = vmatprep.subr.mxu0 0.0
    %3416 = vmatpush1.msra.mxu0 0.0
    %3417 = vmatprep.subr.mxu0 0.0
    %3418 = vmatpush1.msra.mxu0 0.0
    %3419 = vmatprep.subr.mxu0 0.0
    %3420 = vmatpush1.msra.mxu0 0.0
    %3421 = vmatprep.mubr.f32.mxu0 0.0
    %3422 = vmatmul.mubr.f32.gmra.mrb[0].mxu0 %v3355
    %v3423 = vpop.f32.mrb[0].mxu0
    %v3424 = vadd.f32 %v84, %v3423
    %v3425 = vpop.f32.mrb[0].mxu0
    %3426 = vdwg.mxu0
    %v3427 = vmax.f32 %v3424, 0.0
    %v3429 = vsel %vm134, %v3427, 0
    %3431 = vmatprep.subr.mxu0 0.0
    %3432 = vmatpush1.msra.mxu0 %v86
    %3433 = vmatprep.subr.mxu0 0.0
    %3434 = vmatpush1.msra.mxu0 %v87
    %3435 = vmatprep.subr.mxu0 0.0
    %3436 = vmatpush1.msra.mxu0 %v88
    %3437 = vmatprep.subr.mxu0 0.0
    %3438 = vmatpush1.msra.mxu0 %v89
    %3439 = vmatprep.subr.mxu0 0.0
    %3440 = vmatpush1.msra.mxu0 0.0
    %3441 = vmatprep.subr.mxu0 0.0
    %3442 = vmatpush1.msra.mxu0 0.0
    %3443 = vmatprep.subr.mxu0 0.0
    %3444 = vmatpush1.msra.mxu0 0.0
    %3445 = vmatprep.subr.mxu0 0.0
    %3446 = vmatpush1.msra.mxu0 0.0
    %3447 = vmatprep.subr.mxu0 0.0
    %3448 = vmatpush1.msra.mxu0 0.0
    %3449 = vmatprep.subr.mxu0 0.0
    %3450 = vmatpush1.msra.mxu0 0.0
    %3451 = vmatprep.subr.mxu0 0.0
    %3452 = vmatpush1.msra.mxu0 0.0
    %3453 = vmatprep.subr.mxu0 0.0
    %3454 = vmatpush1.msra.mxu0 0.0
    %3455 = vmatprep.subr.mxu0 0.0
    %3456 = vmatpush1.msra.mxu0 0.0
    %3457 = vmatprep.subr.mxu0 0.0
    %3458 = vmatpush1.msra.mxu0 0.0
    %3459 = vmatprep.subr.mxu0 0.0
    %3460 = vmatpush1.msra.mxu0 0.0
    %3461 = vmatprep.subr.mxu0 0.0
    %3462 = vmatpush1.msra.mxu0 0.0
    %3463 = vmatprep.subr.mxu0 0.0
    %3464 = vmatpush1.msra.mxu0 0.0
    %3465 = vmatprep.subr.mxu0 0.0
    %3466 = vmatpush1.msra.mxu0 0.0
    %3467 = vmatprep.subr.mxu0 0.0
    %3468 = vmatpush1.msra.mxu0 0.0
    %3469 = vmatprep.subr.mxu0 0.0
    %3470 = vmatpush1.msra.mxu0 0.0
    %3471 = vmatprep.subr.mxu0 0.0
    %3472 = vmatpush1.msra.mxu0 0.0
    %3473 = vmatprep.subr.mxu0 0.0
    %3474 = vmatpush1.msra.mxu0 0.0
    %3475 = vmatprep.subr.mxu0 0.0
    %3476 = vmatpush1.msra.mxu0 0.0
    %3477 = vmatprep.subr.mxu0 0.0
    %3478 = vmatpush1.msra.mxu0 0.0
    %3479 = vmatprep.subr.mxu0 0.0
    %3480 = vmatpush1.msra.mxu0 0.0
    %3481 = vmatprep.subr.mxu0 0.0
    %3482 = vmatpush1.msra.mxu0 0.0
    %3483 = vmatprep.subr.mxu0 0.0
    %3484 = vmatpush1.msra.mxu0 0.0
    %3485 = vmatprep.subr.mxu0 0.0
    %3486 = vmatpush1.msra.mxu0 0.0
    %3487 = vmatprep.subr.mxu0 0.0
    %3488 = vmatpush1.msra.mxu0 0.0
    %3489 = vmatprep.subr.mxu0 0.0
    %3490 = vmatpush1.msra.mxu0 0.0
    %3491 = vmatprep.subr.mxu0 0.0
    %3492 = vmatpush1.msra.mxu0 0.0
    %3493 = vmatprep.subr.mxu0 0.0
    %3494 = vmatpush1.msra.mxu0 0.0
    %3495 = vmatprep.mubr.f32.mxu0 0.0
    %3496 = vmatmul.mubr.f32.gmra.mrb[0].mxu0 %v3429
    %v3497 = vpop.f32.mrb[0].mxu0
    %v3498 = vadd.f32 %v95, %v3497
    %v3499 = vpop.f32.mrb[0].mxu0
    %3500 = vdwg.mxu0
    %v3501 = vsel %vm454, %v3498, -inf
    %3502 = vmax.xlane.f32.xlu0 %v3501
    %v3503 = vpop.xlane.xlu0 %3502
    %v3504 = vsub.f32 %v3498, %v3503
    %v3505 = vmul.f32 %v3504, 1.442695
    %v3506 = vpow.pop %v3505
    %v3507 = vsel %vm454, %v3506, 0.0
    %3508 = vadd.xlane.f32.xlu0 %v3507
    %v3509 = vpop.xlane.xlu0 %3508
    %v3510 = vrcp.pop %v3509
    %v3511 = vmul.f32 %v3509, %v3510
    %v3512 = vsub.f32 2.0, %v3511
    %v3513 = vmul.f32 %v3510, %v3512
    %v3514 = vmul.f32 %v3506, %v3513
    %v3515 = vmul.f32 %v3514, %v3353
    %3517 = vrot.lane.b32.xlu0 %v3175, 48
    %v3518 = vpop.permute.xlu0 %3517
    %v3520 = vsel %vm306, %v3515, %v3518
    %v3522 = vsel %vm471, %v3520, 0
    %3524 = vmatprep.subr.mxu0 0.0
    %3525 = vmatpush1.msra.mxu0 %v97
    %3526 = vmatprep.subr.mxu0 0.0
    %3527 = vmatpush1.msra.mxu0 %v98
    %3528 = vmatprep.subr.mxu0 0.0
    %3529 = vmatpush1.msra.mxu0 %v99
    %3530 = vmatprep.subr.mxu0 0.0
    %3531 = vmatpush1.msra.mxu0 %v100
    %3532 = vmatprep.subr.mxu0 0.0
    %3533 = vmatpush1.msra.mxu0 %v101
    %3534 = vmatprep.subr.mxu0 0.0
    %3535 = vmatpush1.msra.mxu0 %v102
    %3536 = vmatprep.subr.mxu0 0.0
    %3537 = vmatpush1.msra.mxu0 %v103
    %3538 = vmatprep.subr.mxu0 0.0
    %3539 = vmatpush1.msra.mxu0 %v104
    %3540 = vmatprep.subr.mxu0 0.0
    %3541 = vmatpush1.msra.mxu0 %v105
    %3542 = vmatprep.subr.mxu0 0.0
    %3543 = vmatpush1.msra.mxu0 %v106
    %3544 = vmatprep.subr.mxu0 0.0
    %3545 = vmatpush1.msra.mxu0 0.0
    %3546 = vmatprep.subr.mxu0 0.0
    %3547 = vmatpush1.msra.mxu0 0.0
    %3548 = vmatprep.subr.mxu0 0.0
    %3549 = vmatpush1.msra.mxu0 0.0
    %3550 = vmatprep.subr.mxu0 0.0
    %3551 = vmatpush1.msra.mxu0 0.0
    %3552 = vmatprep.subr.mxu0 0.0
    %3553 = vmatpush1.msra.mxu0 0.0
    %3554 = vmatprep.subr.mxu0 0.0
    %3555 = vmatpush1.msra.mxu0 0.0
    %3556 = vmatprep.subr.mxu0 0.0
    %3557 = vmatpush1.msra.mxu0 0.0
    %3558 = vmatprep.subr.mxu0 0.0
    %3559 = vmatpush1.msra.mxu0 0.0
    %3560 = vmatprep.subr.mxu0 0.0
    %3561 = vmatpush1.msra.mxu0 0.0
    %3562 = vmatprep.subr.mxu0 0.0
    %3563 = vmatpush1.msra.mxu0 0.0
    %3564 = vmatprep.subr.mxu0 0.0
    %3565 = vmatpush1.msra.mxu0 0.0
    %3566 = vmatprep.subr.mxu0 0.0
    %3567 = vmatpush1.msra.mxu0 0.0
    %3568 = vmatprep.subr.mxu0 0.0
    %3569 = vmatpush1.msra.mxu0 0.0
    %3570 = vmatprep.subr.mxu0 0.0
    %3571 = vmatpush1.msra.mxu0 0.0
    %3572 = vmatprep.subr.mxu0 0.0
    %3573 = vmatpush1.msra.mxu0 0.0
    %3574 = vmatprep.subr.mxu0 0.0
    %3575 = vmatpush1.msra.mxu0 0.0
    %3576 = vmatprep.subr.mxu0 0.0
    %3577 = vmatpush1.msra.mxu0 0.0
    %3578 = vmatprep.subr.mxu0 0.0
    %3579 = vmatpush1.msra.mxu0 0.0
    %3580 = vmatprep.subr.mxu0 0.0
    %3581 = vmatpush1.msra.mxu0 0.0
    %3582 = vmatprep.subr.mxu0 0.0
    %3583 = vmatpush1.msra.mxu0 0.0
    %3584 = vmatprep.subr.mxu0 0.0
    %3585 = vmatpush1.msra.mxu0 0.0
    %3586 = vmatprep.subr.mxu0 0.0
    %3587 = vmatpush1.msra.mxu0 0.0
    %3588 = vmatprep.mubr.f32.mxu0 0.0
    %3589 = vmatmul.mubr.f32.gmra.mrb[0].mxu0 %v3522
    %v3590 = vpop.f32.mrb[0].mxu0
    %v3591 = vadd.f32 %v112, %v3590
    %v3592 = vpop.f32.mrb[0].mxu0
    %3593 = vdwg.mxu0
    %v3594 = vmax.f32 %v3591, 0.0
    %v3596 = vsel %vm546, %v3594, 0
    %3598 = vmatprep.subr.mxu0 0.0
    %3599 = vmatpush1.msra.mxu0 %v114
    %3600 = vmatprep.subr.mxu0 0.0
    %3601 = vmatpush1.msra.mxu0 %v115
    %3602 = vmatprep.subr.mxu0 0.0
    %3603 = vmatpush1.msra.mxu0 %v116
    %3604 = vmatprep.subr.mxu0 0.0
    %3605 = vmatpush1.msra.mxu0 %v117
    %3606 = vmatprep.subr.mxu0 0.0
    %3607 = vmatpush1.msra.mxu0 %v118
    %3608 = vmatprep.subr.mxu0 0.0
    %3609 = vmatpush1.msra.mxu0 %v119
    %3610 = vmatprep.subr.mxu0 0.0
    %3611 = vmatpush1.msra.mxu0 %v120
    %3612 = vmatprep.subr.mxu0 0.0
    %3613 = vmatpush1.msra.mxu0 %v121
    %3614 = vmatprep.subr.mxu0 0.0
    %3615 = vmatpush1.msra.mxu0 %v122
    %3616 = vmatprep.subr.mxu0 0.0
    %3617 = vmatpush1.msra.mxu0 %v123
    %3618 = vmatprep.subr.mxu0 0.0
    %3619 = vmatpush1.msra.mxu0 %v124
    %3620 = vmatprep.subr.mxu0 0.0
    %3621 = vmatpush1.msra.mxu0 %v125
    %3622 = vmatprep.subr.mxu0 0.0
    %3623 = vmatpush1.msra.mxu0 0.0
    %3624 = vmatprep.subr.mxu0 0.0
    %3625 = vmatpush1.msra.mxu0 0.0
    %3626 = vmatprep.subr.mxu0 0.0
    %3627 = vmatpush1.msra.mxu0 0.0
    %3628 = vmatprep.subr.mxu0 0.0
    %3629 = vmatpush1.msra.mxu0 0.0
    %3630 = vmatprep.subr.mxu0 0.0
    %3631 = vmatpush1.msra.mxu0 0.0
    %3632 = vmatprep.subr.mxu0 0.0
    %3633 = vmatpush1.msra.mxu0 0.0
    %3634 = vmatprep.subr.mxu0 0.0
    %3635 = vmatpush1.msra.mxu0 0.0
    %3636 = vmatprep.subr.mxu0 0.0
    %3637 = vmatpush1.msra.mxu0 0.0
    %3638 = vmatprep.subr.mxu0 0.0
    %3639 = vmatpush1.msra.mxu0 0.0
    %3640 = vmatprep.subr.mxu0 0.0
    %3641 = vmatpush1.msra.mxu0 0.0
    %3642 = vmatprep.subr.mxu0 0.0
    %3643 = vmatpush1.msra.mxu0 0.0
    %3644 = vmatprep.subr.mxu0 0.0
    %3645 = vmatpush1.msra.mxu0 0.0
    %3646 = vmatprep.subr.mxu0 0.0
    %3647 = vmatpush1.msra.mxu0 0.0
    %3648 = vmatprep.subr.mxu0 0.0
    %3649 = vmatpush1.msra.mxu0 0.0
    %3650 = vmatprep.subr.mxu0 0.0
    %3651 = vmatpush1.msra.mxu0 0.0
    %3652 = vmatprep.subr.mxu0 0.0
    %3653 = vmatpush1.msra.mxu0 0.0
    %3654 = vmatprep.subr.mxu0 0.0
    %3655 = vmatpush1.msra.mxu0 0.0
    %3656 = vmatprep.subr.mxu0 0.0
    %3657 = vmatpush1.msra.mxu0 0.0
    %3658 = vmatprep.subr.mxu0 0.0
    %3659 = vmatpush1.msra.mxu0 0.0
    %3660 = vmatprep.subr.mxu0 0.0
    %3661 = vmatpush1.msra.mxu0 0.0
    %3662 = vmatprep.mubr.f32.mxu0 0.0
    %3663 = vmatmul.mubr.f32.gmra.mrb[0].mxu0 %v3596
    %v3664 = vpop.f32.mrb[0].mxu0
    %v3665 = vadd.f32 %v131, %v3664
    %v3666 = vpop.f32.mrb[0].mxu0
    %3667 = vdwg.mxu0
    %v3668 = vtanh.pop %v3665
    %v3669 = vmul.f32 %v3665, 0.5
    %v3670 = vtanh.pop %v3669
    %v3671 = vadd.f32 %v3670, 1.0
    %v3672 = vmul.f32 %v3671, 0.5
    %v3673 = vmul.f32 %v3672, %v3175
    %3675 = vrot.lane.b32.xlu0 %v3668, 32
    %v3676 = vpop.permute.xlu0 %3675
    %v3678 = vmul.f32 %v3672, %v3676
    %3680 = vrot.lane.b32.xlu0 %v3678, 112
    %v3681 = vpop.permute.xlu0 %3680
    %v3683 = vadd.f32 %v3673, %v3681
    %s3684 = scalar_lea.vmem %s0, 14
    %v3685 = vld [vmem:[%s3684] sm:$0x3]
    %3687 = vrot.lane.b32.xlu0 %v3348, 64
    %v3688 = vpop.permute.xlu0 %3687
    %v3689 = vsel %vm134, %v3688, 0
    %3691 = vmatprep.subr.mxu0 0.0
    %3692 = vmatpush1.msra.mxu0 %v60
    %3693 = vmatprep.subr.mxu0 0.0
    %3694 = vmatpush1.msra.mxu0 %v61
    %3695 = vmatprep.subr.mxu0 0.0
    %3696 = vmatpush1.msra.mxu0 %v62
    %3697 = vmatprep.subr.mxu0 0.0
    %3698 = vmatpush1.msra.mxu0 %v63
    %3699 = vmatprep.subr.mxu0 0.0
    %3700 = vmatpush1.msra.mxu0 0.0
    %3701 = vmatprep.subr.mxu0 0.0
    %3702 = vmatpush1.msra.mxu0 0.0
    %3703 = vmatprep.subr.mxu0 0.0
    %3704 = vmatpush1.msra.mxu0 0.0
    %3705 = vmatprep.subr.mxu0 0.0
    %3706 = vmatpush1.msra.mxu0 0.0
    %3707 = vmatprep.subr.mxu0 0.0
    %3708 = vmatpush1.msra.mxu0 0.0
    %3709 = vmatprep.subr.mxu0 0.0
    %3710 = vmatpush1.msra.mxu0 0.0
    %3711 = vmatprep.subr.mxu0 0.0
    %3712 = vmatpush1.msra.mxu0 0.0
    %3713 = vmatprep.subr.mxu0 0.0
    %3714 = vmatpush1.msra.mxu0 0.0
    %3715 = vmatprep.subr.mxu0 0.0
    %3716 = vmatpush1.msra.mxu0 0.0
    %3717 = vmatprep.subr.mxu0 0.0
    %3718 = vmatpush1.msra.mxu0 0.0
    %3719 = vmatprep.subr.mxu0 0.0
    %3720 = vmatpush1.msra.mxu0 0.0
    %3721 = vmatprep.subr.mxu0 0.0
    %3722 = vmatpush1.msra.mxu0 0.0
    %3723 = vmatprep.subr.mxu0 0.0
    %3724 = vmatpush1.msra.mxu0 0.0
    %3725 = vmatprep.subr.mxu0 0.0
    %3726 = vmatpush1.msra.mxu0 0.0
    %3727 = vmatprep.subr.mxu0 0.0
    %3728 = vmatpush1.msra.mxu0 0.0
    %3729 = vmatprep.subr.mxu0 0.0
    %3730 = vmatpush1.msra.mxu0 0.0
    %3731 = vmatprep.subr.mxu0 0.0
    %3732 = vmatpush1.msra.mxu0 0.0
    %3733 = vmatprep.subr.mxu0 0.0
    %3734 = vmatpush1.msra.mxu0 0.0
    %3735 = vmatprep.subr.mxu0 0.0
    %3736 = vmatpush1.msra.mxu0 0.0
    %3737 = vmatprep.subr.mxu0 0.0
    %3738 = vmatpush1.msra.mxu0 0.0
    %3739 = vmatprep.subr.mxu0 0.0
    %3740 = vmatpush1.msra.mxu0 0.0
    %3741 = vmatprep.subr.mxu0 0.0
    %3742 = vmatpush1.msra.mxu0 0.0
    %3743 = vmatprep.subr.mxu0 0.0
    %3744 = vmatpush1.msra.mxu0 0.0
    %3745 = vmatprep.subr.mxu0 0.0
    %3746 = vmatpush1.msra.mxu0 0.0
    %3747 = vmatprep.subr.mxu0 0.0
    %3748 = vmatpush1.msra.mxu0 0.0
    %3749 = vmatprep.subr.mxu0 0.0
    %3750 = vmatpush1.msra.mxu0 0.0
    %3751 = vmatprep.subr.mxu0 0.0
    %3752 = vmatpush1.msra.mxu0 0.0
    %3753 = vmatprep.subr.mxu0 0.0
    %3754 = vmatpush1.msra.mxu0 0.0
    %3755 = vmatprep.mubr.f32.mxu0 0.0
    %3756 = vmatmul.mubr.f32.gmra.mrb[0].mxu0 %v3689
    %v3757 = vpop.f32.mrb[0].mxu0
    %v3758 = vadd.f32 0.0, %v3757
    %v3759 = vpop.f32.mrb[0].mxu0
    %3760 = vdwg.mxu0
    %v3762 = vsel %vm208, %v3685, 0
    %3764 = vmatprep.subr.mxu0 0.0
    %3765 = vmatpush1.msra.mxu0 %v58
    %3766 = vmatprep.subr.mxu0 0.0
    %3767 = vmatpush1.msra.mxu0 %v59
    %3768 = vmatprep.subr.mxu0 0.0
    %3769 = vmatpush1.msra.mxu0 0.0
    %3770 = vmatprep.subr.mxu0 0.0
    %3771 = vmatpush1.msra.mxu0 0.0
    %3772 = vmatprep.subr.mxu0 0.0
    %3773 = vmatpush1.msra.mxu0 0.0
    %3774 = vmatprep.subr.mxu0 0.0
    %3775 = vmatpush1.msra.mxu0 0.0
    %3776 = vmatprep.subr.mxu0 0.0
    %3777 = vmatpush1.msra.mxu0 0.0
    %3778 = vmatprep.subr.mxu0 0.0
    %3779 = vmatpush1.msra.mxu0 0.0
    %3780 = vmatprep.subr.mxu0 0.0
    %3781 = vmatpush1.msra.mxu0 0.0
    %3782 = vmatprep.subr.mxu0 0.0
    %3783 = vmatpush1.msra.mxu0 0.0
    %3784 = vmatprep.subr.mxu0 0.0
    %3785 = vmatpush1.msra.mxu0 0.0
    %3786 = vmatprep.subr.mxu0 0.0
    %3787 = vmatpush1.msra.mxu0 0.0
    %3788 = vmatprep.subr.mxu0 0.0
    %3789 = vmatpush1.msra.mxu0 0.0
    %3790 = vmatprep.subr.mxu0 0.0
    %3791 = vmatpush1.msra.mxu0 0.0
    %3792 = vmatprep.subr.mxu0 0.0
    %3793 = vmatpush1.msra.mxu0 0.0
    %3794 = vmatprep.subr.mxu0 0.0
    %3795 = vmatpush1.msra.mxu0 0.0
    %3796 = vmatprep.subr.mxu0 0.0
    %3797 = vmatpush1.msra.mxu0 0.0
    %3798 = vmatprep.subr.mxu0 0.0
    %3799 = vmatpush1.msra.mxu0 0.0
    %3800 = vmatprep.subr.mxu0 0.0
    %3801 = vmatpush1.msra.mxu0 0.0
    %3802 = vmatprep.subr.mxu0 0.0
    %3803 = vmatpush1.msra.mxu0 0.0
    %3804 = vmatprep.subr.mxu0 0.0
    %3805 = vmatpush1.msra.mxu0 0.0
    %3806 = vmatprep.subr.mxu0 0.0
    %3807 = vmatpush1.msra.mxu0 0.0
    %3808 = vmatprep.subr.mxu0 0.0
    %3809 = vmatpush1.msra.mxu0 0.0
    %3810 = vmatprep.subr.mxu0 0.0
    %3811 = vmatpush1.msra.mxu0 0.0
    %3812 = vmatprep.subr.mxu0 0.0
    %3813 = vmatpush1.msra.mxu0 0.0
    %3814 = vmatprep.subr.mxu0 0.0
    %3815 = vmatpush1.msra.mxu0 0.0
    %3816 = vmatprep.subr.mxu0 0.0
    %3817 = vmatpush1.msra.mxu0 0.0
    %3818 = vmatprep.subr.mxu0 0.0
    %3819 = vmatpush1.msra.mxu0 0.0
    %3820 = vmatprep.subr.mxu0 0.0
    %3821 = vmatpush1.msra.mxu0 0.0
    %3822 = vmatprep.subr.mxu0 0.0
    %3823 = vmatpush1.msra.mxu0 0.0
    %3824 = vmatprep.subr.mxu0 0.0
    %3825 = vmatpush1.msra.mxu0 0.0
    %3826 = vmatprep.subr.mxu0 0.0
    %3827 = vmatpush1.msra.mxu0 0.0
    %3828 = vmatprep.mubr.f32.mxu0 0.0
    %3829 = vmatmul.mubr.f32.gmra.mrb[0].mxu0 %v3762
    %v3830 = vpop.f32.mrb[0].mxu0
    %v3831 = vadd.f32 %v3758, %v3830
    %v3832 = vpop.f32.mrb[0].mxu0
    %3833 = vdwg.mxu0
    %v3834 = vadd.f32 %v3831, %v69
    %v3835 = vmul.f32 %v3834, 0.5
    %v3836 = vtanh.pop %v3835
    %v3837 = vadd.f32 %v3836, 1.0
    %v3838 = vmul.f32 %v3837, 0.5
    %v3839 = vtanh.pop %v3834
    %v3840 = vmul.f32 %v3838, %v3342
    %3842 = vrot.lane.b32.xlu0 %v3839, 32
    %v3843 = vpop.permute.xlu0 %3842
    %v3845 = vmul.f32 %v3838, %v3843
    %3847 = vrot.lane.b32.xlu0 %v3845, 32
    %v3848 = vpop.permute.xlu0 %3847
    %v3850 = vadd.f32 %v3840, %v3848
    %v3851 = vtanh.pop %v3850
    %3853 = vrot.lane.b32.xlu0 %v3851, 32
    %v3854 = vpop.permute.xlu0 %3853
    %v3856 = vmul.f32 %v3838, %v3854
    %3858 = vrot.lane.b32.xlu0 %v3342, 96
    %v3859 = vpop.permute.xlu0 %3858
    %v3861 = vsel %vm134, %v3859, %v3850
    %v3863 = vsel %vm306, %v3861, 0
    %3865 = vmatprep.subr.mxu0 0.0
    %3866 = vmatpush1.msra.mxu0 %v71
    %3867 = vmatprep.subr.mxu0 0.0
    %3868 = vmatpush1.msra.mxu0 %v72
    %3869 = vmatprep.subr.mxu0 0.0
    %3870 = vmatpush1.msra.mxu0 %v73
    %3871 = vmatprep.subr.mxu0 0.0
    %3872 = vmatpush1.msra.mxu0 %v74
    %3873 = vmatprep.subr.mxu0 0.0
    %3874 = vmatpush1.msra.mxu0 %v75
    %3875 = vmatprep.subr.mxu0 0.0
    %3876 = vmatpush1.msra.mxu0 %v76
    %3877 = vmatprep.subr.mxu0 0.0
    %3878 = vmatpush1.msra.mxu0 %v77
    %3879 = vmatprep.subr.mxu0 0.0
    %3880 = vmatpush1.msra.mxu0 %v78
    %3881 = vmatprep.subr.mxu0 0.0
    %3882 = vmatpush1.msra.mxu0 0.0
    %3883 = vmatprep.subr.mxu0 0.0
    %3884 = vmatpush1.msra.mxu0 0.0
    %3885 = vmatprep.subr.mxu0 0.0
    %3886 = vmatpush1.msra.mxu0 0.0
    %3887 = vmatprep.subr.mxu0 0.0
    %3888 = vmatpush1.msra.mxu0 0.0
    %3889 = vmatprep.subr.mxu0 0.0
    %3890 = vmatpush1.msra.mxu0 0.0
    %3891 = vmatprep.subr.mxu0 0.0
    %3892 = vmatpush1.msra.mxu0 0.0
    %3893 = vmatprep.subr.mxu0 0.0
    %3894 = vmatpush1.msra.mxu0 0.0
    %3895 = vmatprep.subr.mxu0 0.0
    %3896 = vmatpush1.msra.mxu0 0.0
    %3897 = vmatprep.subr.mxu0 0.0
    %3898 = vmatpush1.msra.mxu0 0.0
    %3899 = vmatprep.subr.mxu0 0.0
    %3900 = vmatpush1.msra.mxu0 0.0
    %3901 = vmatprep.subr.mxu0 0.0
    %3902 = vmatpush1.msra.mxu0 0.0
    %3903 = vmatprep.subr.mxu0 0.0
    %3904 = vmatpush1.msra.mxu0 0.0
    %3905 = vmatprep.subr.mxu0 0.0
    %3906 = vmatpush1.msra.mxu0 0.0
    %3907 = vmatprep.subr.mxu0 0.0
    %3908 = vmatpush1.msra.mxu0 0.0
    %3909 = vmatprep.subr.mxu0 0.0
    %3910 = vmatpush1.msra.mxu0 0.0
    %3911 = vmatprep.subr.mxu0 0.0
    %3912 = vmatpush1.msra.mxu0 0.0
    %3913 = vmatprep.subr.mxu0 0.0
    %3914 = vmatpush1.msra.mxu0 0.0
    %3915 = vmatprep.subr.mxu0 0.0
    %3916 = vmatpush1.msra.mxu0 0.0
    %3917 = vmatprep.subr.mxu0 0.0
    %3918 = vmatpush1.msra.mxu0 0.0
    %3919 = vmatprep.subr.mxu0 0.0
    %3920 = vmatpush1.msra.mxu0 0.0
    %3921 = vmatprep.subr.mxu0 0.0
    %3922 = vmatpush1.msra.mxu0 0.0
    %3923 = vmatprep.subr.mxu0 0.0
    %3924 = vmatpush1.msra.mxu0 0.0
    %3925 = vmatprep.subr.mxu0 0.0
    %3926 = vmatpush1.msra.mxu0 0.0
    %3927 = vmatprep.subr.mxu0 0.0
    %3928 = vmatpush1.msra.mxu0 0.0
    %3929 = vmatprep.mubr.f32.mxu0 0.0
    %3930 = vmatmul.mubr.f32.gmra.mrb[0].mxu0 %v3863
    %v3931 = vpop.f32.mrb[0].mxu0
    %v3932 = vadd.f32 %v84, %v3931
    %v3933 = vpop.f32.mrb[0].mxu0
    %3934 = vdwg.mxu0
    %v3935 = vmax.f32 %v3932, 0.0
    %v3937 = vsel %vm134, %v3935, 0
    %3939 = vmatprep.subr.mxu0 0.0
    %3940 = vmatpush1.msra.mxu0 %v86
    %3941 = vmatprep.subr.mxu0 0.0
    %3942 = vmatpush1.msra.mxu0 %v87
    %3943 = vmatprep.subr.mxu0 0.0
    %3944 = vmatpush1.msra.mxu0 %v88
    %3945 = vmatprep.subr.mxu0 0.0
    %3946 = vmatpush1.msra.mxu0 %v89
    %3947 = vmatprep.subr.mxu0 0.0
    %3948 = vmatpush1.msra.mxu0 0.0
    %3949 = vmatprep.subr.mxu0 0.0
    %3950 = vmatpush1.msra.mxu0 0.0
    %3951 = vmatprep.subr.mxu0 0.0
    %3952 = vmatpush1.msra.mxu0 0.0
    %3953 = vmatprep.subr.mxu0 0.0
    %3954 = vmatpush1.msra.mxu0 0.0
    %3955 = vmatprep.subr.mxu0 0.0
    %3956 = vmatpush1.msra.mxu0 0.0
    %3957 = vmatprep.subr.mxu0 0.0
    %3958 = vmatpush1.msra.mxu0 0.0
    %3959 = vmatprep.subr.mxu0 0.0
    %3960 = vmatpush1.msra.mxu0 0.0
    %3961 = vmatprep.subr.mxu0 0.0
    %3962 = vmatpush1.msra.mxu0 0.0
    %3963 = vmatprep.subr.mxu0 0.0
    %3964 = vmatpush1.msra.mxu0 0.0
    %3965 = vmatprep.subr.mxu0 0.0
    %3966 = vmatpush1.msra.mxu0 0.0
    %3967 = vmatprep.subr.mxu0 0.0
    %3968 = vmatpush1.msra.mxu0 0.0
    %3969 = vmatprep.subr.mxu0 0.0
    %3970 = vmatpush1.msra.mxu0 0.0
    %3971 = vmatprep.subr.mxu0 0.0
    %3972 = vmatpush1.msra.mxu0 0.0
    %3973 = vmatprep.subr.mxu0 0.0
    %3974 = vmatpush1.msra.mxu0 0.0
    %3975 = vmatprep.subr.mxu0 0.0
    %3976 = vmatpush1.msra.mxu0 0.0
    %3977 = vmatprep.subr.mxu0 0.0
    %3978 = vmatpush1.msra.mxu0 0.0
    %3979 = vmatprep.subr.mxu0 0.0
    %3980 = vmatpush1.msra.mxu0 0.0
    %3981 = vmatprep.subr.mxu0 0.0
    %3982 = vmatpush1.msra.mxu0 0.0
    %3983 = vmatprep.subr.mxu0 0.0
    %3984 = vmatpush1.msra.mxu0 0.0
    %3985 = vmatprep.subr.mxu0 0.0
    %3986 = vmatpush1.msra.mxu0 0.0
    %3987 = vmatprep.subr.mxu0 0.0
    %3988 = vmatpush1.msra.mxu0 0.0
    %3989 = vmatprep.subr.mxu0 0.0
    %3990 = vmatpush1.msra.mxu0 0.0
    %3991 = vmatprep.subr.mxu0 0.0
    %3992 = vmatpush1.msra.mxu0 0.0
    %3993 = vmatprep.subr.mxu0 0.0
    %3994 = vmatpush1.msra.mxu0 0.0
    %3995 = vmatprep.subr.mxu0 0.0
    %3996 = vmatpush1.msra.mxu0 0.0
    %3997 = vmatprep.subr.mxu0 0.0
    %3998 = vmatpush1.msra.mxu0 0.0
    %3999 = vmatprep.subr.mxu0 0.0
    %4000 = vmatpush1.msra.mxu0 0.0
    %4001 = vmatprep.subr.mxu0 0.0
    %4002 = vmatpush1.msra.mxu0 0.0
    %4003 = vmatprep.mubr.f32.mxu0 0.0
    %4004 = vmatmul.mubr.f32.gmra.mrb[0].mxu0 %v3937
    %v4005 = vpop.f32.mrb[0].mxu0
    %v4006 = vadd.f32 %v95, %v4005
    %v4007 = vpop.f32.mrb[0].mxu0
    %4008 = vdwg.mxu0
    %v4009 = vsel %vm454, %v4006, -inf
    %4010 = vmax.xlane.f32.xlu0 %v4009
    %v4011 = vpop.xlane.xlu0 %4010
    %v4012 = vsub.f32 %v4006, %v4011
    %v4013 = vmul.f32 %v4012, 1.442695
    %v4014 = vpow.pop %v4013
    %v4015 = vsel %vm454, %v4014, 0.0
    %4016 = vadd.xlane.f32.xlu0 %v4015
    %v4017 = vpop.xlane.xlu0 %4016
    %v4018 = vrcp.pop %v4017
    %v4019 = vmul.f32 %v4017, %v4018
    %v4020 = vsub.f32 2.0, %v4019
    %v4021 = vmul.f32 %v4018, %v4020
    %v4022 = vmul.f32 %v4014, %v4021
    %v4023 = vmul.f32 %v4022, %v3861
    %4025 = vrot.lane.b32.xlu0 %v3683, 48
    %v4026 = vpop.permute.xlu0 %4025
    %v4028 = vsel %vm306, %v4023, %v4026
    %v4030 = vsel %vm471, %v4028, 0
    %4032 = vmatprep.subr.mxu0 0.0
    %4033 = vmatpush1.msra.mxu0 %v97
    %4034 = vmatprep.subr.mxu0 0.0
    %4035 = vmatpush1.msra.mxu0 %v98
    %4036 = vmatprep.subr.mxu0 0.0
    %4037 = vmatpush1.msra.mxu0 %v99
    %4038 = vmatprep.subr.mxu0 0.0
    %4039 = vmatpush1.msra.mxu0 %v100
    %4040 = vmatprep.subr.mxu0 0.0
    %4041 = vmatpush1.msra.mxu0 %v101
    %4042 = vmatprep.subr.mxu0 0.0
    %4043 = vmatpush1.msra.mxu0 %v102
    %4044 = vmatprep.subr.mxu0 0.0
    %4045 = vmatpush1.msra.mxu0 %v103
    %4046 = vmatprep.subr.mxu0 0.0
    %4047 = vmatpush1.msra.mxu0 %v104
    %4048 = vmatprep.subr.mxu0 0.0
    %4049 = vmatpush1.msra.mxu0 %v105
    %4050 = vmatprep.subr.mxu0 0.0
    %4051 = vmatpush1.msra.mxu0 %v106
    %4052 = vmatprep.subr.mxu0 0.0
    %4053 = vmatpush1.msra.mxu0 0.0
    %4054 = vmatprep.subr.mxu0 0.0
    %4055 = vmatpush1.msra.mxu0 0.0
    %4056 = vmatprep.subr.mxu0 0.0
    %4057 = vmatpush1.msra.mxu0 0.0
    %4058 = vmatprep.subr.mxu0 0.0
    %4059 = vmatpush1.msra.mxu0 0.0
    %4060 = vmatprep.subr.mxu0 0.0
    %4061 = vmatpush1.msra.mxu0 0.0
    %4062 = vmatprep.subr.mxu0 0.0
    %4063 = vmatpush1.msra.mxu0 0.0
    %4064 = vmatprep.subr.mxu0 0.0
    %4065 = vmatpush1.msra.mxu0 0.0
    %4066 = vmatprep.subr.mxu0 0.0
    %4067 = vmatpush1.msra.mxu0 0.0
    %4068 = vmatprep.subr.mxu0 0.0
    %4069 = vmatpush1.msra.mxu0 0.0
    %4070 = vmatprep.subr.mxu0 0.0
    %4071 = vmatpush1.msra.mxu0 0.0
    %4072 = vmatprep.subr.mxu0 0.0
    %4073 = vmatpush1.msra.mxu0 0.0
    %4074 = vmatprep.subr.mxu0 0.0
    %4075 = vmatpush1.msra.mxu0 0.0
    %4076 = vmatprep.subr.mxu0 0.0
    %4077 = vmatpush1.msra.mxu0 0.0
    %4078 = vmatprep.subr.mxu0 0.0
    %4079 = vmatpush1.msra.mxu0 0.0
    %4080 = vmatprep.subr.mxu0 0.0
    %4081 = vmatpush1.msra.mxu0 0.0
    %4082 = vmatprep.subr.mxu0 0.0
    %4083 = vmatpush1.msra.mxu0 0.0
    %4084 = vmatprep.subr.mxu0 0.0
    %4085 = vmatpush1.msra.mxu0 0.0
    %4086 = vmatprep.subr.mxu0 0.0
    %4087 = vmatpush1.msra.mxu0 0.0
    %4088 = vmatprep.subr.mxu0 0.0
    %4089 = vmatpush1.msra.mxu0 0.0
    %4090 = vmatprep.subr.mxu0 0.0
    %4091 = vmatpush1.msra.mxu0 0.0
    %4092 = vmatprep.subr.mxu0 0.0
    %4093 = vmatpush1.msra.mxu0 0.0
    %4094 = vmatprep.subr.mxu0 0.0
    %4095 = vmatpush1.msra.mxu0 0.0
    %4096 = vmatprep.mubr.f32.mxu0 0.0
    %4097 = vmatmul.mubr.f32.gmra.mrb[0].mxu0 %v4030
    %v4098 = vpop.f32.mrb[0].mxu0
    %v4099 = vadd.f32 %v112, %v4098
    %v4100 = vpop.f32.mrb[0].mxu0
    %4101 = vdwg.mxu0
    %v4102 = vmax.f32 %v4099, 0.0
    %v4104 = vsel %vm546, %v4102, 0
    %4106 = vmatprep.subr.mxu0 0.0
    %4107 = vmatpush1.msra.mxu0 %v114
    %4108 = vmatprep.subr.mxu0 0.0
    %4109 = vmatpush1.msra.mxu0 %v115
    %4110 = vmatprep.subr.mxu0 0.0
    %4111 = vmatpush1.msra.mxu0 %v116
    %4112 = vmatprep.subr.mxu0 0.0
    %4113 = vmatpush1.msra.mxu0 %v117
    %4114 = vmatprep.subr.mxu0 0.0
    %4115 = vmatpush1.msra.mxu0 %v118
    %4116 = vmatprep.subr.mxu0 0.0
    %4117 = vmatpush1.msra.mxu0 %v119
    %4118 = vmatprep.subr.mxu0 0.0
    %4119 = vmatpush1.msra.mxu0 %v120
    %4120 = vmatprep.subr.mxu0 0.0
    %4121 = vmatpush1.msra.mxu0 %v121
    %4122 = vmatprep.subr.mxu0 0.0
    %4123 = vmatpush1.msra.mxu0 %v122
    %4124 = vmatprep.subr.mxu0 0.0
    %4125 = vmatpush1.msra.mxu0 %v123
    %4126 = vmatprep.subr.mxu0 0.0
    %4127 = vmatpush1.msra.mxu0 %v124
    %4128 = vmatprep.subr.mxu0 0.0
    %4129 = vmatpush1.msra.mxu0 %v125
    %4130 = vmatprep.subr.mxu0 0.0
    %4131 = vmatpush1.msra.mxu0 0.0
    %4132 = vmatprep.subr.mxu0 0.0
    %4133 = vmatpush1.msra.mxu0 0.0
    %4134 = vmatprep.subr.mxu0 0.0
    %4135 = vmatpush1.msra.mxu0 0.0
    %4136 = vmatprep.subr.mxu0 0.0
    %4137 = vmatpush1.msra.mxu0 0.0
    %4138 = vmatprep.subr.mxu0 0.0
    %4139 = vmatpush1.msra.mxu0 0.0
    %4140 = vmatprep.subr.mxu0 0.0
    %4141 = vmatpush1.msra.mxu0 0.0
    %4142 = vmatprep.subr.mxu0 0.0
    %4143 = vmatpush1.msra.mxu0 0.0
    %4144 = vmatprep.subr.mxu0 0.0
    %4145 = vmatpush1.msra.mxu0 0.0
    %4146 = vmatprep.subr.mxu0 0.0
    %4147 = vmatpush1.msra.mxu0 0.0
    %4148 = vmatprep.subr.mxu0 0.0
    %4149 = vmatpush1.msra.mxu0 0.0
    %4150 = vmatprep.subr.mxu0 0.0
    %4151 = vmatpush1.msra.mxu0 0.0
    %4152 = vmatprep.subr.mxu0 0.0
    %4153 = vmatpush1.msra.mxu0 0.0
    %4154 = vmatprep.subr.mxu0 0.0
    %4155 = vmatpush1.msra.mxu0 0.0
    %4156 = vmatprep.subr.mxu0 0.0
    %4157 = vmatpush1.msra.mxu0 0.0
    %4158 = vmatprep.subr.mxu0 0.0
    %4159 = vmatpush1.msra.mxu0 0.0
    %4160 = vmatprep.subr.mxu0 0.0
    %4161 = vmatpush1.msra.mxu0 0.0
    %4162 = vmatprep.subr.mxu0 0.0
    %4163 = vmatpush1.msra.mxu0 0.0
    %4164 = vmatprep.subr.mxu0 0.0
    %4165 = vmatpush1.msra.mxu0 0.0
    %4166 = vmatprep.subr.mxu0 0.0
    %4167 = vmatpush1.msra.mxu0 0.0
    %4168 = vmatprep.subr.mxu0 0.0
    %4169 = vmatpush1.msra.mxu0 0.0
    %4170 = vmatprep.mubr.f32.mxu0 0.0
    %4171 = vmatmul.mubr.f32.gmra.mrb[0].mxu0 %v4104
    %v4172 = vpop.f32.mrb[0].mxu0
    %v4173 = vadd.f32 %v131, %v4172
    %v4174 = vpop.f32.mrb[0].mxu0
    %4175 = vdwg.mxu0
    %v4176 = vtanh.pop %v4173
    %v4177 = vmul.f32 %v4173, 0.5
    %v4178 = vtanh.pop %v4177
    %v4179 = vadd.f32 %v4178, 1.0
    %v4180 = vmul.f32 %v4179, 0.5
    %v4181 = vmul.f32 %v4180, %v3683
    %4183 = vrot.lane.b32.xlu0 %v4176, 32
    %v4184 = vpop.permute.xlu0 %4183
    %v4186 = vmul.f32 %v4180, %v4184
    %4188 = vrot.lane.b32.xlu0 %v4186, 112
    %v4189 = vpop.permute.xlu0 %4188
    %v4191 = vadd.f32 %v4181, %v4189
    %4193 = vrot.lane.b32.xlu0 %v3856, 64
    %v4194 = vpop.permute.xlu0 %4193
    %4197 = vrot.lane.b32.xlu0 %v4191, 16
    %v4198 = vpop.permute.xlu0 %4197
    %v4200 = vsel %vm134, %v4194, %v4198
    %v4201 = vld [vmem:[%s12] sm:$0xff]
    %v4202 = vld [vmem:[%s12 + $0x8] sm:$0xff]
    %v4203 = vld [vmem:[%s12 + $0x10] sm:$0xff]
    %v4204 = vld [vmem:[%s12 + $0x18] sm:$0xff]
    %v4205 = vld [vmem:[%s12 + $0x20] sm:$0xff]
    %v4206 = vld [vmem:[%s12 + $0x28] sm:$0xff]
    %v4207 = vld [vmem:[%s13] sm:$0x1]
    %v4209 = vlaneseq
    %v4210 = vshrl.u32 %v4209, 7
    %v4211 = vsub.s32 0, %v4210
    %v4212 = vrot.slane %v4207, %v4211
    %vm4214 = vcmask 392192
    %v4216 = vsel %vm4214, %v4200, 0
    %4218 = vmatprep.subr.mxu0 0.0
    %4219 = vmatpush1.msra.mxu0 %v4201
    %4220 = vmatprep.subr.mxu0 0.0
    %4221 = vmatpush1.msra.mxu0 %v4202
    %4222 = vmatprep.subr.mxu0 0.0
    %4223 = vmatpush1.msra.mxu0 %v4203
    %4224 = vmatprep.subr.mxu0 0.0
    %4225 = vmatpush1.msra.mxu0 %v4204
    %4226 = vmatprep.subr.mxu0 0.0
    %4227 = vmatpush1.msra.mxu0 %v4205
    %4228 = vmatprep.subr.mxu0 0.0
    %4229 = vmatpush1.msra.mxu0 %v4206
    %4230 = vmatprep.subr.mxu0 0.0
    %4231 = vmatpush1.msra.mxu0 0.0
    %4232 = vmatprep.subr.mxu0 0.0
    %4233 = vmatpush1.msra.mxu0 0.0
    %4234 = vmatprep.subr.mxu0 0.0
    %4235 = vmatpush1.msra.mxu0 0.0
    %4236 = vmatprep.subr.mxu0 0.0
    %4237 = vmatpush1.msra.mxu0 0.0
    %4238 = vmatprep.subr.mxu0 0.0
    %4239 = vmatpush1.msra.mxu0 0.0
    %4240 = vmatprep.subr.mxu0 0.0
    %4241 = vmatpush1.msra.mxu0 0.0
    %4242 = vmatprep.subr.mxu0 0.0
    %4243 = vmatpush1.msra.mxu0 0.0
    %4244 = vmatprep.subr.mxu0 0.0
    %4245 = vmatpush1.msra.mxu0 0.0
    %4246 = vmatprep.subr.mxu0 0.0
    %4247 = vmatpush1.msra.mxu0 0.0
    %4248 = vmatprep.subr.mxu0 0.0
    %4249 = vmatpush1.msra.mxu0 0.0
    %4250 = vmatprep.subr.mxu0 0.0
    %4251 = vmatpush1.msra.mxu0 0.0
    %4252 = vmatprep.subr.mxu0 0.0
    %4253 = vmatpush1.msra.mxu0 0.0
    %4254 = vmatprep.subr.mxu0 0.0
    %4255 = vmatpush1.msra.mxu0 0.0
    %4256 = vmatprep.subr.mxu0 0.0
    %4257 = vmatpush1.msra.mxu0 0.0
    %4258 = vmatprep.subr.mxu0 0.0
    %4259 = vmatpush1.msra.mxu0 0.0
    %4260 = vmatprep.subr.mxu0 0.0
    %4261 = vmatpush1.msra.mxu0 0.0
    %4262 = vmatprep.subr.mxu0 0.0
    %4263 = vmatpush1.msra.mxu0 0.0
    %4264 = vmatprep.subr.mxu0 0.0
    %4265 = vmatpush1.msra.mxu0 0.0
    %4266 = vmatprep.subr.mxu0 0.0
    %4267 = vmatpush1.msra.mxu0 0.0
    %4268 = vmatprep.subr.mxu0 0.0
    %4269 = vmatpush1.msra.mxu0 0.0
    %4270 = vmatprep.subr.mxu0 0.0
    %4271 = vmatpush1.msra.mxu0 0.0
    %4272 = vmatprep.subr.mxu0 0.0
    %4273 = vmatpush1.msra.mxu0 0.0
    %4274 = vmatprep.subr.mxu0 0.0
    %4275 = vmatpush1.msra.mxu0 0.0
    %4276 = vmatprep.subr.mxu0 0.0
    %4277 = vmatpush1.msra.mxu0 0.0
    %4278 = vmatprep.subr.mxu0 0.0
    %4279 = vmatpush1.msra.mxu0 0.0
    %4280 = vmatprep.subr.mxu0 0.0
    %4281 = vmatpush1.msra.mxu0 0.0
    %4282 = vmatprep.mubr.f32.mxu0 0.0
    %4283 = vmatmul.mubr.f32.gmra.mrb[0].mxu0 %v4216
    %v4284 = vpop.f32.mrb[0].mxu0
    %v4285 = vadd.f32 %v4212, %v4284
    %v4286 = vpop.f32.mrb[0].mxu0
    %4287 = vdwg.mxu0
    %v4288 = vmax.f32 %v4285, 0.0
    %v4289 = vld [vmem:[%s14] sm:$0xff]
    %v4290 = vld [vmem:[%s14 + $0x8] sm:$0xff]
    %v4291 = vld [vmem:[%s14 + $0x10] sm:$0xff]
    %v4292 = vld [vmem:[%s14 + $0x18] sm:$0xff]
    %v4293 = vld [vmem:[#allocation2] sm:$0x1]
    %v4295 = vlaneseq
    %v4296 = vshrl.u32 %v4295, 7
    %v4297 = vsub.s32 0, %v4296
    %v4298 = vrot.slane %v4293, %v4297
    %v4301 = vsel %vm134, %v4288, 0
    %4303 = vmatprep.subr.mxu0 0.0
    %4304 = vmatpush1.msra.mxu0 %v4289
    %4305 = vmatprep.subr.mxu0 0.0
    %4306 = vmatpush1.msra.mxu0 %v4290
    %4307 = vmatprep.subr.mxu0 0.0
    %4308 = vmatpush1.msra.mxu0 %v4291
    %4309 = vmatprep.subr.mxu0 0.0
    %4310 = vmatpush1.msra.mxu0 %v4292
    %4311 = vmatprep.subr.mxu0 0.0
    %4312 = vmatpush1.msra.mxu0 0.0
    %4313 = vmatprep.subr.mxu0 0.0
    %4314 = vmatpush1.msra.mxu0 0.0
    %4315 = vmatprep.subr.mxu0 0.0
    %4316 = vmatpush1.msra.mxu0 0.0
    %4317 = vmatprep.subr.mxu0 0.0
    %4318 = vmatpush1.msra.mxu0 0.0
    %4319 = vmatprep.subr.mxu0 0.0
    %4320 = vmatpush1.msra.mxu0 0.0
    %4321 = vmatprep.subr.mxu0 0.0
    %4322 = vmatpush1.msra.mxu0 0.0
    %4323 = vmatprep.subr.mxu0 0.0
    %4324 = vmatpush1.msra.mxu0 0.0
    %4325 = vmatprep.subr.mxu0 0.0
    %4326 = vmatpush1.msra.mxu0 0.0
    %4327 = vmatprep.subr.mxu0 0.0
    %4328 = vmatpush1.msra.mxu0 0.0
    %4329 = vmatprep.subr.mxu0 0.0
    %4330 = vmatpush1.msra.mxu0 0.0
    %4331 = vmatprep.subr.mxu0 0.0
    %4332 = vmatpush1.msra.mxu0 0.0
    %4333 = vmatprep.subr.mxu0 0.0
    %4334 = vmatpush1.msra.mxu0 0.0
    %4335 = vmatprep.subr.mxu0 0.0
    %4336 = vmatpush1.msra.mxu0 0.0
    %4337 = vmatprep.subr.mxu0 0.0
    %4338 = vmatpush1.msra.mxu0 0.0
    %4339 = vmatprep.subr.mxu0 0.0
    %4340 = vmatpush1.msra.mxu0 0.0
    %4341 = vmatprep.subr.mxu0 0.0
    %4342 = vmatpush1.msra.mxu0 0.0
    %4343 = vmatprep.subr.mxu0 0.0
    %4344 = vmatpush1.msra.mxu0 0.0
    %4345 = vmatprep.subr.mxu0 0.0
    %4346 = vmatpush1.msra.mxu0 0.0
    %4347 = vmatprep.subr.mxu0 0.0
    %4348 = vmatpush1.msra.mxu0 0.0
    %4349 = vmatprep.subr.mxu0 0.0
    %4350 = vmatpush1.msra.mxu0 0.0
    %4351 = vmatprep.subr.mxu0 0.0
    %4352 = vmatpush1.msra.mxu0 0.0
    %4353 = vmatprep.subr.mxu0 0.0
    %4354 = vmatpush1.msra.mxu0 0.0
    %4355 = vmatprep.subr.mxu0 0.0
    %4356 = vmatpush1.msra.mxu0 0.0
    %4357 = vmatprep.subr.mxu0 0.0
    %4358 = vmatpush1.msra.mxu0 0.0
    %4359 = vmatprep.subr.mxu0 0.0
    %4360 = vmatpush1.msra.mxu0 0.0
    %4361 = vmatprep.subr.mxu0 0.0
    %4362 = vmatpush1.msra.mxu0 0.0
    %4363 = vmatprep.subr.mxu0 0.0
    %4364 = vmatpush1.msra.mxu0 0.0
    %4365 = vmatprep.subr.mxu0 0.0
    %4366 = vmatpush1.msra.mxu0 0.0
    %4367 = vmatprep.mubr.f32.mxu0 0.0
    %4368 = vmatmul.mubr.f32.gmra.mrb[0].mxu0 %v4301
    %v4369 = vpop.f32.mrb[0].mxu0
    %v4370 = vadd.f32 %v4298, %v4369
    %v4371 = vpop.f32.mrb[0].mxu0
    %4372 = vdwg.mxu0
    %vm4373 = vcmask 1024
    %4374 = vst.msk [vmem:[%s16] sm:$0x3] %vm4373, %v4370
    %vm4375 = vcmask 386048
    %4376 = vst.msk [vmem:[#allocation3] sm:$0x3] %vm4375, %v4200
    // Predicated region
    $region66: #{tpu_custom_call.1} parent=1 // pred_check
      _
    $region67: #{tpu_custom_call.1} parent=1 // pred_check_branch
      %4378 = sbr.rel (0) target = $region69
    $region68: #{tpu_custom_call.1} parent=1 // pred_region
      _
    $region69: #{tpu_custom_call.1} parent=1 // pred_fallthru
      _
    // Predicated region
    $region70: #{tpu_custom_call.1} parent=1 // pred_check
      _
    $region71: #{tpu_custom_call.1} parent=1 // pred_check_branch
      %4380 = sbr.rel (0) target = $region73
    $region72: #{tpu_custom_call.1} parent=1 // pred_region
      %s4382 = ssub.s32 32, 32
      %4383 = vsyncadd [#allocation4], %s4382
      %s4385 = sshll.u32 [#allocation3], 4
      %s4386 = int_to_ptr.vmem [resolvable:$true] %s4385
      %4388 = dma.vmem_to_hbm [thread:$0]  %s4386, 32, %s17, [#allocation4]
    $region73: #{tpu_custom_call.1} parent=1 // pred_fallthru
      _
    // Predicated region
    $region74: #{tpu_custom_call.1} parent=1 // pred_check
      _
    $region75: #{tpu_custom_call.1} parent=1 // pred_check_branch
      %4390 = sbr.rel (0) target = $region77
    $region76: #{tpu_custom_call.1} parent=1 // pred_region
      _
    $region77: #{tpu_custom_call.1} parent=1 // pred_fallthru
      _
    // Predicated region
    $region78: #{tpu_custom_call.1} parent=1 // pred_check
      _
    $region79: #{tpu_custom_call.1} parent=1 // pred_check_branch
      %4392 = sbr.rel (0) target = $region81
    $region80: #{tpu_custom_call.1} parent=1 // pred_region
      %4393 = dma.done [#allocation4], 32
    $region81: #{tpu_custom_call.1} parent=1 // pred_fallthru
      _
    %4394 = vsyncpa [#allocation4], 1

</llo_original>
